<compile_context>
chip_gen: v7x
topology: tpu7x:2x2x1
jax: 0.10.0
libtpu: 0.0.40
codegen_flags: <defaults>
</compile_context>

<pallas_src>
import functools

import jax
import jax.numpy as jnp
import numpy as np
from jax.experimental import pallas as pl
from jax.experimental.pallas import tpu as pltpu


def _spatial_attention_kernel(x_ref, rc_ref, o_ref, sum_ref, max_ref, *,
                              conv_w_np, C, C_padded, H, W, K):
    # x_ref   : (b_tile, c_tile, HWp)  lane-dense channel chunk of b_tile images
    # rc_ref  : (2, HWp) int32         row / col index of every flat position
    # o_ref   : (b_tile, 1, HWp)       sigmoid spatial-attention map (flat)
    # sum_ref : (b_tile, HWp) f32      running channel sum   (VMEM scratch)
    # max_ref : (b_tile, HWp) f32      running channel max   (VMEM scratch)
    ci = pl.program_id(1)
    nc = pl.num_programs(1)
    c_tile = x_ref.shape[1]

    # Chunk-wise f32 upcast only (never the whole (C, H*W) slab).
    x = x_ref[...].astype(jnp.float32)                    # (b_tile, c_tile, HWp)

    if C_padded != C:
        # Last chunk carries zero-padded channels: neutralize them for the max
        # (zeros are already neutral for the sum; 1/C is applied at finalize).
        chan = (jax.lax.broadcasted_iota(jnp.int32, x.shape, 1) + ci * c_tile)
        x_for_max = jnp.where(chan < C, x, -jnp.inf)
    else:
        x_for_max = x

    part_sum = jnp.sum(x, axis=1)                         # (b_tile, HWp)
    part_max = jnp.max(x_for_max, axis=1)                 # (b_tile, HWp)

    @pl.when(ci == 0)
    def _():
        sum_ref[...] = jnp.zeros_like(sum_ref)
        max_ref[...] = jnp.full_like(max_ref, -jnp.inf)

    sum_ref[...] = sum_ref[...] + part_sum
    max_ref[...] = jnp.maximum(max_ref[...], part_max)

    @pl.when(ci == nc - 1)
    def _():
        # Finalize: mean = sum * (1/C), exact shift-based 7x7 conv, sigmoid.
        avg = sum_ref[...] * (1.0 / C)                     # (b_tile, HWp)
        mx = max_ref[...]
        row = rc_ref[0:1, :]                               # (1, HWp) int32
        col = rc_ref[1:2, :]
        HWp = avg.shape[-1]
        pad = K // 2
        acc = jnp.zeros_like(avg)
        for kh in range(K):
            dh = kh - pad
            for kw in range(K):
                dw = kw - pad
                w_a = float(conv_w_np[0, 0, kh, kw])       # avg-channel weight
                w_m = float(conv_w_np[0, 1, kh, kw])       # max-channel weight
                off = dh * W + dw                          # flat offset of this tap
                shift = (-off) % HWp
                if shift == 0:
                    a_s, m_s = avg, mx
                else:
                    # shifted[p] = pooled[p + off]; wrapped/padded reads are
                    # masked out below, in-bounds reads are exact.
                    a_s = pltpu.roll(avg, shift, axis=1)
                    m_s = pltpu.roll(mx, shift, axis=1)
                valid = ((row >= -dh) & (row < H - dh) &
                         (col >= -dw) & (col < W - dw))    # zero-padding mask
                acc = acc + jnp.where(valid, w_a * a_s + w_m * m_s, 0.0)
        o_ref[:, 0, :] = jax.nn.sigmoid(acc).astype(o_ref.dtype)


def spatial_attention(x_nchw, conv_w, *,
                      x_vmem_budget_bytes=20 * 1024 * 1024,
                      vmem_limit_bytes=32 * 1024 * 1024):
    """x_nchw: (B, C, H, W); conv_w: (1, 2, K, K) weight of
    Conv2d(2, 1, K, padding=K//2, bias=False).  Returns (B, 1, H, W)."""
    B, C, H, W = x_nchw.shape
    K = int(conv_w.shape[-1])
    assert tuple(conv_w.shape) == (1, 2, K, K)
    # Conv weights are module parameters -> concrete; bake them as constants.
    conv_w_np = np.asarray(jax.device_get(conv_w), dtype=np.float32)

    HW = H * W
    HWp = ((HW + 127) // 128) * 128                       # lane-dense last dim
    itemsize = jnp.dtype(x_nchw.dtype).itemsize

    x_flat = x_nchw.reshape(B, C, HW)
    if HWp != HW:
        x_flat = jnp.pad(x_flat, ((0, 0), (0, 0), (0, HWp - HW)))

    # ---- byte-budgeted tiling (x blocks are double-buffered by Pallas) ----
    per_chan_bytes = HWp * itemsize
    max_ct = max(1, x_vmem_budget_bytes // (2 * per_chan_bytes))
    if max_ct >= C:
        c_tile = C                                         # whole slab per step
    else:
        c_tile = min(C, max(8, (max_ct // 8) * 8))         # (8,128) sublane rule

    nc = -(-C // c_tile)
    C_padded = nc * c_tile
    if C_padded != C:
        x_flat = jnp.pad(x_flat, ((0, 0), (0, C_padded - C), (0, 0)))

    if nc == 1:
        # Collapse tiny grid steps: block several batch elements per step.
        b_tile = min(B, max(1, x_vmem_budget_bytes // (2 * C_padded * per_chan_bytes)))
        while B % b_tile:
            b_tile -= 1
    else:
        b_tile = 1
    nb = B // b_tile

    # Row / col index of every flattened spatial position (host-precomputed so
    # the fused conv needs no in-kernel integer div/mod).  Padded lanes get
    # row >= H and are therefore always masked out.
    pos = np.arange(HWp, dtype=np.int64)
    rc = jnp.asarray(np.stack([pos // W, pos % W]).astype(np.int32))   # (2, HWp)

    kernel = functools.partial(
        _spatial_attention_kernel,
        conv_w_np=conv_w_np, C=C, C_padded=C_padded, H=H, W=W, K=K)

    out_flat = pl.pallas_call(
        kernel,
        out_shape=jax.ShapeDtypeStruct((B, 1, HWp), x_nchw.dtype),
        grid_spec=pltpu.PrefetchScalarGridSpec(
            num_scalar_prefetch=0,
            grid=(nb, nc),                                 # reduction innermost
            in_specs=[
                pl.BlockSpec((b_tile, c_tile, HWp), lambda b, c: (b, c, 0)),
                pl.BlockSpec((2, HWp), lambda b, c: (0, 0)),
            ],
            out_specs=pl.BlockSpec((b_tile, 1, HWp), lambda b, c: (b, 0, 0)),
            scratch_shapes=[
                pltpu.VMEM((b_tile, HWp), jnp.float32),    # running channel sum
                pltpu.VMEM((b_tile, HWp), jnp.float32),    # running channel max
            ],
        ),
        compiler_params=pltpu.CompilerParams(
            dimension_semantics=("parallel", "arbitrary"),
            vmem_limit_bytes=vmem_limit_bytes),
    )(x_flat, rc)

    out = out_flat[:, :, :HW] if HWp != HW else out_flat
    return out.reshape(B, 1, H, W)


def spatial_attention_ref(x_nchw, conv_w):
    """Pure-JAX reference matching the PyTorch forward."""
    avg = jnp.mean(x_nchw, axis=1, keepdims=True)
    mx = jnp.max(x_nchw, axis=1, keepdims=True)
    s = jnp.concatenate([avg, mx], axis=1)                # (B, 2, H, W)
    pad = conv_w.shape[-1] // 2
    out = jax.lax.conv_general_dilated(
        s, conv_w, window_strides=(1, 1),
        padding=((pad, pad), (pad, pad)),
        dimension_numbers=("NCHW", "OIHW", "NCHW"),
        precision=jax.lax.Precision.HIGHEST)
    return jax.nn.sigmoid(out)                            # (B, 1, H, W)


if __name__ == "__main__":
    key = jax.random.PRNGKey(0)
    kx1, kx2, kw = jax.random.split(key, 3)
    K = 7
    bound = 1.0 / float(np.sqrt(2 * K * K))
    conv_w = jax.random.uniform(kw, (1, 2, K, K), jnp.float32,
                                minval=-bound, maxval=bound)

    # Case 1: H*W = 256 is already lane-dense and the whole (B, C, H*W) slab
    # fits the VMEM budget -> one grid step, both batch elements blocked.
    x1 = jax.random.normal(kx1, (2, 32, 16, 16), dtype=jnp.float32)
    out1 = jax.block_until_ready(spatial_attention(x1, conv_w))
    ref1 = spatial_attention_ref(x1, conv_w)
    assert out1.shape == (2, 1, 16, 16)
    err1 = float(jnp.max(jnp.abs(out1 - ref1)))
    assert jnp.allclose(out1, ref1, atol=1e-4, rtol=1e-4), f"case1 err={err1}"

    # Case 2: tiny budget forces channel streaming (c_tile=8, masked padded
    # last chunk since 36 % 8 != 0) and H*W=144 exercises lane padding.
    x2 = jax.random.normal(kx2, (2, 36, 12, 12), dtype=jnp.float32)
    out2 = jax.block_until_ready(
        spatial_attention(x2, conv_w, x_vmem_budget_bytes=16 * 1024))
    ref2 = spatial_attention_ref(x2, conv_w)
    assert out2.shape == (2, 1, 12, 12)
    err2 = float(jnp.max(jnp.abs(out2 - ref2)))
    assert jnp.allclose(out2, ref2, atol=1e-4, rtol=1e-4), f"case2 err={err2}"

    print("KERNEL_OK")
</pallas_src>

<mosaic_0001>
module attributes {stable_mosaic.version = 11 : i64} {
  func.func @_spatial_attention_kernel(%arg0: i32, %arg1: i32, %arg2: memref<2x32x256xf32, #tpu.memory_space<vmem>>, %arg3: memref<2x256xi32, #tpu.memory_space<vmem>>, %arg4: memref<2x1x256xf32, #tpu.memory_space<vmem>>, %arg5: memref<2x256xf32, #tpu.memory_space<vmem>>, %arg6: memref<2x256xf32, #tpu.memory_space<vmem>>) attributes {dimension_semantics = [#tpu.dimension_semantics<parallel>, #tpu.dimension_semantics<arbitrary>], iteration_bounds = array<i64: 1, 1>, scalar_prefetch = 0 : i64, scratch_operands = 2 : i64, tpu.core_type = #tpu.core_type<tc>, window_params = [{transform_indices = @transform_0, window_bounds = array<i64: 2, 32, 256>}, {pipeline_mode = #tpu.pipeline_mode<synchronous>, transform_indices = @transform_1, window_bounds = array<i64: 2, 256>}, {transform_indices = @transform_2, window_bounds = array<i64: 2, 1, 256>}]} {
    %c0 = arith.constant 0 : index
    %c0_0 = arith.constant 0 : index
    %c0_1 = arith.constant 0 : index
    %0 = vector.load %arg2[%c0, %c0_0, %c0_1] : memref<2x32x256xf32, #tpu.memory_space<vmem>>, vector<2x32x256xf32>
    %cst = arith.constant dense<0.000000e+00> : vector<2x256xf32>
    %1 = vector.multi_reduction <add>, %0, %cst [1] : vector<2x32x256xf32> to vector<2x256xf32>
    %cst_2 = arith.constant dense<0xFF800000> : vector<2x256xf32>
    %2 = vector.multi_reduction <maximumf>, %0, %cst_2 [1] : vector<2x32x256xf32> to vector<2x256xf32>
    %c0_i32 = arith.constant 0 : i32
    %3 = arith.cmpi eq, %arg1, %c0_i32 : i32
    %4 = arith.extui %3 : i1 to i32
    %c0_i32_3 = arith.constant 0 : i32
    %5 = arith.cmpi ne, %4, %c0_i32_3 : i32
    scf.if %5 {
      %cst_14 = arith.constant 0.000000e+00 : f32
      %15 = vector.broadcast %cst_14 : f32 to vector<2x256xf32>
      %c0_15 = arith.constant 0 : index
      %c0_16 = arith.constant 0 : index
      %16 = vector.load %arg5[%c0_15, %c0_16] : memref<2x256xf32, #tpu.memory_space<vmem>>, vector<2x256xf32>
      tpu.vector_store %arg5[%c0_15, %c0_16], %15 {strides = array<i32>} : memref<2x256xf32, #tpu.memory_space<vmem>>, vector<2x256xf32>,
      %cst_17 = arith.constant 0xFF800000 : f32
      %17 = vector.broadcast %cst_17 : f32 to vector<2x256xf32>
      %c0_18 = arith.constant 0 : index
      %c0_19 = arith.constant 0 : index
      %18 = vector.load %arg6[%c0_18, %c0_19] : memref<2x256xf32, #tpu.memory_space<vmem>>, vector<2x256xf32>
      tpu.vector_store %arg6[%c0_18, %c0_19], %17 {strides = array<i32>} : memref<2x256xf32, #tpu.memory_space<vmem>>, vector<2x256xf32>,
    } else {
    }
    %c0_4 = arith.constant 0 : index
    %c0_5 = arith.constant 0 : index
    %6 = vector.load %arg5[%c0_4, %c0_5] : memref<2x256xf32, #tpu.memory_space<vmem>>, vector<2x256xf32>
    %7 = arith.addf %6, %1 : vector<2x256xf32>
    %c0_6 = arith.constant 0 : index
    %c0_7 = arith.constant 0 : index
    %8 = vector.load %arg5[%c0_6, %c0_7] : memref<2x256xf32, #tpu.memory_space<vmem>>, vector<2x256xf32>
    tpu.vector_store %arg5[%c0_6, %c0_7], %7 {strides = array<i32>} : memref<2x256xf32, #tpu.memory_space<vmem>>, vector<2x256xf32>,
    %c0_8 = arith.constant 0 : index
    %c0_9 = arith.constant 0 : index
    %9 = vector.load %arg6[%c0_8, %c0_9] : memref<2x256xf32, #tpu.memory_space<vmem>>, vector<2x256xf32>
    %10 = arith.maximumf %9, %2 : vector<2x256xf32>
    %c0_10 = arith.constant 0 : index
    %c0_11 = arith.constant 0 : index
    %11 = vector.load %arg6[%c0_10, %c0_11] : memref<2x256xf32, #tpu.memory_space<vmem>>, vector<2x256xf32>
    tpu.vector_store %arg6[%c0_10, %c0_11], %10 {strides = array<i32>} : memref<2x256xf32, #tpu.memory_space<vmem>>, vector<2x256xf32>,
    %c0_i32_12 = arith.constant 0 : i32
    %12 = arith.cmpi eq, %arg1, %c0_i32_12 : i32
    %13 = arith.extui %12 : i1 to i32
    %c0_i32_13 = arith.constant 0 : i32
    %14 = arith.cmpi ne, %13, %c0_i32_13 : i32
    scf.if %14 {
      %c0_14 = arith.constant 0 : index
      %c0_15 = arith.constant 0 : index
      %15 = vector.load %arg5[%c0_14, %c0_15] : memref<2x256xf32, #tpu.memory_space<vmem>>, vector<2x256xf32>
      %cst_16 = arith.constant 3.125000e-02 : f32
      %16 = vector.broadcast %cst_16 : f32 to vector<2x256xf32>
      %17 = arith.mulf %15, %16 : vector<2x256xf32>
      %c0_17 = arith.constant 0 : index
      %c0_18 = arith.constant 0 : index
      %18 = vector.load %arg6[%c0_17, %c0_18] : memref<2x256xf32, #tpu.memory_space<vmem>>, vector<2x256xf32>
      %c0_19 = arith.constant 0 : index
      %c0_20 = arith.constant 0 : index
      %19 = vector.load %arg3[%c0_19, %c0_20] : memref<2x256xi32, #tpu.memory_space<vmem>>, vector<1x256xi32>
      %c1 = arith.constant 1 : index
      %c0_21 = arith.constant 0 : index
      %20 = vector.load %arg3[%c1, %c0_21] : memref<2x256xi32, #tpu.memory_space<vmem>>, vector<1x256xi32>
      %cst_22 = arith.constant 0.000000e+00 : f32
      %21 = vector.broadcast %cst_22 : f32 to vector<2x256xf32>
      %c51_i32 = arith.constant 51 : i32
      %22 = tpu.dynamic_rotate %17 by %c51_i32 dim 1 : vector<2x256xf32>, i32 -> vector<2x256xf32>
      %c51_i32_23 = arith.constant 51 : i32
      %23 = tpu.dynamic_rotate %18 by %c51_i32_23 dim 1 : vector<2x256xf32>, i32 -> vector<2x256xf32>
      %c3_i32 = arith.constant 3 : i32
      %24 = vector.broadcast %c3_i32 : i32 to vector<1x256xi32>
      %25 = arith.cmpi sge, %19, %24 : vector<1x256xi32>
      %c19_i32 = arith.constant 19 : i32
      %26 = vector.broadcast %c19_i32 : i32 to vector<1x256xi32>
      %27 = arith.cmpi slt, %19, %26 : vector<1x256xi32>
      %28 = arith.andi %25, %27 : vector<1x256xi1>
      %c3_i32_24 = arith.constant 3 : i32
      %29 = vector.broadcast %c3_i32_24 : i32 to vector<1x256xi32>
      %30 = arith.cmpi sge, %20, %29 : vector<1x256xi32>
      %31 = arith.andi %28, %30 : vector<1x256xi1>
      %c19_i32_25 = arith.constant 19 : i32
      %32 = vector.broadcast %c19_i32_25 : i32 to vector<1x256xi32>
      %33 = arith.cmpi slt, %20, %32 : vector<1x256xi32>
      %34 = arith.andi %31, %33 : vector<1x256xi1>
      %cst_26 = arith.constant 0.0813070759 : f32
      %35 = vector.broadcast %cst_26 : f32 to vector<2x256xf32>
      %36 = arith.mulf %35, %22 : vector<2x256xf32>
      %cst_27 = arith.constant 0.0126242815 : f32
      %37 = vector.broadcast %cst_27 : f32 to vector<2x256xf32>
      %38 = arith.mulf %37, %23 : vector<2x256xf32>
      %39 = arith.addf %36, %38 : vector<2x256xf32>
      %cst_28 = arith.constant 0.000000e+00 : f32
      %40 = vector.shape_cast %34 : vector<1x256xi1> to vector<1x256xi1>
      %41 = vector.broadcast %40 : vector<1x256xi1> to vector<2x256xi1>
      %42 = vector.broadcast %cst_28 : f32 to vector<2x256xf32>
      %43 = arith.select %41, %39, %42 : vector<2x256xi1>, vector<2x256xf32>
      %44 = arith.addf %21, %43 : vector<2x256xf32>
      %c50_i32 = arith.constant 50 : i32
      %45 = tpu.dynamic_rotate %17 by %c50_i32 dim 1 : vector<2x256xf32>, i32 -> vector<2x256xf32>
      %c50_i32_29 = arith.constant 50 : i32
      %46 = tpu.dynamic_rotate %18 by %c50_i32_29 dim 1 : vector<2x256xf32>, i32 -> vector<2x256xf32>
      %c3_i32_30 = arith.constant 3 : i32
      %47 = vector.broadcast %c3_i32_30 : i32 to vector<1x256xi32>
      %48 = arith.cmpi sge, %19, %47 : vector<1x256xi32>
      %c19_i32_31 = arith.constant 19 : i32
      %49 = vector.broadcast %c19_i32_31 : i32 to vector<1x256xi32>
      %50 = arith.cmpi slt, %19, %49 : vector<1x256xi32>
      %51 = arith.andi %48, %50 : vector<1x256xi1>
      %c2_i32 = arith.constant 2 : i32
      %52 = vector.broadcast %c2_i32 : i32 to vector<1x256xi32>
      %53 = arith.cmpi sge, %20, %52 : vector<1x256xi32>
      %54 = arith.andi %51, %53 : vector<1x256xi1>
      %c18_i32 = arith.constant 18 : i32
      %55 = vector.broadcast %c18_i32 : i32 to vector<1x256xi32>
      %56 = arith.cmpi slt, %20, %55 : vector<1x256xi32>
      %57 = arith.andi %54, %56 : vector<1x256xi1>
      %cst_32 = arith.constant 0.0832957327 : f32
      %58 = vector.broadcast %cst_32 : f32 to vector<2x256xf32>
      %59 = arith.mulf %58, %45 : vector<2x256xf32>
      %cst_33 = arith.constant -0.0313943215 : f32
      %60 = vector.broadcast %cst_33 : f32 to vector<2x256xf32>
      %61 = arith.mulf %60, %46 : vector<2x256xf32>
      %62 = arith.addf %59, %61 : vector<2x256xf32>
      %cst_34 = arith.constant 0.000000e+00 : f32
      %63 = vector.shape_cast %57 : vector<1x256xi1> to vector<1x256xi1>
      %64 = vector.broadcast %63 : vector<1x256xi1> to vector<2x256xi1>
      %65 = vector.broadcast %cst_34 : f32 to vector<2x256xf32>
      %66 = arith.select %64, %62, %65 : vector<2x256xi1>, vector<2x256xf32>
      %67 = arith.addf %44, %66 : vector<2x256xf32>
      %c49_i32 = arith.constant 49 : i32
      %68 = tpu.dynamic_rotate %17 by %c49_i32 dim 1 : vector<2x256xf32>, i32 -> vector<2x256xf32>
      %c49_i32_35 = arith.constant 49 : i32
      %69 = tpu.dynamic_rotate %18 by %c49_i32_35 dim 1 : vector<2x256xf32>, i32 -> vector<2x256xf32>
      %c3_i32_36 = arith.constant 3 : i32
      %70 = vector.broadcast %c3_i32_36 : i32 to vector<1x256xi32>
      %71 = arith.cmpi sge, %19, %70 : vector<1x256xi32>
      %c19_i32_37 = arith.constant 19 : i32
      %72 = vector.broadcast %c19_i32_37 : i32 to vector<1x256xi32>
      %73 = arith.cmpi slt, %19, %72 : vector<1x256xi32>
      %74 = arith.andi %71, %73 : vector<1x256xi1>
      %c1_i32 = arith.constant 1 : i32
      %75 = vector.broadcast %c1_i32 : i32 to vector<1x256xi32>
      %76 = arith.cmpi sge, %20, %75 : vector<1x256xi32>
      %77 = arith.andi %74, %76 : vector<1x256xi1>
      %c17_i32 = arith.constant 17 : i32
      %78 = vector.broadcast %c17_i32 : i32 to vector<1x256xi32>
      %79 = arith.cmpi slt, %20, %78 : vector<1x256xi32>
      %80 = arith.andi %77, %79 : vector<1x256xi1>
      %cst_38 = arith.constant -0.0321132243 : f32
      %81 = vector.broadcast %cst_38 : f32 to vector<2x256xf32>
      %82 = arith.mulf %81, %68 : vector<2x256xf32>
      %cst_39 = arith.constant 0.0168282725 : f32
      %83 = vector.broadcast %cst_39 : f32 to vector<2x256xf32>
      %84 = arith.mulf %83, %69 : vector<2x256xf32>
      %85 = arith.addf %82, %84 : vector<2x256xf32>
      %cst_40 = arith.constant 0.000000e+00 : f32
      %86 = vector.shape_cast %80 : vector<1x256xi1> to vector<1x256xi1>
      %87 = vector.broadcast %86 : vector<1x256xi1> to vector<2x256xi1>
      %88 = vector.broadcast %cst_40 : f32 to vector<2x256xf32>
      %89 = arith.select %87, %85, %88 : vector<2x256xi1>, vector<2x256xf32>
      %90 = arith.addf %67, %89 : vector<2x256xf32>
      %c48_i32 = arith.constant 48 : i32
      %91 = tpu.dynamic_rotate %17 by %c48_i32 dim 1 : vector<2x256xf32>, i32 -> vector<2x256xf32>
      %c48_i32_41 = arith.constant 48 : i32
      %92 = tpu.dynamic_rotate %18 by %c48_i32_41 dim 1 : vector<2x256xf32>, i32 -> vector<2x256xf32>
      %c3_i32_42 = arith.constant 3 : i32
      %93 = vector.broadcast %c3_i32_42 : i32 to vector<1x256xi32>
      %94 = arith.cmpi sge, %19, %93 : vector<1x256xi32>
      %c19_i32_43 = arith.constant 19 : i32
      %95 = vector.broadcast %c19_i32_43 : i32 to vector<1x256xi32>
      %96 = arith.cmpi slt, %19, %95 : vector<1x256xi32>
      %97 = arith.andi %94, %96 : vector<1x256xi1>
      %c0_i32_44 = arith.constant 0 : i32
      %98 = vector.broadcast %c0_i32_44 : i32 to vector<1x256xi32>
      %99 = arith.cmpi sge, %20, %98 : vector<1x256xi32>
      %100 = arith.andi %97, %99 : vector<1x256xi1>
      %c16_i32 = arith.constant 16 : i32
      %101 = vector.broadcast %c16_i32 : i32 to vector<1x256xi32>
      %102 = arith.cmpi slt, %20, %101 : vector<1x256xi32>
      %103 = arith.andi %100, %102 : vector<1x256xi1>
      %cst_45 = arith.constant -0.0565501377 : f32
      %104 = vector.broadcast %cst_45 : f32 to vector<2x256xf32>
      %105 = arith.mulf %104, %91 : vector<2x256xf32>
      %cst_46 = arith.constant -0.0480084643 : f32
      %106 = vector.broadcast %cst_46 : f32 to vector<2x256xf32>
      %107 = arith.mulf %106, %92 : vector<2x256xf32>
      %108 = arith.addf %105, %107 : vector<2x256xf32>
      %cst_47 = arith.constant 0.000000e+00 : f32
      %109 = vector.shape_cast %103 : vector<1x256xi1> to vector<1x256xi1>
      %110 = vector.broadcast %109 : vector<1x256xi1> to vector<2x256xi1>
      %111 = vector.broadcast %cst_47 : f32 to vector<2x256xf32>
      %112 = arith.select %110, %108, %111 : vector<2x256xi1>, vector<2x256xf32>
      %113 = arith.addf %90, %112 : vector<2x256xf32>
      %c47_i32 = arith.constant 47 : i32
      %114 = tpu.dynamic_rotate %17 by %c47_i32 dim 1 : vector<2x256xf32>, i32 -> vector<2x256xf32>
      %c47_i32_48 = arith.constant 47 : i32
      %115 = tpu.dynamic_rotate %18 by %c47_i32_48 dim 1 : vector<2x256xf32>, i32 -> vector<2x256xf32>
      %c3_i32_49 = arith.constant 3 : i32
      %116 = vector.broadcast %c3_i32_49 : i32 to vector<1x256xi32>
      %117 = arith.cmpi sge, %19, %116 : vector<1x256xi32>
      %c19_i32_50 = arith.constant 19 : i32
      %118 = vector.broadcast %c19_i32_50 : i32 to vector<1x256xi32>
      %119 = arith.cmpi slt, %19, %118 : vector<1x256xi32>
      %120 = arith.andi %117, %119 : vector<1x256xi1>
      %c-1_i32 = arith.constant -1 : i32
      %121 = vector.broadcast %c-1_i32 : i32 to vector<1x256xi32>
      %122 = arith.cmpi sge, %20, %121 : vector<1x256xi32>
      %123 = arith.andi %120, %122 : vector<1x256xi1>
      %c15_i32 = arith.constant 15 : i32
      %124 = vector.broadcast %c15_i32 : i32 to vector<1x256xi32>
      %125 = arith.cmpi slt, %20, %124 : vector<1x256xi32>
      %126 = arith.andi %123, %125 : vector<1x256xi1>
      %cst_51 = arith.constant 0.0299766213 : f32
      %127 = vector.broadcast %cst_51 : f32 to vector<2x256xf32>
      %128 = arith.mulf %127, %114 : vector<2x256xf32>
      %cst_52 = arith.constant 0.0646910071 : f32
      %129 = vector.broadcast %cst_52 : f32 to vector<2x256xf32>
      %130 = arith.mulf %129, %115 : vector<2x256xf32>
      %131 = arith.addf %128, %130 : vector<2x256xf32>
      %cst_53 = arith.constant 0.000000e+00 : f32
      %132 = vector.shape_cast %126 : vector<1x256xi1> to vector<1x256xi1>
      %133 = vector.broadcast %132 : vector<1x256xi1> to vector<2x256xi1>
      %134 = vector.broadcast %cst_53 : f32 to vector<2x256xf32>
      %135 = arith.select %133, %131, %134 : vector<2x256xi1>, vector<2x256xf32>
      %136 = arith.addf %113, %135 : vector<2x256xf32>
      %c46_i32 = arith.constant 46 : i32
      %137 = tpu.dynamic_rotate %17 by %c46_i32 dim 1 : vector<2x256xf32>, i32 -> vector<2x256xf32>
      %c46_i32_54 = arith.constant 46 : i32
      %138 = tpu.dynamic_rotate %18 by %c46_i32_54 dim 1 : vector<2x256xf32>, i32 -> vector<2x256xf32>
      %c3_i32_55 = arith.constant 3 : i32
      %139 = vector.broadcast %c3_i32_55 : i32 to vector<1x256xi32>
      %140 = arith.cmpi sge, %19, %139 : vector<1x256xi32>
      %c19_i32_56 = arith.constant 19 : i32
      %141 = vector.broadcast %c19_i32_56 : i32 to vector<1x256xi32>
      %142 = arith.cmpi slt, %19, %141 : vector<1x256xi32>
      %143 = arith.andi %140, %142 : vector<1x256xi1>
      %c-2_i32 = arith.constant -2 : i32
      %144 = vector.broadcast %c-2_i32 : i32 to vector<1x256xi32>
      %145 = arith.cmpi sge, %20, %144 : vector<1x256xi32>
      %146 = arith.andi %143, %145 : vector<1x256xi1>
      %c14_i32 = arith.constant 14 : i32
      %147 = vector.broadcast %c14_i32 : i32 to vector<1x256xi32>
      %148 = arith.cmpi slt, %20, %147 : vector<1x256xi32>
      %149 = arith.andi %146, %148 : vector<1x256xi1>
      %cst_57 = arith.constant 0.00152234419 : f32
      %150 = vector.broadcast %cst_57 : f32 to vector<2x256xf32>
      %151 = arith.mulf %150, %137 : vector<2x256xf32>
      %cst_58 = arith.constant -0.0464148559 : f32
      %152 = vector.broadcast %cst_58 : f32 to vector<2x256xf32>
      %153 = arith.mulf %152, %138 : vector<2x256xf32>
      %154 = arith.addf %151, %153 : vector<2x256xf32>
      %cst_59 = arith.constant 0.000000e+00 : f32
      %155 = vector.shape_cast %149 : vector<1x256xi1> to vector<1x256xi1>
      %156 = vector.broadcast %155 : vector<1x256xi1> to vector<2x256xi1>
      %157 = vector.broadcast %cst_59 : f32 to vector<2x256xf32>
      %158 = arith.select %156, %154, %157 : vector<2x256xi1>, vector<2x256xf32>
      %159 = arith.addf %136, %158 : vector<2x256xf32>
      %c45_i32 = arith.constant 45 : i32
      %160 = tpu.dynamic_rotate %17 by %c45_i32 dim 1 : vector<2x256xf32>, i32 -> vector<2x256xf32>
      %c45_i32_60 = arith.constant 45 : i32
      %161 = tpu.dynamic_rotate %18 by %c45_i32_60 dim 1 : vector<2x256xf32>, i32 -> vector<2x256xf32>
      %c3_i32_61 = arith.constant 3 : i32
      %162 = vector.broadcast %c3_i32_61 : i32 to vector<1x256xi32>
      %163 = arith.cmpi sge, %19, %162 : vector<1x256xi32>
      %c19_i32_62 = arith.constant 19 : i32
      %164 = vector.broadcast %c19_i32_62 : i32 to vector<1x256xi32>
      %165 = arith.cmpi slt, %19, %164 : vector<1x256xi32>
      %166 = arith.andi %163, %165 : vector<1x256xi1>
      %c-3_i32 = arith.constant -3 : i32
      %167 = vector.broadcast %c-3_i32 : i32 to vector<1x256xi32>
      %168 = arith.cmpi sge, %20, %167 : vector<1x256xi32>
      %169 = arith.andi %166, %168 : vector<1x256xi1>
      %c13_i32 = arith.constant 13 : i32
      %170 = vector.broadcast %c13_i32 : i32 to vector<1x256xi32>
      %171 = arith.cmpi slt, %20, %170 : vector<1x256xi32>
      %172 = arith.andi %169, %171 : vector<1x256xi1>
      %cst_63 = arith.constant 4.388190e-02 : f32
      %173 = vector.broadcast %cst_63 : f32 to vector<2x256xf32>
      %174 = arith.mulf %173, %160 : vector<2x256xf32>
      %cst_64 = arith.constant 0.0511685871 : f32
      %175 = vector.broadcast %cst_64 : f32 to vector<2x256xf32>
      %176 = arith.mulf %175, %161 : vector<2x256xf32>
      %177 = arith.addf %174, %176 : vector<2x256xf32>
      %cst_65 = arith.constant 0.000000e+00 : f32
      %178 = vector.shape_cast %172 : vector<1x256xi1> to vector<1x256xi1>
      %179 = vector.broadcast %178 : vector<1x256xi1> to vector<2x256xi1>
      %180 = vector.broadcast %cst_65 : f32 to vector<2x256xf32>
      %181 = arith.select %179, %177, %180 : vector<2x256xi1>, vector<2x256xf32>
      %182 = arith.addf %159, %181 : vector<2x256xf32>
      %c35_i32 = arith.constant 35 : i32
      %183 = tpu.dynamic_rotate %17 by %c35_i32 dim 1 : vector<2x256xf32>, i32 -> vector<2x256xf32>
      %c35_i32_66 = arith.constant 35 : i32
      %184 = tpu.dynamic_rotate %18 by %c35_i32_66 dim 1 : vector<2x256xf32>, i32 -> vector<2x256xf32>
      %c2_i32_67 = arith.constant 2 : i32
      %185 = vector.broadcast %c2_i32_67 : i32 to vector<1x256xi32>
      %186 = arith.cmpi sge, %19, %185 : vector<1x256xi32>
      %c18_i32_68 = arith.constant 18 : i32
      %187 = vector.broadcast %c18_i32_68 : i32 to vector<1x256xi32>
      %188 = arith.cmpi slt, %19, %187 : vector<1x256xi32>
      %189 = arith.andi %186, %188 : vector<1x256xi1>
      %c3_i32_69 = arith.constant 3 : i32
      %190 = vector.broadcast %c3_i32_69 : i32 to vector<1x256xi32>
      %191 = arith.cmpi sge, %20, %190 : vector<1x256xi32>
      %192 = arith.andi %189, %191 : vector<1x256xi1>
      %c19_i32_70 = arith.constant 19 : i32
      %193 = vector.broadcast %c19_i32_70 : i32 to vector<1x256xi32>
      %194 = arith.cmpi slt, %20, %193 : vector<1x256xi32>
      %195 = arith.andi %192, %194 : vector<1x256xi1>
      %cst_71 = arith.constant -0.0554288626 : f32
      %196 = vector.broadcast %cst_71 : f32 to vector<2x256xf32>
      %197 = arith.mulf %196, %183 : vector<2x256xf32>
      %cst_72 = arith.constant -0.0555566289 : f32
      %198 = vector.broadcast %cst_72 : f32 to vector<2x256xf32>
      %199 = arith.mulf %198, %184 : vector<2x256xf32>
      %200 = arith.addf %197, %199 : vector<2x256xf32>
      %cst_73 = arith.constant 0.000000e+00 : f32
      %201 = vector.shape_cast %195 : vector<1x256xi1> to vector<1x256xi1>
      %202 = vector.broadcast %201 : vector<1x256xi1> to vector<2x256xi1>
      %203 = vector.broadcast %cst_73 : f32 to vector<2x256xf32>
      %204 = arith.select %202, %200, %203 : vector<2x256xi1>, vector<2x256xf32>
      %205 = arith.addf %182, %204 : vector<2x256xf32>
      %c34_i32 = arith.constant 34 : i32
      %206 = tpu.dynamic_rotate %17 by %c34_i32 dim 1 : vector<2x256xf32>, i32 -> vector<2x256xf32>
      %c34_i32_74 = arith.constant 34 : i32
      %207 = tpu.dynamic_rotate %18 by %c34_i32_74 dim 1 : vector<2x256xf32>, i32 -> vector<2x256xf32>
      %c2_i32_75 = arith.constant 2 : i32
      %208 = vector.broadcast %c2_i32_75 : i32 to vector<1x256xi32>
      %209 = arith.cmpi sge, %19, %208 : vector<1x256xi32>
      %c18_i32_76 = arith.constant 18 : i32
      %210 = vector.broadcast %c18_i32_76 : i32 to vector<1x256xi32>
      %211 = arith.cmpi slt, %19, %210 : vector<1x256xi32>
      %212 = arith.andi %209, %211 : vector<1x256xi1>
      %c2_i32_77 = arith.constant 2 : i32
      %213 = vector.broadcast %c2_i32_77 : i32 to vector<1x256xi32>
      %214 = arith.cmpi sge, %20, %213 : vector<1x256xi32>
      %215 = arith.andi %212, %214 : vector<1x256xi1>
      %c18_i32_78 = arith.constant 18 : i32
      %216 = vector.broadcast %c18_i32_78 : i32 to vector<1x256xi32>
      %217 = arith.cmpi slt, %20, %216 : vector<1x256xi32>
      %218 = arith.andi %215, %217 : vector<1x256xi1>
      %cst_79 = arith.constant 0.0183885489 : f32
      %219 = vector.broadcast %cst_79 : f32 to vector<2x256xf32>
      %220 = arith.mulf %219, %206 : vector<2x256xf32>
      %cst_80 = arith.constant -0.0211310331 : f32
      %221 = vector.broadcast %cst_80 : f32 to vector<2x256xf32>
      %222 = arith.mulf %221, %207 : vector<2x256xf32>
      %223 = arith.addf %220, %222 : vector<2x256xf32>
      %cst_81 = arith.constant 0.000000e+00 : f32
      %224 = vector.shape_cast %218 : vector<1x256xi1> to vector<1x256xi1>
      %225 = vector.broadcast %224 : vector<1x256xi1> to vector<2x256xi1>
      %226 = vector.broadcast %cst_81 : f32 to vector<2x256xf32>
      %227 = arith.select %225, %223, %226 : vector<2x256xi1>, vector<2x256xf32>
      %228 = arith.addf %205, %227 : vector<2x256xf32>
      %c33_i32 = arith.constant 33 : i32
      %229 = tpu.dynamic_rotate %17 by %c33_i32 dim 1 : vector<2x256xf32>, i32 -> vector<2x256xf32>
      %c33_i32_82 = arith.constant 33 : i32
      %230 = tpu.dynamic_rotate %18 by %c33_i32_82 dim 1 : vector<2x256xf32>, i32 -> vector<2x256xf32>
      %c2_i32_83 = arith.constant 2 : i32
      %231 = vector.broadcast %c2_i32_83 : i32 to vector<1x256xi32>
      %232 = arith.cmpi sge, %19, %231 : vector<1x256xi32>
      %c18_i32_84 = arith.constant 18 : i32
      %233 = vector.broadcast %c18_i32_84 : i32 to vector<1x256xi32>
      %234 = arith.cmpi slt, %19, %233 : vector<1x256xi32>
      %235 = arith.andi %232, %234 : vector<1x256xi1>
      %c1_i32_85 = arith.constant 1 : i32
      %236 = vector.broadcast %c1_i32_85 : i32 to vector<1x256xi32>
      %237 = arith.cmpi sge, %20, %236 : vector<1x256xi32>
      %238 = arith.andi %235, %237 : vector<1x256xi1>
      %c17_i32_86 = arith.constant 17 : i32
      %239 = vector.broadcast %c17_i32_86 : i32 to vector<1x256xi32>
      %240 = arith.cmpi slt, %20, %239 : vector<1x256xi32>
      %241 = arith.andi %238, %240 : vector<1x256xi1>
      %cst_87 = arith.constant -0.0872370898 : f32
      %242 = vector.broadcast %cst_87 : f32 to vector<2x256xf32>
      %243 = arith.mulf %242, %229 : vector<2x256xf32>
      %cst_88 = arith.constant 0.0917261615 : f32
      %244 = vector.broadcast %cst_88 : f32 to vector<2x256xf32>
      %245 = arith.mulf %244, %230 : vector<2x256xf32>
      %246 = arith.addf %243, %245 : vector<2x256xf32>
      %cst_89 = arith.constant 0.000000e+00 : f32
      %247 = vector.shape_cast %241 : vector<1x256xi1> to vector<1x256xi1>
      %248 = vector.broadcast %247 : vector<1x256xi1> to vector<2x256xi1>
      %249 = vector.broadcast %cst_89 : f32 to vector<2x256xf32>
      %250 = arith.select %248, %246, %249 : vector<2x256xi1>, vector<2x256xf32>
      %251 = arith.addf %228, %250 : vector<2x256xf32>
      %c32_i32 = arith.constant 32 : i32
      %252 = tpu.dynamic_rotate %17 by %c32_i32 dim 1 : vector<2x256xf32>, i32 -> vector<2x256xf32>
      %c32_i32_90 = arith.constant 32 : i32
      %253 = tpu.dynamic_rotate %18 by %c32_i32_90 dim 1 : vector<2x256xf32>, i32 -> vector<2x256xf32>
      %c2_i32_91 = arith.constant 2 : i32
      %254 = vector.broadcast %c2_i32_91 : i32 to vector<1x256xi32>
      %255 = arith.cmpi sge, %19, %254 : vector<1x256xi32>
      %c18_i32_92 = arith.constant 18 : i32
      %256 = vector.broadcast %c18_i32_92 : i32 to vector<1x256xi32>
      %257 = arith.cmpi slt, %19, %256 : vector<1x256xi32>
      %258 = arith.andi %255, %257 : vector<1x256xi1>
      %c0_i32_93 = arith.constant 0 : i32
      %259 = vector.broadcast %c0_i32_93 : i32 to vector<1x256xi32>
      %260 = arith.cmpi sge, %20, %259 : vector<1x256xi32>
      %261 = arith.andi %258, %260 : vector<1x256xi1>
      %c16_i32_94 = arith.constant 16 : i32
      %262 = vector.broadcast %c16_i32_94 : i32 to vector<1x256xi32>
      %263 = arith.cmpi slt, %20, %262 : vector<1x256xi32>
      %264 = arith.andi %261, %263 : vector<1x256xi1>
      %cst_95 = arith.constant -0.0645943359 : f32
      %265 = vector.broadcast %cst_95 : f32 to vector<2x256xf32>
      %266 = arith.mulf %265, %252 : vector<2x256xf32>
      %cst_96 = arith.constant 0.0096443072 : f32
      %267 = vector.broadcast %cst_96 : f32 to vector<2x256xf32>
      %268 = arith.mulf %267, %253 : vector<2x256xf32>
      %269 = arith.addf %266, %268 : vector<2x256xf32>
      %cst_97 = arith.constant 0.000000e+00 : f32
      %270 = vector.shape_cast %264 : vector<1x256xi1> to vector<1x256xi1>
      %271 = vector.broadcast %270 : vector<1x256xi1> to vector<2x256xi1>
      %272 = vector.broadcast %cst_97 : f32 to vector<2x256xf32>
      %273 = arith.select %271, %269, %272 : vector<2x256xi1>, vector<2x256xf32>
      %274 = arith.addf %251, %273 : vector<2x256xf32>
      %c31_i32 = arith.constant 31 : i32
      %275 = tpu.dynamic_rotate %17 by %c31_i32 dim 1 : vector<2x256xf32>, i32 -> vector<2x256xf32>
      %c31_i32_98 = arith.constant 31 : i32
      %276 = tpu.dynamic_rotate %18 by %c31_i32_98 dim 1 : vector<2x256xf32>, i32 -> vector<2x256xf32>
      %c2_i32_99 = arith.constant 2 : i32
      %277 = vector.broadcast %c2_i32_99 : i32 to vector<1x256xi32>
      %278 = arith.cmpi sge, %19, %277 : vector<1x256xi32>
      %c18_i32_100 = arith.constant 18 : i32
      %279 = vector.broadcast %c18_i32_100 : i32 to vector<1x256xi32>
      %280 = arith.cmpi slt, %19, %279 : vector<1x256xi32>
      %281 = arith.andi %278, %280 : vector<1x256xi1>
      %c-1_i32_101 = arith.constant -1 : i32
      %282 = vector.broadcast %c-1_i32_101 : i32 to vector<1x256xi32>
      %283 = arith.cmpi sge, %20, %282 : vector<1x256xi32>
      %284 = arith.andi %281, %283 : vector<1x256xi1>
      %c15_i32_102 = arith.constant 15 : i32
      %285 = vector.broadcast %c15_i32_102 : i32 to vector<1x256xi32>
      %286 = arith.cmpi slt, %20, %285 : vector<1x256xi32>
      %287 = arith.andi %284, %286 : vector<1x256xi1>
      %cst_103 = arith.constant 0.0931991339 : f32
      %288 = vector.broadcast %cst_103 : f32 to vector<2x256xf32>
      %289 = arith.mulf %288, %275 : vector<2x256xf32>
      %cst_104 = arith.constant -0.0798169822 : f32
      %290 = vector.broadcast %cst_104 : f32 to vector<2x256xf32>
      %291 = arith.mulf %290, %276 : vector<2x256xf32>
      %292 = arith.addf %289, %291 : vector<2x256xf32>
      %cst_105 = arith.constant 0.000000e+00 : f32
      %293 = vector.shape_cast %287 : vector<1x256xi1> to vector<1x256xi1>
      %294 = vector.broadcast %293 : vector<1x256xi1> to vector<2x256xi1>
      %295 = vector.broadcast %cst_105 : f32 to vector<2x256xf32>
      %296 = arith.select %294, %292, %295 : vector<2x256xi1>, vector<2x256xf32>
      %297 = arith.addf %274, %296 : vector<2x256xf32>
      %c30_i32 = arith.constant 30 : i32
      %298 = tpu.dynamic_rotate %17 by %c30_i32 dim 1 : vector<2x256xf32>, i32 -> vector<2x256xf32>
      %c30_i32_106 = arith.constant 30 : i32
      %299 = tpu.dynamic_rotate %18 by %c30_i32_106 dim 1 : vector<2x256xf32>, i32 -> vector<2x256xf32>
      %c2_i32_107 = arith.constant 2 : i32
      %300 = vector.broadcast %c2_i32_107 : i32 to vector<1x256xi32>
      %301 = arith.cmpi sge, %19, %300 : vector<1x256xi32>
      %c18_i32_108 = arith.constant 18 : i32
      %302 = vector.broadcast %c18_i32_108 : i32 to vector<1x256xi32>
      %303 = arith.cmpi slt, %19, %302 : vector<1x256xi32>
      %304 = arith.andi %301, %303 : vector<1x256xi1>
      %c-2_i32_109 = arith.constant -2 : i32
      %305 = vector.broadcast %c-2_i32_109 : i32 to vector<1x256xi32>
      %306 = arith.cmpi sge, %20, %305 : vector<1x256xi32>
      %307 = arith.andi %304, %306 : vector<1x256xi1>
      %c14_i32_110 = arith.constant 14 : i32
      %308 = vector.broadcast %c14_i32_110 : i32 to vector<1x256xi32>
      %309 = arith.cmpi slt, %20, %308 : vector<1x256xi32>
      %310 = arith.andi %307, %309 : vector<1x256xi1>
      %cst_111 = arith.constant -0.0669504404 : f32
      %311 = vector.broadcast %cst_111 : f32 to vector<2x256xf32>
      %312 = arith.mulf %311, %298 : vector<2x256xf32>
      %cst_112 = arith.constant 0.00145676371 : f32
      %313 = vector.broadcast %cst_112 : f32 to vector<2x256xf32>
      %314 = arith.mulf %313, %299 : vector<2x256xf32>
      %315 = arith.addf %312, %314 : vector<2x256xf32>
      %cst_113 = arith.constant 0.000000e+00 : f32
      %316 = vector.shape_cast %310 : vector<1x256xi1> to vector<1x256xi1>
      %317 = vector.broadcast %316 : vector<1x256xi1> to vector<2x256xi1>
      %318 = vector.broadcast %cst_113 : f32 to vector<2x256xf32>
      %319 = arith.select %317, %315, %318 : vector<2x256xi1>, vector<2x256xf32>
      %320 = arith.addf %297, %319 : vector<2x256xf32>
      %c29_i32 = arith.constant 29 : i32
      %321 = tpu.dynamic_rotate %17 by %c29_i32 dim 1 : vector<2x256xf32>, i32 -> vector<2x256xf32>
      %c29_i32_114 = arith.constant 29 : i32
      %322 = tpu.dynamic_rotate %18 by %c29_i32_114 dim 1 : vector<2x256xf32>, i32 -> vector<2x256xf32>
      %c2_i32_115 = arith.constant 2 : i32
      %323 = vector.broadcast %c2_i32_115 : i32 to vector<1x256xi32>
      %324 = arith.cmpi sge, %19, %323 : vector<1x256xi32>
      %c18_i32_116 = arith.constant 18 : i32
      %325 = vector.broadcast %c18_i32_116 : i32 to vector<1x256xi32>
      %326 = arith.cmpi slt, %19, %325 : vector<1x256xi32>
      %327 = arith.andi %324, %326 : vector<1x256xi1>
      %c-3_i32_117 = arith.constant -3 : i32
      %328 = vector.broadcast %c-3_i32_117 : i32 to vector<1x256xi32>
      %329 = arith.cmpi sge, %20, %328 : vector<1x256xi32>
      %330 = arith.andi %327, %329 : vector<1x256xi1>
      %c13_i32_118 = arith.constant 13 : i32
      %331 = vector.broadcast %c13_i32_118 : i32 to vector<1x256xi32>
      %332 = arith.cmpi slt, %20, %331 : vector<1x256xi32>
      %333 = arith.andi %330, %332 : vector<1x256xi1>
      %cst_119 = arith.constant -0.0337152891 : f32
      %334 = vector.broadcast %cst_119 : f32 to vector<2x256xf32>
      %335 = arith.mulf %334, %321 : vector<2x256xf32>
      %cst_120 = arith.constant 0.0257647783 : f32
      %336 = vector.broadcast %cst_120 : f32 to vector<2x256xf32>
      %337 = arith.mulf %336, %322 : vector<2x256xf32>
      %338 = arith.addf %335, %337 : vector<2x256xf32>
      %cst_121 = arith.constant 0.000000e+00 : f32
      %339 = vector.shape_cast %333 : vector<1x256xi1> to vector<1x256xi1>
      %340 = vector.broadcast %339 : vector<1x256xi1> to vector<2x256xi1>
      %341 = vector.broadcast %cst_121 : f32 to vector<2x256xf32>
      %342 = arith.select %340, %338, %341 : vector<2x256xi1>, vector<2x256xf32>
      %343 = arith.addf %320, %342 : vector<2x256xf32>
      %c19_i32_122 = arith.constant 19 : i32
      %344 = tpu.dynamic_rotate %17 by %c19_i32_122 dim 1 : vector<2x256xf32>, i32 -> vector<2x256xf32>
      %c19_i32_123 = arith.constant 19 : i32
      %345 = tpu.dynamic_rotate %18 by %c19_i32_123 dim 1 : vector<2x256xf32>, i32 -> vector<2x256xf32>
      %c1_i32_124 = arith.constant 1 : i32
      %346 = vector.broadcast %c1_i32_124 : i32 to vector<1x256xi32>
      %347 = arith.cmpi sge, %19, %346 : vector<1x256xi32>
      %c17_i32_125 = arith.constant 17 : i32
      %348 = vector.broadcast %c17_i32_125 : i32 to vector<1x256xi32>
      %349 = arith.cmpi slt, %19, %348 : vector<1x256xi32>
      %350 = arith.andi %347, %349 : vector<1x256xi1>
      %c3_i32_126 = arith.constant 3 : i32
      %351 = vector.broadcast %c3_i32_126 : i32 to vector<1x256xi32>
      %352 = arith.cmpi sge, %20, %351 : vector<1x256xi32>
      %353 = arith.andi %350, %352 : vector<1x256xi1>
      %c19_i32_127 = arith.constant 19 : i32
      %354 = vector.broadcast %c19_i32_127 : i32 to vector<1x256xi32>
      %355 = arith.cmpi slt, %20, %354 : vector<1x256xi32>
      %356 = arith.andi %353, %355 : vector<1x256xi1>
      %cst_128 = arith.constant 0.0591004305 : f32
      %357 = vector.broadcast %cst_128 : f32 to vector<2x256xf32>
      %358 = arith.mulf %357, %344 : vector<2x256xf32>
      %cst_129 = arith.constant 0.00169654307 : f32
      %359 = vector.broadcast %cst_129 : f32 to vector<2x256xf32>
      %360 = arith.mulf %359, %345 : vector<2x256xf32>
      %361 = arith.addf %358, %360 : vector<2x256xf32>
      %cst_130 = arith.constant 0.000000e+00 : f32
      %362 = vector.shape_cast %356 : vector<1x256xi1> to vector<1x256xi1>
      %363 = vector.broadcast %362 : vector<1x256xi1> to vector<2x256xi1>
      %364 = vector.broadcast %cst_130 : f32 to vector<2x256xf32>
      %365 = arith.select %363, %361, %364 : vector<2x256xi1>, vector<2x256xf32>
      %366 = arith.addf %343, %365 : vector<2x256xf32>
      %c18_i32_131 = arith.constant 18 : i32
      %367 = tpu.dynamic_rotate %17 by %c18_i32_131 dim 1 : vector<2x256xf32>, i32 -> vector<2x256xf32>
      %c18_i32_132 = arith.constant 18 : i32
      %368 = tpu.dynamic_rotate %18 by %c18_i32_132 dim 1 : vector<2x256xf32>, i32 -> vector<2x256xf32>
      %c1_i32_133 = arith.constant 1 : i32
      %369 = vector.broadcast %c1_i32_133 : i32 to vector<1x256xi32>
      %370 = arith.cmpi sge, %19, %369 : vector<1x256xi32>
      %c17_i32_134 = arith.constant 17 : i32
      %371 = vector.broadcast %c17_i32_134 : i32 to vector<1x256xi32>
      %372 = arith.cmpi slt, %19, %371 : vector<1x256xi32>
      %373 = arith.andi %370, %372 : vector<1x256xi1>
      %c2_i32_135 = arith.constant 2 : i32
      %374 = vector.broadcast %c2_i32_135 : i32 to vector<1x256xi32>
      %375 = arith.cmpi sge, %20, %374 : vector<1x256xi32>
      %376 = arith.andi %373, %375 : vector<1x256xi1>
      %c18_i32_136 = arith.constant 18 : i32
      %377 = vector.broadcast %c18_i32_136 : i32 to vector<1x256xi32>
      %378 = arith.cmpi slt, %20, %377 : vector<1x256xi32>
      %379 = arith.andi %376, %378 : vector<1x256xi1>
      %cst_137 = arith.constant 0.0777548701 : f32
      %380 = vector.broadcast %cst_137 : f32 to vector<2x256xf32>
      %381 = arith.mulf %380, %367 : vector<2x256xf32>
      %cst_138 = arith.constant -3.815470e-02 : f32
      %382 = vector.broadcast %cst_138 : f32 to vector<2x256xf32>
      %383 = arith.mulf %382, %368 : vector<2x256xf32>
      %384 = arith.addf %381, %383 : vector<2x256xf32>
      %cst_139 = arith.constant 0.000000e+00 : f32
      %385 = vector.shape_cast %379 : vector<1x256xi1> to vector<1x256xi1>
      %386 = vector.broadcast %385 : vector<1x256xi1> to vector<2x256xi1>
      %387 = vector.broadcast %cst_139 : f32 to vector<2x256xf32>
      %388 = arith.select %386, %384, %387 : vector<2x256xi1>, vector<2x256xf32>
      %389 = arith.addf %366, %388 : vector<2x256xf32>
      %c17_i32_140 = arith.constant 17 : i32
      %390 = tpu.dynamic_rotate %17 by %c17_i32_140 dim 1 : vector<2x256xf32>, i32 -> vector<2x256xf32>
      %c17_i32_141 = arith.constant 17 : i32
      %391 = tpu.dynamic_rotate %18 by %c17_i32_141 dim 1 : vector<2x256xf32>, i32 -> vector<2x256xf32>
      %c1_i32_142 = arith.constant 1 : i32
      %392 = vector.broadcast %c1_i32_142 : i32 to vector<1x256xi32>
      %393 = arith.cmpi sge, %19, %392 : vector<1x256xi32>
      %c17_i32_143 = arith.constant 17 : i32
      %394 = vector.broadcast %c17_i32_143 : i32 to vector<1x256xi32>
      %395 = arith.cmpi slt, %19, %394 : vector<1x256xi32>
      %396 = arith.andi %393, %395 : vector<1x256xi1>
      %c1_i32_144 = arith.constant 1 : i32
      %397 = vector.broadcast %c1_i32_144 : i32 to vector<1x256xi32>
      %398 = arith.cmpi sge, %20, %397 : vector<1x256xi32>
      %399 = arith.andi %396, %398 : vector<1x256xi1>
      %c17_i32_145 = arith.constant 17 : i32
      %400 = vector.broadcast %c17_i32_145 : i32 to vector<1x256xi32>
      %401 = arith.cmpi slt, %20, %400 : vector<1x256xi32>
      %402 = arith.andi %399, %401 : vector<1x256xi1>
      %cst_146 = arith.constant -8.668860e-03 : f32
      %403 = vector.broadcast %cst_146 : f32 to vector<2x256xf32>
      %404 = arith.mulf %403, %390 : vector<2x256xf32>
      %cst_147 = arith.constant -0.0836196616 : f32
      %405 = vector.broadcast %cst_147 : f32 to vector<2x256xf32>
      %406 = arith.mulf %405, %391 : vector<2x256xf32>
      %407 = arith.addf %404, %406 : vector<2x256xf32>
      %cst_148 = arith.constant 0.000000e+00 : f32
      %408 = vector.shape_cast %402 : vector<1x256xi1> to vector<1x256xi1>
      %409 = vector.broadcast %408 : vector<1x256xi1> to vector<2x256xi1>
      %410 = vector.broadcast %cst_148 : f32 to vector<2x256xf32>
      %411 = arith.select %409, %407, %410 : vector<2x256xi1>, vector<2x256xf32>
      %412 = arith.addf %389, %411 : vector<2x256xf32>
      %c16_i32_149 = arith.constant 16 : i32
      %413 = tpu.dynamic_rotate %17 by %c16_i32_149 dim 1 : vector<2x256xf32>, i32 -> vector<2x256xf32>
      %c16_i32_150 = arith.constant 16 : i32
      %414 = tpu.dynamic_rotate %18 by %c16_i32_150 dim 1 : vector<2x256xf32>, i32 -> vector<2x256xf32>
      %c1_i32_151 = arith.constant 1 : i32
      %415 = vector.broadcast %c1_i32_151 : i32 to vector<1x256xi32>
      %416 = arith.cmpi sge, %19, %415 : vector<1x256xi32>
      %c17_i32_152 = arith.constant 17 : i32
      %417 = vector.broadcast %c17_i32_152 : i32 to vector<1x256xi32>
      %418 = arith.cmpi slt, %19, %417 : vector<1x256xi32>
      %419 = arith.andi %416, %418 : vector<1x256xi1>
      %c0_i32_153 = arith.constant 0 : i32
      %420 = vector.broadcast %c0_i32_153 : i32 to vector<1x256xi32>
      %421 = arith.cmpi sge, %20, %420 : vector<1x256xi32>
      %422 = arith.andi %419, %421 : vector<1x256xi1>
      %c16_i32_154 = arith.constant 16 : i32
      %423 = vector.broadcast %c16_i32_154 : i32 to vector<1x256xi32>
      %424 = arith.cmpi slt, %20, %423 : vector<1x256xi32>
      %425 = arith.andi %422, %424 : vector<1x256xi1>
      %cst_155 = arith.constant -0.0639732108 : f32
      %426 = vector.broadcast %cst_155 : f32 to vector<2x256xf32>
      %427 = arith.mulf %426, %413 : vector<2x256xf32>
      %cst_156 = arith.constant 0.0576357916 : f32
      %428 = vector.broadcast %cst_156 : f32 to vector<2x256xf32>
      %429 = arith.mulf %428, %414 : vector<2x256xf32>
      %430 = arith.addf %427, %429 : vector<2x256xf32>
      %cst_157 = arith.constant 0.000000e+00 : f32
      %431 = vector.shape_cast %425 : vector<1x256xi1> to vector<1x256xi1>
      %432 = vector.broadcast %431 : vector<1x256xi1> to vector<2x256xi1>
      %433 = vector.broadcast %cst_157 : f32 to vector<2x256xf32>
      %434 = arith.select %432, %430, %433 : vector<2x256xi1>, vector<2x256xf32>
      %435 = arith.addf %412, %434 : vector<2x256xf32>
      %c15_i32_158 = arith.constant 15 : i32
      %436 = tpu.dynamic_rotate %17 by %c15_i32_158 dim 1 : vector<2x256xf32>, i32 -> vector<2x256xf32>
      %c15_i32_159 = arith.constant 15 : i32
      %437 = tpu.dynamic_rotate %18 by %c15_i32_159 dim 1 : vector<2x256xf32>, i32 -> vector<2x256xf32>
      %c1_i32_160 = arith.constant 1 : i32
      %438 = vector.broadcast %c1_i32_160 : i32 to vector<1x256xi32>
      %439 = arith.cmpi sge, %19, %438 : vector<1x256xi32>
      %c17_i32_161 = arith.constant 17 : i32
      %440 = vector.broadcast %c17_i32_161 : i32 to vector<1x256xi32>
      %441 = arith.cmpi slt, %19, %440 : vector<1x256xi32>
      %442 = arith.andi %439, %441 : vector<1x256xi1>
      %c-1_i32_162 = arith.constant -1 : i32
      %443 = vector.broadcast %c-1_i32_162 : i32 to vector<1x256xi32>
      %444 = arith.cmpi sge, %20, %443 : vector<1x256xi32>
      %445 = arith.andi %442, %444 : vector<1x256xi1>
      %c15_i32_163 = arith.constant 15 : i32
      %446 = vector.broadcast %c15_i32_163 : i32 to vector<1x256xi32>
      %447 = arith.cmpi slt, %20, %446 : vector<1x256xi32>
      %448 = arith.andi %445, %447 : vector<1x256xi1>
      %cst_164 = arith.constant 0.0839605703 : f32
      %449 = vector.broadcast %cst_164 : f32 to vector<2x256xf32>
      %450 = arith.mulf %449, %436 : vector<2x256xf32>
      %cst_165 = arith.constant 0.0196221042 : f32
      %451 = vector.broadcast %cst_165 : f32 to vector<2x256xf32>
      %452 = arith.mulf %451, %437 : vector<2x256xf32>
      %453 = arith.addf %450, %452 : vector<2x256xf32>
      %cst_166 = arith.constant 0.000000e+00 : f32
      %454 = vector.shape_cast %448 : vector<1x256xi1> to vector<1x256xi1>
      %455 = vector.broadcast %454 : vector<1x256xi1> to vector<2x256xi1>
      %456 = vector.broadcast %cst_166 : f32 to vector<2x256xf32>
      %457 = arith.select %455, %453, %456 : vector<2x256xi1>, vector<2x256xf32>
      %458 = arith.addf %435, %457 : vector<2x256xf32>
      %c14_i32_167 = arith.constant 14 : i32
      %459 = tpu.dynamic_rotate %17 by %c14_i32_167 dim 1 : vector<2x256xf32>, i32 -> vector<2x256xf32>
      %c14_i32_168 = arith.constant 14 : i32
      %460 = tpu.dynamic_rotate %18 by %c14_i32_168 dim 1 : vector<2x256xf32>, i32 -> vector<2x256xf32>
      %c1_i32_169 = arith.constant 1 : i32
      %461 = vector.broadcast %c1_i32_169 : i32 to vector<1x256xi32>
      %462 = arith.cmpi sge, %19, %461 : vector<1x256xi32>
      %c17_i32_170 = arith.constant 17 : i32
      %463 = vector.broadcast %c17_i32_170 : i32 to vector<1x256xi32>
      %464 = arith.cmpi slt, %19, %463 : vector<1x256xi32>
      %465 = arith.andi %462, %464 : vector<1x256xi1>
      %c-2_i32_171 = arith.constant -2 : i32
      %466 = vector.broadcast %c-2_i32_171 : i32 to vector<1x256xi32>
      %467 = arith.cmpi sge, %20, %466 : vector<1x256xi32>
      %468 = arith.andi %465, %467 : vector<1x256xi1>
      %c14_i32_172 = arith.constant 14 : i32
      %469 = vector.broadcast %c14_i32_172 : i32 to vector<1x256xi32>
      %470 = arith.cmpi slt, %20, %469 : vector<1x256xi32>
      %471 = arith.andi %468, %470 : vector<1x256xi1>
      %cst_173 = arith.constant 0.0104572112 : f32
      %472 = vector.broadcast %cst_173 : f32 to vector<2x256xf32>
      %473 = arith.mulf %472, %459 : vector<2x256xf32>
      %cst_174 = arith.constant 0.0162247792 : f32
      %474 = vector.broadcast %cst_174 : f32 to vector<2x256xf32>
      %475 = arith.mulf %474, %460 : vector<2x256xf32>
      %476 = arith.addf %473, %475 : vector<2x256xf32>
      %cst_175 = arith.constant 0.000000e+00 : f32
      %477 = vector.shape_cast %471 : vector<1x256xi1> to vector<1x256xi1>
      %478 = vector.broadcast %477 : vector<1x256xi1> to vector<2x256xi1>
      %479 = vector.broadcast %cst_175 : f32 to vector<2x256xf32>
      %480 = arith.select %478, %476, %479 : vector<2x256xi1>, vector<2x256xf32>
      %481 = arith.addf %458, %480 : vector<2x256xf32>
      %c13_i32_176 = arith.constant 13 : i32
      %482 = tpu.dynamic_rotate %17 by %c13_i32_176 dim 1 : vector<2x256xf32>, i32 -> vector<2x256xf32>
      %c13_i32_177 = arith.constant 13 : i32
      %483 = tpu.dynamic_rotate %18 by %c13_i32_177 dim 1 : vector<2x256xf32>, i32 -> vector<2x256xf32>
      %c1_i32_178 = arith.constant 1 : i32
      %484 = vector.broadcast %c1_i32_178 : i32 to vector<1x256xi32>
      %485 = arith.cmpi sge, %19, %484 : vector<1x256xi32>
      %c17_i32_179 = arith.constant 17 : i32
      %486 = vector.broadcast %c17_i32_179 : i32 to vector<1x256xi32>
      %487 = arith.cmpi slt, %19, %486 : vector<1x256xi32>
      %488 = arith.andi %485, %487 : vector<1x256xi1>
      %c-3_i32_180 = arith.constant -3 : i32
      %489 = vector.broadcast %c-3_i32_180 : i32 to vector<1x256xi32>
      %490 = arith.cmpi sge, %20, %489 : vector<1x256xi32>
      %491 = arith.andi %488, %490 : vector<1x256xi1>
      %c13_i32_181 = arith.constant 13 : i32
      %492 = vector.broadcast %c13_i32_181 : i32 to vector<1x256xi32>
      %493 = arith.cmpi slt, %20, %492 : vector<1x256xi32>
      %494 = arith.andi %491, %493 : vector<1x256xi1>
      %cst_182 = arith.constant -0.0449356437 : f32
      %495 = vector.broadcast %cst_182 : f32 to vector<2x256xf32>
      %496 = arith.mulf %495, %482 : vector<2x256xf32>
      %cst_183 = arith.constant 0.100111604 : f32
      %497 = vector.broadcast %cst_183 : f32 to vector<2x256xf32>
      %498 = arith.mulf %497, %483 : vector<2x256xf32>
      %499 = arith.addf %496, %498 : vector<2x256xf32>
      %cst_184 = arith.constant 0.000000e+00 : f32
      %500 = vector.shape_cast %494 : vector<1x256xi1> to vector<1x256xi1>
      %501 = vector.broadcast %500 : vector<1x256xi1> to vector<2x256xi1>
      %502 = vector.broadcast %cst_184 : f32 to vector<2x256xf32>
      %503 = arith.select %501, %499, %502 : vector<2x256xi1>, vector<2x256xf32>
      %504 = arith.addf %481, %503 : vector<2x256xf32>
      %c3_i32_185 = arith.constant 3 : i32
      %505 = tpu.dynamic_rotate %17 by %c3_i32_185 dim 1 : vector<2x256xf32>, i32 -> vector<2x256xf32>
      %c3_i32_186 = arith.constant 3 : i32
      %506 = tpu.dynamic_rotate %18 by %c3_i32_186 dim 1 : vector<2x256xf32>, i32 -> vector<2x256xf32>
      %c0_i32_187 = arith.constant 0 : i32
      %507 = vector.broadcast %c0_i32_187 : i32 to vector<1x256xi32>
      %508 = arith.cmpi sge, %19, %507 : vector<1x256xi32>
      %c16_i32_188 = arith.constant 16 : i32
      %509 = vector.broadcast %c16_i32_188 : i32 to vector<1x256xi32>
      %510 = arith.cmpi slt, %19, %509 : vector<1x256xi32>
      %511 = arith.andi %508, %510 : vector<1x256xi1>
      %c3_i32_189 = arith.constant 3 : i32
      %512 = vector.broadcast %c3_i32_189 : i32 to vector<1x256xi32>
      %513 = arith.cmpi sge, %20, %512 : vector<1x256xi32>
      %514 = arith.andi %511, %513 : vector<1x256xi1>
      %c19_i32_190 = arith.constant 19 : i32
      %515 = vector.broadcast %c19_i32_190 : i32 to vector<1x256xi32>
      %516 = arith.cmpi slt, %20, %515 : vector<1x256xi32>
      %517 = arith.andi %514, %516 : vector<1x256xi1>
      %cst_191 = arith.constant -0.0359021798 : f32
      %518 = vector.broadcast %cst_191 : f32 to vector<2x256xf32>
      %519 = arith.mulf %518, %505 : vector<2x256xf32>
      %cst_192 = arith.constant 0.0147608863 : f32
      %520 = vector.broadcast %cst_192 : f32 to vector<2x256xf32>
      %521 = arith.mulf %520, %506 : vector<2x256xf32>
      %522 = arith.addf %519, %521 : vector<2x256xf32>
      %cst_193 = arith.constant 0.000000e+00 : f32
      %523 = vector.shape_cast %517 : vector<1x256xi1> to vector<1x256xi1>
      %524 = vector.broadcast %523 : vector<1x256xi1> to vector<2x256xi1>
      %525 = vector.broadcast %cst_193 : f32 to vector<2x256xf32>
      %526 = arith.select %524, %522, %525 : vector<2x256xi1>, vector<2x256xf32>
      %527 = arith.addf %504, %526 : vector<2x256xf32>
      %c2_i32_194 = arith.constant 2 : i32
      %528 = tpu.dynamic_rotate %17 by %c2_i32_194 dim 1 : vector<2x256xf32>, i32 -> vector<2x256xf32>
      %c2_i32_195 = arith.constant 2 : i32
      %529 = tpu.dynamic_rotate %18 by %c2_i32_195 dim 1 : vector<2x256xf32>, i32 -> vector<2x256xf32>
      %c0_i32_196 = arith.constant 0 : i32
      %530 = vector.broadcast %c0_i32_196 : i32 to vector<1x256xi32>
      %531 = arith.cmpi sge, %19, %530 : vector<1x256xi32>
      %c16_i32_197 = arith.constant 16 : i32
      %532 = vector.broadcast %c16_i32_197 : i32 to vector<1x256xi32>
      %533 = arith.cmpi slt, %19, %532 : vector<1x256xi32>
      %534 = arith.andi %531, %533 : vector<1x256xi1>
      %c2_i32_198 = arith.constant 2 : i32
      %535 = vector.broadcast %c2_i32_198 : i32 to vector<1x256xi32>
      %536 = arith.cmpi sge, %20, %535 : vector<1x256xi32>
      %537 = arith.andi %534, %536 : vector<1x256xi1>
      %c18_i32_199 = arith.constant 18 : i32
      %538 = vector.broadcast %c18_i32_199 : i32 to vector<1x256xi32>
      %539 = arith.cmpi slt, %20, %538 : vector<1x256xi32>
      %540 = arith.andi %537, %539 : vector<1x256xi1>
      %cst_200 = arith.constant -0.0433712751 : f32
      %541 = vector.broadcast %cst_200 : f32 to vector<2x256xf32>
      %542 = arith.mulf %541, %528 : vector<2x256xf32>
      %cst_201 = arith.constant 0.0352496728 : f32
      %543 = vector.broadcast %cst_201 : f32 to vector<2x256xf32>
      %544 = arith.mulf %543, %529 : vector<2x256xf32>
      %545 = arith.addf %542, %544 : vector<2x256xf32>
      %cst_202 = arith.constant 0.000000e+00 : f32
      %546 = vector.shape_cast %540 : vector<1x256xi1> to vector<1x256xi1>
      %547 = vector.broadcast %546 : vector<1x256xi1> to vector<2x256xi1>
      %548 = vector.broadcast %cst_202 : f32 to vector<2x256xf32>
      %549 = arith.select %547, %545, %548 : vector<2x256xi1>, vector<2x256xf32>
      %550 = arith.addf %527, %549 : vector<2x256xf32>
      %c1_i32_203 = arith.constant 1 : i32
      %551 = tpu.dynamic_rotate %17 by %c1_i32_203 dim 1 : vector<2x256xf32>, i32 -> vector<2x256xf32>
      %c1_i32_204 = arith.constant 1 : i32
      %552 = tpu.dynamic_rotate %18 by %c1_i32_204 dim 1 : vector<2x256xf32>, i32 -> vector<2x256xf32>
      %c0_i32_205 = arith.constant 0 : i32
      %553 = vector.broadcast %c0_i32_205 : i32 to vector<1x256xi32>
      %554 = arith.cmpi sge, %19, %553 : vector<1x256xi32>
      %c16_i32_206 = arith.constant 16 : i32
      %555 = vector.broadcast %c16_i32_206 : i32 to vector<1x256xi32>
      %556 = arith.cmpi slt, %19, %555 : vector<1x256xi32>
      %557 = arith.andi %554, %556 : vector<1x256xi1>
      %c1_i32_207 = arith.constant 1 : i32
      %558 = vector.broadcast %c1_i32_207 : i32 to vector<1x256xi32>
      %559 = arith.cmpi sge, %20, %558 : vector<1x256xi32>
      %560 = arith.andi %557, %559 : vector<1x256xi1>
      %c17_i32_208 = arith.constant 17 : i32
      %561 = vector.broadcast %c17_i32_208 : i32 to vector<1x256xi32>
      %562 = arith.cmpi slt, %20, %561 : vector<1x256xi32>
      %563 = arith.andi %560, %562 : vector<1x256xi1>
      %cst_209 = arith.constant 0.0219792929 : f32
      %564 = vector.broadcast %cst_209 : f32 to vector<2x256xf32>
      %565 = arith.mulf %564, %551 : vector<2x256xf32>
      %cst_210 = arith.constant -0.041793298 : f32
      %566 = vector.broadcast %cst_210 : f32 to vector<2x256xf32>
      %567 = arith.mulf %566, %552 : vector<2x256xf32>
      %568 = arith.addf %565, %567 : vector<2x256xf32>
      %cst_211 = arith.constant 0.000000e+00 : f32
      %569 = vector.shape_cast %563 : vector<1x256xi1> to vector<1x256xi1>
      %570 = vector.broadcast %569 : vector<1x256xi1> to vector<2x256xi1>
      %571 = vector.broadcast %cst_211 : f32 to vector<2x256xf32>
      %572 = arith.select %570, %568, %571 : vector<2x256xi1>, vector<2x256xf32>
      %573 = arith.addf %550, %572 : vector<2x256xf32>
      %c0_i32_212 = arith.constant 0 : i32
      %574 = vector.broadcast %c0_i32_212 : i32 to vector<1x256xi32>
      %575 = arith.cmpi sge, %19, %574 : vector<1x256xi32>
      %c16_i32_213 = arith.constant 16 : i32
      %576 = vector.broadcast %c16_i32_213 : i32 to vector<1x256xi32>
      %577 = arith.cmpi slt, %19, %576 : vector<1x256xi32>
      %578 = arith.andi %575, %577 : vector<1x256xi1>
      %c0_i32_214 = arith.constant 0 : i32
      %579 = vector.broadcast %c0_i32_214 : i32 to vector<1x256xi32>
      %580 = arith.cmpi sge, %20, %579 : vector<1x256xi32>
      %581 = arith.andi %578, %580 : vector<1x256xi1>
      %c16_i32_215 = arith.constant 16 : i32
      %582 = vector.broadcast %c16_i32_215 : i32 to vector<1x256xi32>
      %583 = arith.cmpi slt, %20, %582 : vector<1x256xi32>
      %584 = arith.andi %581, %583 : vector<1x256xi1>
      %cst_216 = arith.constant -0.0132669853 : f32
      %585 = vector.broadcast %cst_216 : f32 to vector<2x256xf32>
      %586 = arith.mulf %585, %17 : vector<2x256xf32>
      %cst_217 = arith.constant 0.0353122205 : f32
      %587 = vector.broadcast %cst_217 : f32 to vector<2x256xf32>
      %588 = arith.mulf %587, %18 : vector<2x256xf32>
      %589 = arith.addf %586, %588 : vector<2x256xf32>
      %cst_218 = arith.constant 0.000000e+00 : f32
      %590 = vector.shape_cast %584 : vector<1x256xi1> to vector<1x256xi1>
      %591 = vector.broadcast %590 : vector<1x256xi1> to vector<2x256xi1>
      %592 = vector.broadcast %cst_218 : f32 to vector<2x256xf32>
      %593 = arith.select %591, %589, %592 : vector<2x256xi1>, vector<2x256xf32>
      %594 = arith.addf %573, %593 : vector<2x256xf32>
      %c255_i32 = arith.constant 255 : i32
      %595 = tpu.dynamic_rotate %17 by %c255_i32 dim 1 : vector<2x256xf32>, i32 -> vector<2x256xf32>
      %c255_i32_219 = arith.constant 255 : i32
      %596 = tpu.dynamic_rotate %18 by %c255_i32_219 dim 1 : vector<2x256xf32>, i32 -> vector<2x256xf32>
      %c0_i32_220 = arith.constant 0 : i32
      %597 = vector.broadcast %c0_i32_220 : i32 to vector<1x256xi32>
      %598 = arith.cmpi sge, %19, %597 : vector<1x256xi32>
      %c16_i32_221 = arith.constant 16 : i32
      %599 = vector.broadcast %c16_i32_221 : i32 to vector<1x256xi32>
      %600 = arith.cmpi slt, %19, %599 : vector<1x256xi32>
      %601 = arith.andi %598, %600 : vector<1x256xi1>
      %c-1_i32_222 = arith.constant -1 : i32
      %602 = vector.broadcast %c-1_i32_222 : i32 to vector<1x256xi32>
      %603 = arith.cmpi sge, %20, %602 : vector<1x256xi32>
      %604 = arith.andi %601, %603 : vector<1x256xi1>
      %c15_i32_223 = arith.constant 15 : i32
      %605 = vector.broadcast %c15_i32_223 : i32 to vector<1x256xi32>
      %606 = arith.cmpi slt, %20, %605 : vector<1x256xi32>
      %607 = arith.andi %604, %606 : vector<1x256xi1>
      %cst_224 = arith.constant 0.0913386494 : f32
      %608 = vector.broadcast %cst_224 : f32 to vector<2x256xf32>
      %609 = arith.mulf %608, %595 : vector<2x256xf32>
      %cst_225 = arith.constant 0.0881461352 : f32
      %610 = vector.broadcast %cst_225 : f32 to vector<2x256xf32>
      %611 = arith.mulf %610, %596 : vector<2x256xf32>
      %612 = arith.addf %609, %611 : vector<2x256xf32>
      %cst_226 = arith.constant 0.000000e+00 : f32
      %613 = vector.shape_cast %607 : vector<1x256xi1> to vector<1x256xi1>
      %614 = vector.broadcast %613 : vector<1x256xi1> to vector<2x256xi1>
      %615 = vector.broadcast %cst_226 : f32 to vector<2x256xf32>
      %616 = arith.select %614, %612, %615 : vector<2x256xi1>, vector<2x256xf32>
      %617 = arith.addf %594, %616 : vector<2x256xf32>
      %c254_i32 = arith.constant 254 : i32
      %618 = tpu.dynamic_rotate %17 by %c254_i32 dim 1 : vector<2x256xf32>, i32 -> vector<2x256xf32>
      %c254_i32_227 = arith.constant 254 : i32
      %619 = tpu.dynamic_rotate %18 by %c254_i32_227 dim 1 : vector<2x256xf32>, i32 -> vector<2x256xf32>
      %c0_i32_228 = arith.constant 0 : i32
      %620 = vector.broadcast %c0_i32_228 : i32 to vector<1x256xi32>
      %621 = arith.cmpi sge, %19, %620 : vector<1x256xi32>
      %c16_i32_229 = arith.constant 16 : i32
      %622 = vector.broadcast %c16_i32_229 : i32 to vector<1x256xi32>
      %623 = arith.cmpi slt, %19, %622 : vector<1x256xi32>
      %624 = arith.andi %621, %623 : vector<1x256xi1>
      %c-2_i32_230 = arith.constant -2 : i32
      %625 = vector.broadcast %c-2_i32_230 : i32 to vector<1x256xi32>
      %626 = arith.cmpi sge, %20, %625 : vector<1x256xi32>
      %627 = arith.andi %624, %626 : vector<1x256xi1>
      %c14_i32_231 = arith.constant 14 : i32
      %628 = vector.broadcast %c14_i32_231 : i32 to vector<1x256xi32>
      %629 = arith.cmpi slt, %20, %628 : vector<1x256xi32>
      %630 = arith.andi %627, %629 : vector<1x256xi1>
      %cst_232 = arith.constant -0.0529671498 : f32
      %631 = vector.broadcast %cst_232 : f32 to vector<2x256xf32>
      %632 = arith.mulf %631, %618 : vector<2x256xf32>
      %cst_233 = arith.constant -0.0897697284 : f32
      %633 = vector.broadcast %cst_233 : f32 to vector<2x256xf32>
      %634 = arith.mulf %633, %619 : vector<2x256xf32>
      %635 = arith.addf %632, %634 : vector<2x256xf32>
      %cst_234 = arith.constant 0.000000e+00 : f32
      %636 = vector.shape_cast %630 : vector<1x256xi1> to vector<1x256xi1>
      %637 = vector.broadcast %636 : vector<1x256xi1> to vector<2x256xi1>
      %638 = vector.broadcast %cst_234 : f32 to vector<2x256xf32>
      %639 = arith.select %637, %635, %638 : vector<2x256xi1>, vector<2x256xf32>
      %640 = arith.addf %617, %639 : vector<2x256xf32>
      %c253_i32 = arith.constant 253 : i32
      %641 = tpu.dynamic_rotate %17 by %c253_i32 dim 1 : vector<2x256xf32>, i32 -> vector<2x256xf32>
      %c253_i32_235 = arith.constant 253 : i32
      %642 = tpu.dynamic_rotate %18 by %c253_i32_235 dim 1 : vector<2x256xf32>, i32 -> vector<2x256xf32>
      %c0_i32_236 = arith.constant 0 : i32
      %643 = vector.broadcast %c0_i32_236 : i32 to vector<1x256xi32>
      %644 = arith.cmpi sge, %19, %643 : vector<1x256xi32>
      %c16_i32_237 = arith.constant 16 : i32
      %645 = vector.broadcast %c16_i32_237 : i32 to vector<1x256xi32>
      %646 = arith.cmpi slt, %19, %645 : vector<1x256xi32>
      %647 = arith.andi %644, %646 : vector<1x256xi1>
      %c-3_i32_238 = arith.constant -3 : i32
      %648 = vector.broadcast %c-3_i32_238 : i32 to vector<1x256xi32>
      %649 = arith.cmpi sge, %20, %648 : vector<1x256xi32>
      %650 = arith.andi %647, %649 : vector<1x256xi1>
      %c13_i32_239 = arith.constant 13 : i32
      %651 = vector.broadcast %c13_i32_239 : i32 to vector<1x256xi32>
      %652 = arith.cmpi slt, %20, %651 : vector<1x256xi32>
      %653 = arith.andi %650, %652 : vector<1x256xi1>
      %cst_240 = arith.constant 0.096787706 : f32
      %654 = vector.broadcast %cst_240 : f32 to vector<2x256xf32>
      %655 = arith.mulf %654, %641 : vector<2x256xf32>
      %cst_241 = arith.constant 0.0776615142 : f32
      %656 = vector.broadcast %cst_241 : f32 to vector<2x256xf32>
      %657 = arith.mulf %656, %642 : vector<2x256xf32>
      %658 = arith.addf %655, %657 : vector<2x256xf32>
      %cst_242 = arith.constant 0.000000e+00 : f32
      %659 = vector.shape_cast %653 : vector<1x256xi1> to vector<1x256xi1>
      %660 = vector.broadcast %659 : vector<1x256xi1> to vector<2x256xi1>
      %661 = vector.broadcast %cst_242 : f32 to vector<2x256xf32>
      %662 = arith.select %660, %658, %661 : vector<2x256xi1>, vector<2x256xf32>
      %663 = arith.addf %640, %662 : vector<2x256xf32>
      %c243_i32 = arith.constant 243 : i32
      %664 = tpu.dynamic_rotate %17 by %c243_i32 dim 1 : vector<2x256xf32>, i32 -> vector<2x256xf32>
      %c243_i32_243 = arith.constant 243 : i32
      %665 = tpu.dynamic_rotate %18 by %c243_i32_243 dim 1 : vector<2x256xf32>, i32 -> vector<2x256xf32>
      %c-1_i32_244 = arith.constant -1 : i32
      %666 = vector.broadcast %c-1_i32_244 : i32 to vector<1x256xi32>
      %667 = arith.cmpi sge, %19, %666 : vector<1x256xi32>
      %c15_i32_245 = arith.constant 15 : i32
      %668 = vector.broadcast %c15_i32_245 : i32 to vector<1x256xi32>
      %669 = arith.cmpi slt, %19, %668 : vector<1x256xi32>
      %670 = arith.andi %667, %669 : vector<1x256xi1>
      %c3_i32_246 = arith.constant 3 : i32
      %671 = vector.broadcast %c3_i32_246 : i32 to vector<1x256xi32>
      %672 = arith.cmpi sge, %20, %671 : vector<1x256xi32>
      %673 = arith.andi %670, %672 : vector<1x256xi1>
      %c19_i32_247 = arith.constant 19 : i32
      %674 = vector.broadcast %c19_i32_247 : i32 to vector<1x256xi32>
      %675 = arith.cmpi slt, %20, %674 : vector<1x256xi32>
      %676 = arith.andi %673, %675 : vector<1x256xi1>
      %cst_248 = arith.constant 0.0672794208 : f32
      %677 = vector.broadcast %cst_248 : f32 to vector<2x256xf32>
      %678 = arith.mulf %677, %664 : vector<2x256xf32>
      %cst_249 = arith.constant -0.0734596923 : f32
      %679 = vector.broadcast %cst_249 : f32 to vector<2x256xf32>
      %680 = arith.mulf %679, %665 : vector<2x256xf32>
      %681 = arith.addf %678, %680 : vector<2x256xf32>
      %cst_250 = arith.constant 0.000000e+00 : f32
      %682 = vector.shape_cast %676 : vector<1x256xi1> to vector<1x256xi1>
      %683 = vector.broadcast %682 : vector<1x256xi1> to vector<2x256xi1>
      %684 = vector.broadcast %cst_250 : f32 to vector<2x256xf32>
      %685 = arith.select %683, %681, %684 : vector<2x256xi1>, vector<2x256xf32>
      %686 = arith.addf %663, %685 : vector<2x256xf32>
      %c242_i32 = arith.constant 242 : i32
      %687 = tpu.dynamic_rotate %17 by %c242_i32 dim 1 : vector<2x256xf32>, i32 -> vector<2x256xf32>
      %c242_i32_251 = arith.constant 242 : i32
      %688 = tpu.dynamic_rotate %18 by %c242_i32_251 dim 1 : vector<2x256xf32>, i32 -> vector<2x256xf32>
      %c-1_i32_252 = arith.constant -1 : i32
      %689 = vector.broadcast %c-1_i32_252 : i32 to vector<1x256xi32>
      %690 = arith.cmpi sge, %19, %689 : vector<1x256xi32>
      %c15_i32_253 = arith.constant 15 : i32
      %691 = vector.broadcast %c15_i32_253 : i32 to vector<1x256xi32>
      %692 = arith.cmpi slt, %19, %691 : vector<1x256xi32>
      %693 = arith.andi %690, %692 : vector<1x256xi1>
      %c2_i32_254 = arith.constant 2 : i32
      %694 = vector.broadcast %c2_i32_254 : i32 to vector<1x256xi32>
      %695 = arith.cmpi sge, %20, %694 : vector<1x256xi32>
      %696 = arith.andi %693, %695 : vector<1x256xi1>
      %c18_i32_255 = arith.constant 18 : i32
      %697 = vector.broadcast %c18_i32_255 : i32 to vector<1x256xi32>
      %698 = arith.cmpi slt, %20, %697 : vector<1x256xi32>
      %699 = arith.andi %696, %698 : vector<1x256xi1>
      %cst_256 = arith.constant -0.0924073532 : f32
      %700 = vector.broadcast %cst_256 : f32 to vector<2x256xf32>
      %701 = arith.mulf %700, %687 : vector<2x256xf32>
      %cst_257 = arith.constant -8.777650e-02 : f32
      %702 = vector.broadcast %cst_257 : f32 to vector<2x256xf32>
      %703 = arith.mulf %702, %688 : vector<2x256xf32>
      %704 = arith.addf %701, %703 : vector<2x256xf32>
      %cst_258 = arith.constant 0.000000e+00 : f32
      %705 = vector.shape_cast %699 : vector<1x256xi1> to vector<1x256xi1>
      %706 = vector.broadcast %705 : vector<1x256xi1> to vector<2x256xi1>
      %707 = vector.broadcast %cst_258 : f32 to vector<2x256xf32>
      %708 = arith.select %706, %704, %707 : vector<2x256xi1>, vector<2x256xf32>
      %709 = arith.addf %686, %708 : vector<2x256xf32>
      %c241_i32 = arith.constant 241 : i32
      %710 = tpu.dynamic_rotate %17 by %c241_i32 dim 1 : vector<2x256xf32>, i32 -> vector<2x256xf32>
      %c241_i32_259 = arith.constant 241 : i32
      %711 = tpu.dynamic_rotate %18 by %c241_i32_259 dim 1 : vector<2x256xf32>, i32 -> vector<2x256xf32>
      %c-1_i32_260 = arith.constant -1 : i32
      %712 = vector.broadcast %c-1_i32_260 : i32 to vector<1x256xi32>
      %713 = arith.cmpi sge, %19, %712 : vector<1x256xi32>
      %c15_i32_261 = arith.constant 15 : i32
      %714 = vector.broadcast %c15_i32_261 : i32 to vector<1x256xi32>
      %715 = arith.cmpi slt, %19, %714 : vector<1x256xi32>
      %716 = arith.andi %713, %715 : vector<1x256xi1>
      %c1_i32_262 = arith.constant 1 : i32
      %717 = vector.broadcast %c1_i32_262 : i32 to vector<1x256xi32>
      %718 = arith.cmpi sge, %20, %717 : vector<1x256xi32>
      %719 = arith.andi %716, %718 : vector<1x256xi1>
      %c17_i32_263 = arith.constant 17 : i32
      %720 = vector.broadcast %c17_i32_263 : i32 to vector<1x256xi32>
      %721 = arith.cmpi slt, %20, %720 : vector<1x256xi32>
      %722 = arith.andi %719, %721 : vector<1x256xi1>
      %cst_264 = arith.constant -0.0696867332 : f32
      %723 = vector.broadcast %cst_264 : f32 to vector<2x256xf32>
      %724 = arith.mulf %723, %710 : vector<2x256xf32>
      %cst_265 = arith.constant 0.0832547396 : f32
      %725 = vector.broadcast %cst_265 : f32 to vector<2x256xf32>
      %726 = arith.mulf %725, %711 : vector<2x256xf32>
      %727 = arith.addf %724, %726 : vector<2x256xf32>
      %cst_266 = arith.constant 0.000000e+00 : f32
      %728 = vector.shape_cast %722 : vector<1x256xi1> to vector<1x256xi1>
      %729 = vector.broadcast %728 : vector<1x256xi1> to vector<2x256xi1>
      %730 = vector.broadcast %cst_266 : f32 to vector<2x256xf32>
      %731 = arith.select %729, %727, %730 : vector<2x256xi1>, vector<2x256xf32>
      %732 = arith.addf %709, %731 : vector<2x256xf32>
      %c240_i32 = arith.constant 240 : i32
      %733 = tpu.dynamic_rotate %17 by %c240_i32 dim 1 : vector<2x256xf32>, i32 -> vector<2x256xf32>
      %c240_i32_267 = arith.constant 240 : i32
      %734 = tpu.dynamic_rotate %18 by %c240_i32_267 dim 1 : vector<2x256xf32>, i32 -> vector<2x256xf32>
      %c-1_i32_268 = arith.constant -1 : i32
      %735 = vector.broadcast %c-1_i32_268 : i32 to vector<1x256xi32>
      %736 = arith.cmpi sge, %19, %735 : vector<1x256xi32>
      %c15_i32_269 = arith.constant 15 : i32
      %737 = vector.broadcast %c15_i32_269 : i32 to vector<1x256xi32>
      %738 = arith.cmpi slt, %19, %737 : vector<1x256xi32>
      %739 = arith.andi %736, %738 : vector<1x256xi1>
      %c0_i32_270 = arith.constant 0 : i32
      %740 = vector.broadcast %c0_i32_270 : i32 to vector<1x256xi32>
      %741 = arith.cmpi sge, %20, %740 : vector<1x256xi32>
      %742 = arith.andi %739, %741 : vector<1x256xi1>
      %c16_i32_271 = arith.constant 16 : i32
      %743 = vector.broadcast %c16_i32_271 : i32 to vector<1x256xi32>
      %744 = arith.cmpi slt, %20, %743 : vector<1x256xi32>
      %745 = arith.andi %742, %744 : vector<1x256xi1>
      %cst_272 = arith.constant -0.0254581664 : f32
      %746 = vector.broadcast %cst_272 : f32 to vector<2x256xf32>
      %747 = arith.mulf %746, %733 : vector<2x256xf32>
      %cst_273 = arith.constant -0.0207529161 : f32
      %748 = vector.broadcast %cst_273 : f32 to vector<2x256xf32>
      %749 = arith.mulf %748, %734 : vector<2x256xf32>
      %750 = arith.addf %747, %749 : vector<2x256xf32>
      %cst_274 = arith.constant 0.000000e+00 : f32
      %751 = vector.shape_cast %745 : vector<1x256xi1> to vector<1x256xi1>
      %752 = vector.broadcast %751 : vector<1x256xi1> to vector<2x256xi1>
      %753 = vector.broadcast %cst_274 : f32 to vector<2x256xf32>
      %754 = arith.select %752, %750, %753 : vector<2x256xi1>, vector<2x256xf32>
      %755 = arith.addf %732, %754 : vector<2x256xf32>
      %c239_i32 = arith.constant 239 : i32
      %756 = tpu.dynamic_rotate %17 by %c239_i32 dim 1 : vector<2x256xf32>, i32 -> vector<2x256xf32>
      %c239_i32_275 = arith.constant 239 : i32
      %757 = tpu.dynamic_rotate %18 by %c239_i32_275 dim 1 : vector<2x256xf32>, i32 -> vector<2x256xf32>
      %c-1_i32_276 = arith.constant -1 : i32
      %758 = vector.broadcast %c-1_i32_276 : i32 to vector<1x256xi32>
      %759 = arith.cmpi sge, %19, %758 : vector<1x256xi32>
      %c15_i32_277 = arith.constant 15 : i32
      %760 = vector.broadcast %c15_i32_277 : i32 to vector<1x256xi32>
      %761 = arith.cmpi slt, %19, %760 : vector<1x256xi32>
      %762 = arith.andi %759, %761 : vector<1x256xi1>
      %c-1_i32_278 = arith.constant -1 : i32
      %763 = vector.broadcast %c-1_i32_278 : i32 to vector<1x256xi32>
      %764 = arith.cmpi sge, %20, %763 : vector<1x256xi32>
      %765 = arith.andi %762, %764 : vector<1x256xi1>
      %c15_i32_279 = arith.constant 15 : i32
      %766 = vector.broadcast %c15_i32_279 : i32 to vector<1x256xi32>
      %767 = arith.cmpi slt, %20, %766 : vector<1x256xi32>
      %768 = arith.andi %765, %767 : vector<1x256xi1>
      %cst_280 = arith.constant -0.0653485953 : f32
      %769 = vector.broadcast %cst_280 : f32 to vector<2x256xf32>
      %770 = arith.mulf %769, %756 : vector<2x256xf32>
      %cst_281 = arith.constant 0.0263460428 : f32
      %771 = vector.broadcast %cst_281 : f32 to vector<2x256xf32>
      %772 = arith.mulf %771, %757 : vector<2x256xf32>
      %773 = arith.addf %770, %772 : vector<2x256xf32>
      %cst_282 = arith.constant 0.000000e+00 : f32
      %774 = vector.shape_cast %768 : vector<1x256xi1> to vector<1x256xi1>
      %775 = vector.broadcast %774 : vector<1x256xi1> to vector<2x256xi1>
      %776 = vector.broadcast %cst_282 : f32 to vector<2x256xf32>
      %777 = arith.select %775, %773, %776 : vector<2x256xi1>, vector<2x256xf32>
      %778 = arith.addf %755, %777 : vector<2x256xf32>
      %c238_i32 = arith.constant 238 : i32
      %779 = tpu.dynamic_rotate %17 by %c238_i32 dim 1 : vector<2x256xf32>, i32 -> vector<2x256xf32>
      %c238_i32_283 = arith.constant 238 : i32
      %780 = tpu.dynamic_rotate %18 by %c238_i32_283 dim 1 : vector<2x256xf32>, i32 -> vector<2x256xf32>
      %c-1_i32_284 = arith.constant -1 : i32
      %781 = vector.broadcast %c-1_i32_284 : i32 to vector<1x256xi32>
      %782 = arith.cmpi sge, %19, %781 : vector<1x256xi32>
      %c15_i32_285 = arith.constant 15 : i32
      %783 = vector.broadcast %c15_i32_285 : i32 to vector<1x256xi32>
      %784 = arith.cmpi slt, %19, %783 : vector<1x256xi32>
      %785 = arith.andi %782, %784 : vector<1x256xi1>
      %c-2_i32_286 = arith.constant -2 : i32
      %786 = vector.broadcast %c-2_i32_286 : i32 to vector<1x256xi32>
      %787 = arith.cmpi sge, %20, %786 : vector<1x256xi32>
      %788 = arith.andi %785, %787 : vector<1x256xi1>
      %c14_i32_287 = arith.constant 14 : i32
      %789 = vector.broadcast %c14_i32_287 : i32 to vector<1x256xi32>
      %790 = arith.cmpi slt, %20, %789 : vector<1x256xi32>
      %791 = arith.andi %788, %790 : vector<1x256xi1>
      %cst_288 = arith.constant -0.0456475914 : f32
      %792 = vector.broadcast %cst_288 : f32 to vector<2x256xf32>
      %793 = arith.mulf %792, %779 : vector<2x256xf32>
      %cst_289 = arith.constant 7.038630e-02 : f32
      %794 = vector.broadcast %cst_289 : f32 to vector<2x256xf32>
      %795 = arith.mulf %794, %780 : vector<2x256xf32>
      %796 = arith.addf %793, %795 : vector<2x256xf32>
      %cst_290 = arith.constant 0.000000e+00 : f32
      %797 = vector.shape_cast %791 : vector<1x256xi1> to vector<1x256xi1>
      %798 = vector.broadcast %797 : vector<1x256xi1> to vector<2x256xi1>
      %799 = vector.broadcast %cst_290 : f32 to vector<2x256xf32>
      %800 = arith.select %798, %796, %799 : vector<2x256xi1>, vector<2x256xf32>
      %801 = arith.addf %778, %800 : vector<2x256xf32>
      %c237_i32 = arith.constant 237 : i32
      %802 = tpu.dynamic_rotate %17 by %c237_i32 dim 1 : vector<2x256xf32>, i32 -> vector<2x256xf32>
      %c237_i32_291 = arith.constant 237 : i32
      %803 = tpu.dynamic_rotate %18 by %c237_i32_291 dim 1 : vector<2x256xf32>, i32 -> vector<2x256xf32>
      %c-1_i32_292 = arith.constant -1 : i32
      %804 = vector.broadcast %c-1_i32_292 : i32 to vector<1x256xi32>
      %805 = arith.cmpi sge, %19, %804 : vector<1x256xi32>
      %c15_i32_293 = arith.constant 15 : i32
      %806 = vector.broadcast %c15_i32_293 : i32 to vector<1x256xi32>
      %807 = arith.cmpi slt, %19, %806 : vector<1x256xi32>
      %808 = arith.andi %805, %807 : vector<1x256xi1>
      %c-3_i32_294 = arith.constant -3 : i32
      %809 = vector.broadcast %c-3_i32_294 : i32 to vector<1x256xi32>
      %810 = arith.cmpi sge, %20, %809 : vector<1x256xi32>
      %811 = arith.andi %808, %810 : vector<1x256xi1>
      %c13_i32_295 = arith.constant 13 : i32
      %812 = vector.broadcast %c13_i32_295 : i32 to vector<1x256xi32>
      %813 = arith.cmpi slt, %20, %812 : vector<1x256xi32>
      %814 = arith.andi %811, %813 : vector<1x256xi1>
      %cst_296 = arith.constant 0.0924265906 : f32
      %815 = vector.broadcast %cst_296 : f32 to vector<2x256xf32>
      %816 = arith.mulf %815, %802 : vector<2x256xf32>
      %cst_297 = arith.constant 0.0867910534 : f32
      %817 = vector.broadcast %cst_297 : f32 to vector<2x256xf32>
      %818 = arith.mulf %817, %803 : vector<2x256xf32>
      %819 = arith.addf %816, %818 : vector<2x256xf32>
      %cst_298 = arith.constant 0.000000e+00 : f32
      %820 = vector.shape_cast %814 : vector<1x256xi1> to vector<1x256xi1>
      %821 = vector.broadcast %820 : vector<1x256xi1> to vector<2x256xi1>
      %822 = vector.broadcast %cst_298 : f32 to vector<2x256xf32>
      %823 = arith.select %821, %819, %822 : vector<2x256xi1>, vector<2x256xf32>
      %824 = arith.addf %801, %823 : vector<2x256xf32>
      %c227_i32 = arith.constant 227 : i32
      %825 = tpu.dynamic_rotate %17 by %c227_i32 dim 1 : vector<2x256xf32>, i32 -> vector<2x256xf32>
      %c227_i32_299 = arith.constant 227 : i32
      %826 = tpu.dynamic_rotate %18 by %c227_i32_299 dim 1 : vector<2x256xf32>, i32 -> vector<2x256xf32>
      %c-2_i32_300 = arith.constant -2 : i32
      %827 = vector.broadcast %c-2_i32_300 : i32 to vector<1x256xi32>
      %828 = arith.cmpi sge, %19, %827 : vector<1x256xi32>
      %c14_i32_301 = arith.constant 14 : i32
      %829 = vector.broadcast %c14_i32_301 : i32 to vector<1x256xi32>
      %830 = arith.cmpi slt, %19, %829 : vector<1x256xi32>
      %831 = arith.andi %828, %830 : vector<1x256xi1>
      %c3_i32_302 = arith.constant 3 : i32
      %832 = vector.broadcast %c3_i32_302 : i32 to vector<1x256xi32>
      %833 = arith.cmpi sge, %20, %832 : vector<1x256xi32>
      %834 = arith.andi %831, %833 : vector<1x256xi1>
      %c19_i32_303 = arith.constant 19 : i32
      %835 = vector.broadcast %c19_i32_303 : i32 to vector<1x256xi32>
      %836 = arith.cmpi slt, %20, %835 : vector<1x256xi32>
      %837 = arith.andi %834, %836 : vector<1x256xi1>
      %cst_304 = arith.constant 0.0687244832 : f32
      %838 = vector.broadcast %cst_304 : f32 to vector<2x256xf32>
      %839 = arith.mulf %838, %825 : vector<2x256xf32>
      %cst_305 = arith.constant -0.0946226865 : f32
      %840 = vector.broadcast %cst_305 : f32 to vector<2x256xf32>
      %841 = arith.mulf %840, %826 : vector<2x256xf32>
      %842 = arith.addf %839, %841 : vector<2x256xf32>
      %cst_306 = arith.constant 0.000000e+00 : f32
      %843 = vector.shape_cast %837 : vector<1x256xi1> to vector<1x256xi1>
      %844 = vector.broadcast %843 : vector<1x256xi1> to vector<2x256xi1>
      %845 = vector.broadcast %cst_306 : f32 to vector<2x256xf32>
      %846 = arith.select %844, %842, %845 : vector<2x256xi1>, vector<2x256xf32>
      %847 = arith.addf %824, %846 : vector<2x256xf32>
      %c226_i32 = arith.constant 226 : i32
      %848 = tpu.dynamic_rotate %17 by %c226_i32 dim 1 : vector<2x256xf32>, i32 -> vector<2x256xf32>
      %c226_i32_307 = arith.constant 226 : i32
      %849 = tpu.dynamic_rotate %18 by %c226_i32_307 dim 1 : vector<2x256xf32>, i32 -> vector<2x256xf32>
      %c-2_i32_308 = arith.constant -2 : i32
      %850 = vector.broadcast %c-2_i32_308 : i32 to vector<1x256xi32>
      %851 = arith.cmpi sge, %19, %850 : vector<1x256xi32>
      %c14_i32_309 = arith.constant 14 : i32
      %852 = vector.broadcast %c14_i32_309 : i32 to vector<1x256xi32>
      %853 = arith.cmpi slt, %19, %852 : vector<1x256xi32>
      %854 = arith.andi %851, %853 : vector<1x256xi1>
      %c2_i32_310 = arith.constant 2 : i32
      %855 = vector.broadcast %c2_i32_310 : i32 to vector<1x256xi32>
      %856 = arith.cmpi sge, %20, %855 : vector<1x256xi32>
      %857 = arith.andi %854, %856 : vector<1x256xi1>
      %c18_i32_311 = arith.constant 18 : i32
      %858 = vector.broadcast %c18_i32_311 : i32 to vector<1x256xi32>
      %859 = arith.cmpi slt, %20, %858 : vector<1x256xi32>
      %860 = arith.andi %857, %859 : vector<1x256xi1>
      %cst_312 = arith.constant 0.0112890936 : f32
      %861 = vector.broadcast %cst_312 : f32 to vector<2x256xf32>
      %862 = arith.mulf %861, %848 : vector<2x256xf32>
      %cst_313 = arith.constant -0.0166187193 : f32
      %863 = vector.broadcast %cst_313 : f32 to vector<2x256xf32>
      %864 = arith.mulf %863, %849 : vector<2x256xf32>
      %865 = arith.addf %862, %864 : vector<2x256xf32>
      %cst_314 = arith.constant 0.000000e+00 : f32
      %866 = vector.shape_cast %860 : vector<1x256xi1> to vector<1x256xi1>
      %867 = vector.broadcast %866 : vector<1x256xi1> to vector<2x256xi1>
      %868 = vector.broadcast %cst_314 : f32 to vector<2x256xf32>
      %869 = arith.select %867, %865, %868 : vector<2x256xi1>, vector<2x256xf32>
      %870 = arith.addf %847, %869 : vector<2x256xf32>
      %c225_i32 = arith.constant 225 : i32
      %871 = tpu.dynamic_rotate %17 by %c225_i32 dim 1 : vector<2x256xf32>, i32 -> vector<2x256xf32>
      %c225_i32_315 = arith.constant 225 : i32
      %872 = tpu.dynamic_rotate %18 by %c225_i32_315 dim 1 : vector<2x256xf32>, i32 -> vector<2x256xf32>
      %c-2_i32_316 = arith.constant -2 : i32
      %873 = vector.broadcast %c-2_i32_316 : i32 to vector<1x256xi32>
      %874 = arith.cmpi sge, %19, %873 : vector<1x256xi32>
      %c14_i32_317 = arith.constant 14 : i32
      %875 = vector.broadcast %c14_i32_317 : i32 to vector<1x256xi32>
      %876 = arith.cmpi slt, %19, %875 : vector<1x256xi32>
      %877 = arith.andi %874, %876 : vector<1x256xi1>
      %c1_i32_318 = arith.constant 1 : i32
      %878 = vector.broadcast %c1_i32_318 : i32 to vector<1x256xi32>
      %879 = arith.cmpi sge, %20, %878 : vector<1x256xi32>
      %880 = arith.andi %877, %879 : vector<1x256xi1>
      %c17_i32_319 = arith.constant 17 : i32
      %881 = vector.broadcast %c17_i32_319 : i32 to vector<1x256xi32>
      %882 = arith.cmpi slt, %20, %881 : vector<1x256xi32>
      %883 = arith.andi %880, %882 : vector<1x256xi1>
      %cst_320 = arith.constant 0.0345257595 : f32
      %884 = vector.broadcast %cst_320 : f32 to vector<2x256xf32>
      %885 = arith.mulf %884, %871 : vector<2x256xf32>
      %cst_321 = arith.constant 0.0377171412 : f32
      %886 = vector.broadcast %cst_321 : f32 to vector<2x256xf32>
      %887 = arith.mulf %886, %872 : vector<2x256xf32>
      %888 = arith.addf %885, %887 : vector<2x256xf32>
      %cst_322 = arith.constant 0.000000e+00 : f32
      %889 = vector.shape_cast %883 : vector<1x256xi1> to vector<1x256xi1>
      %890 = vector.broadcast %889 : vector<1x256xi1> to vector<2x256xi1>
      %891 = vector.broadcast %cst_322 : f32 to vector<2x256xf32>
      %892 = arith.select %890, %888, %891 : vector<2x256xi1>, vector<2x256xf32>
      %893 = arith.addf %870, %892 : vector<2x256xf32>
      %c224_i32 = arith.constant 224 : i32
      %894 = tpu.dynamic_rotate %17 by %c224_i32 dim 1 : vector<2x256xf32>, i32 -> vector<2x256xf32>
      %c224_i32_323 = arith.constant 224 : i32
      %895 = tpu.dynamic_rotate %18 by %c224_i32_323 dim 1 : vector<2x256xf32>, i32 -> vector<2x256xf32>
      %c-2_i32_324 = arith.constant -2 : i32
      %896 = vector.broadcast %c-2_i32_324 : i32 to vector<1x256xi32>
      %897 = arith.cmpi sge, %19, %896 : vector<1x256xi32>
      %c14_i32_325 = arith.constant 14 : i32
      %898 = vector.broadcast %c14_i32_325 : i32 to vector<1x256xi32>
      %899 = arith.cmpi slt, %19, %898 : vector<1x256xi32>
      %900 = arith.andi %897, %899 : vector<1x256xi1>
      %c0_i32_326 = arith.constant 0 : i32
      %901 = vector.broadcast %c0_i32_326 : i32 to vector<1x256xi32>
      %902 = arith.cmpi sge, %20, %901 : vector<1x256xi32>
      %903 = arith.andi %900, %902 : vector<1x256xi1>
      %c16_i32_327 = arith.constant 16 : i32
      %904 = vector.broadcast %c16_i32_327 : i32 to vector<1x256xi32>
      %905 = arith.cmpi slt, %20, %904 : vector<1x256xi32>
      %906 = arith.andi %903, %905 : vector<1x256xi1>
      %cst_328 = arith.constant 0.0533096716 : f32
      %907 = vector.broadcast %cst_328 : f32 to vector<2x256xf32>
      %908 = arith.mulf %907, %894 : vector<2x256xf32>
      %cst_329 = arith.constant 0.0991029441 : f32
      %909 = vector.broadcast %cst_329 : f32 to vector<2x256xf32>
      %910 = arith.mulf %909, %895 : vector<2x256xf32>
      %911 = arith.addf %908, %910 : vector<2x256xf32>
      %cst_330 = arith.constant 0.000000e+00 : f32
      %912 = vector.shape_cast %906 : vector<1x256xi1> to vector<1x256xi1>
      %913 = vector.broadcast %912 : vector<1x256xi1> to vector<2x256xi1>
      %914 = vector.broadcast %cst_330 : f32 to vector<2x256xf32>
      %915 = arith.select %913, %911, %914 : vector<2x256xi1>, vector<2x256xf32>
      %916 = arith.addf %893, %915 : vector<2x256xf32>
      %c223_i32 = arith.constant 223 : i32
      %917 = tpu.dynamic_rotate %17 by %c223_i32 dim 1 : vector<2x256xf32>, i32 -> vector<2x256xf32>
      %c223_i32_331 = arith.constant 223 : i32
      %918 = tpu.dynamic_rotate %18 by %c223_i32_331 dim 1 : vector<2x256xf32>, i32 -> vector<2x256xf32>
      %c-2_i32_332 = arith.constant -2 : i32
      %919 = vector.broadcast %c-2_i32_332 : i32 to vector<1x256xi32>
      %920 = arith.cmpi sge, %19, %919 : vector<1x256xi32>
      %c14_i32_333 = arith.constant 14 : i32
      %921 = vector.broadcast %c14_i32_333 : i32 to vector<1x256xi32>
      %922 = arith.cmpi slt, %19, %921 : vector<1x256xi32>
      %923 = arith.andi %920, %922 : vector<1x256xi1>
      %c-1_i32_334 = arith.constant -1 : i32
      %924 = vector.broadcast %c-1_i32_334 : i32 to vector<1x256xi32>
      %925 = arith.cmpi sge, %20, %924 : vector<1x256xi32>
      %926 = arith.andi %923, %925 : vector<1x256xi1>
      %c15_i32_335 = arith.constant 15 : i32
      %927 = vector.broadcast %c15_i32_335 : i32 to vector<1x256xi32>
      %928 = arith.cmpi slt, %20, %927 : vector<1x256xi32>
      %929 = arith.andi %926, %928 : vector<1x256xi1>
      %cst_336 = arith.constant -0.0276713092 : f32
      %930 = vector.broadcast %cst_336 : f32 to vector<2x256xf32>
      %931 = arith.mulf %930, %917 : vector<2x256xf32>
      %cst_337 = arith.constant 0.0657664463 : f32
      %932 = vector.broadcast %cst_337 : f32 to vector<2x256xf32>
      %933 = arith.mulf %932, %918 : vector<2x256xf32>
      %934 = arith.addf %931, %933 : vector<2x256xf32>
      %cst_338 = arith.constant 0.000000e+00 : f32
      %935 = vector.shape_cast %929 : vector<1x256xi1> to vector<1x256xi1>
      %936 = vector.broadcast %935 : vector<1x256xi1> to vector<2x256xi1>
      %937 = vector.broadcast %cst_338 : f32 to vector<2x256xf32>
      %938 = arith.select %936, %934, %937 : vector<2x256xi1>, vector<2x256xf32>
      %939 = arith.addf %916, %938 : vector<2x256xf32>
      %c222_i32 = arith.constant 222 : i32
      %940 = tpu.dynamic_rotate %17 by %c222_i32 dim 1 : vector<2x256xf32>, i32 -> vector<2x256xf32>
      %c222_i32_339 = arith.constant 222 : i32
      %941 = tpu.dynamic_rotate %18 by %c222_i32_339 dim 1 : vector<2x256xf32>, i32 -> vector<2x256xf32>
      %c-2_i32_340 = arith.constant -2 : i32
      %942 = vector.broadcast %c-2_i32_340 : i32 to vector<1x256xi32>
      %943 = arith.cmpi sge, %19, %942 : vector<1x256xi32>
      %c14_i32_341 = arith.constant 14 : i32
      %944 = vector.broadcast %c14_i32_341 : i32 to vector<1x256xi32>
      %945 = arith.cmpi slt, %19, %944 : vector<1x256xi32>
      %946 = arith.andi %943, %945 : vector<1x256xi1>
      %c-2_i32_342 = arith.constant -2 : i32
      %947 = vector.broadcast %c-2_i32_342 : i32 to vector<1x256xi32>
      %948 = arith.cmpi sge, %20, %947 : vector<1x256xi32>
      %949 = arith.andi %946, %948 : vector<1x256xi1>
      %c14_i32_343 = arith.constant 14 : i32
      %950 = vector.broadcast %c14_i32_343 : i32 to vector<1x256xi32>
      %951 = arith.cmpi slt, %20, %950 : vector<1x256xi32>
      %952 = arith.andi %949, %951 : vector<1x256xi1>
      %cst_344 = arith.constant -0.0179395769 : f32
      %953 = vector.broadcast %cst_344 : f32 to vector<2x256xf32>
      %954 = arith.mulf %953, %940 : vector<2x256xf32>
      %cst_345 = arith.constant 0.0657326579 : f32
      %955 = vector.broadcast %cst_345 : f32 to vector<2x256xf32>
      %956 = arith.mulf %955, %941 : vector<2x256xf32>
      %957 = arith.addf %954, %956 : vector<2x256xf32>
      %cst_346 = arith.constant 0.000000e+00 : f32
      %958 = vector.shape_cast %952 : vector<1x256xi1> to vector<1x256xi1>
      %959 = vector.broadcast %958 : vector<1x256xi1> to vector<2x256xi1>
      %960 = vector.broadcast %cst_346 : f32 to vector<2x256xf32>
      %961 = arith.select %959, %957, %960 : vector<2x256xi1>, vector<2x256xf32>
      %962 = arith.addf %939, %961 : vector<2x256xf32>
      %c221_i32 = arith.constant 221 : i32
      %963 = tpu.dynamic_rotate %17 by %c221_i32 dim 1 : vector<2x256xf32>, i32 -> vector<2x256xf32>
      %c221_i32_347 = arith.constant 221 : i32
      %964 = tpu.dynamic_rotate %18 by %c221_i32_347 dim 1 : vector<2x256xf32>, i32 -> vector<2x256xf32>
      %c-2_i32_348 = arith.constant -2 : i32
      %965 = vector.broadcast %c-2_i32_348 : i32 to vector<1x256xi32>
      %966 = arith.cmpi sge, %19, %965 : vector<1x256xi32>
      %c14_i32_349 = arith.constant 14 : i32
      %967 = vector.broadcast %c14_i32_349 : i32 to vector<1x256xi32>
      %968 = arith.cmpi slt, %19, %967 : vector<1x256xi32>
      %969 = arith.andi %966, %968 : vector<1x256xi1>
      %c-3_i32_350 = arith.constant -3 : i32
      %970 = vector.broadcast %c-3_i32_350 : i32 to vector<1x256xi32>
      %971 = arith.cmpi sge, %20, %970 : vector<1x256xi32>
      %972 = arith.andi %969, %971 : vector<1x256xi1>
      %c13_i32_351 = arith.constant 13 : i32
      %973 = vector.broadcast %c13_i32_351 : i32 to vector<1x256xi32>
      %974 = arith.cmpi slt, %20, %973 : vector<1x256xi32>
      %975 = arith.andi %972, %974 : vector<1x256xi1>
      %cst_352 = arith.constant -7.388870e-02 : f32
      %976 = vector.broadcast %cst_352 : f32 to vector<2x256xf32>
      %977 = arith.mulf %976, %963 : vector<2x256xf32>
      %cst_353 = arith.constant 0.0829320401 : f32
      %978 = vector.broadcast %cst_353 : f32 to vector<2x256xf32>
      %979 = arith.mulf %978, %964 : vector<2x256xf32>
      %980 = arith.addf %977, %979 : vector<2x256xf32>
      %cst_354 = arith.constant 0.000000e+00 : f32
      %981 = vector.shape_cast %975 : vector<1x256xi1> to vector<1x256xi1>
      %982 = vector.broadcast %981 : vector<1x256xi1> to vector<2x256xi1>
      %983 = vector.broadcast %cst_354 : f32 to vector<2x256xf32>
      %984 = arith.select %982, %980, %983 : vector<2x256xi1>, vector<2x256xf32>
      %985 = arith.addf %962, %984 : vector<2x256xf32>
      %c211_i32 = arith.constant 211 : i32
      %986 = tpu.dynamic_rotate %17 by %c211_i32 dim 1 : vector<2x256xf32>, i32 -> vector<2x256xf32>
      %c211_i32_355 = arith.constant 211 : i32
      %987 = tpu.dynamic_rotate %18 by %c211_i32_355 dim 1 : vector<2x256xf32>, i32 -> vector<2x256xf32>
      %c-3_i32_356 = arith.constant -3 : i32
      %988 = vector.broadcast %c-3_i32_356 : i32 to vector<1x256xi32>
      %989 = arith.cmpi sge, %19, %988 : vector<1x256xi32>
      %c13_i32_357 = arith.constant 13 : i32
      %990 = vector.broadcast %c13_i32_357 : i32 to vector<1x256xi32>
      %991 = arith.cmpi slt, %19, %990 : vector<1x256xi32>
      %992 = arith.andi %989, %991 : vector<1x256xi1>
      %c3_i32_358 = arith.constant 3 : i32
      %993 = vector.broadcast %c3_i32_358 : i32 to vector<1x256xi32>
      %994 = arith.cmpi sge, %20, %993 : vector<1x256xi32>
      %995 = arith.andi %992, %994 : vector<1x256xi1>
      %c19_i32_359 = arith.constant 19 : i32
      %996 = vector.broadcast %c19_i32_359 : i32 to vector<1x256xi32>
      %997 = arith.cmpi slt, %20, %996 : vector<1x256xi32>
      %998 = arith.andi %995, %997 : vector<1x256xi1>
      %cst_360 = arith.constant 0.095650807 : f32
      %999 = vector.broadcast %cst_360 : f32 to vector<2x256xf32>
      %1000 = arith.mulf %999, %986 : vector<2x256xf32>
      %cst_361 = arith.constant -0.052705165 : f32
      %1001 = vector.broadcast %cst_361 : f32 to vector<2x256xf32>
      %1002 = arith.mulf %1001, %987 : vector<2x256xf32>
      %1003 = arith.addf %1000, %1002 : vector<2x256xf32>
      %cst_362 = arith.constant 0.000000e+00 : f32
      %1004 = vector.shape_cast %998 : vector<1x256xi1> to vector<1x256xi1>
      %1005 = vector.broadcast %1004 : vector<1x256xi1> to vector<2x256xi1>
      %1006 = vector.broadcast %cst_362 : f32 to vector<2x256xf32>
      %1007 = arith.select %1005, %1003, %1006 : vector<2x256xi1>, vector<2x256xf32>
      %1008 = arith.addf %985, %1007 : vector<2x256xf32>
      %c210_i32 = arith.constant 210 : i32
      %1009 = tpu.dynamic_rotate %17 by %c210_i32 dim 1 : vector<2x256xf32>, i32 -> vector<2x256xf32>
      %c210_i32_363 = arith.constant 210 : i32
      %1010 = tpu.dynamic_rotate %18 by %c210_i32_363 dim 1 : vector<2x256xf32>, i32 -> vector<2x256xf32>
      %c-3_i32_364 = arith.constant -3 : i32
      %1011 = vector.broadcast %c-3_i32_364 : i32 to vector<1x256xi32>
      %1012 = arith.cmpi sge, %19, %1011 : vector<1x256xi32>
      %c13_i32_365 = arith.constant 13 : i32
      %1013 = vector.broadcast %c13_i32_365 : i32 to vector<1x256xi32>
      %1014 = arith.cmpi slt, %19, %1013 : vector<1x256xi32>
      %1015 = arith.andi %1012, %1014 : vector<1x256xi1>
      %c2_i32_366 = arith.constant 2 : i32
      %1016 = vector.broadcast %c2_i32_366 : i32 to vector<1x256xi32>
      %1017 = arith.cmpi sge, %20, %1016 : vector<1x256xi32>
      %1018 = arith.andi %1015, %1017 : vector<1x256xi1>
      %c18_i32_367 = arith.constant 18 : i32
      %1019 = vector.broadcast %c18_i32_367 : i32 to vector<1x256xi32>
      %1020 = arith.cmpi slt, %20, %1019 : vector<1x256xi32>
      %1021 = arith.andi %1018, %1020 : vector<1x256xi1>
      %cst_368 = arith.constant 5.770520e-02 : f32
      %1022 = vector.broadcast %cst_368 : f32 to vector<2x256xf32>
      %1023 = arith.mulf %1022, %1009 : vector<2x256xf32>
      %cst_369 = arith.constant -0.0374750756 : f32
      %1024 = vector.broadcast %cst_369 : f32 to vector<2x256xf32>
      %1025 = arith.mulf %1024, %1010 : vector<2x256xf32>
      %1026 = arith.addf %1023, %1025 : vector<2x256xf32>
      %cst_370 = arith.constant 0.000000e+00 : f32
      %1027 = vector.shape_cast %1021 : vector<1x256xi1> to vector<1x256xi1>
      %1028 = vector.broadcast %1027 : vector<1x256xi1> to vector<2x256xi1>
      %1029 = vector.broadcast %cst_370 : f32 to vector<2x256xf32>
      %1030 = arith.select %1028, %1026, %1029 : vector<2x256xi1>, vector<2x256xf32>
      %1031 = arith.addf %1008, %1030 : vector<2x256xf32>
      %c209_i32 = arith.constant 209 : i32
      %1032 = tpu.dynamic_rotate %17 by %c209_i32 dim 1 : vector<2x256xf32>, i32 -> vector<2x256xf32>
      %c209_i32_371 = arith.constant 209 : i32
      %1033 = tpu.dynamic_rotate %18 by %c209_i32_371 dim 1 : vector<2x256xf32>, i32 -> vector<2x256xf32>
      %c-3_i32_372 = arith.constant -3 : i32
      %1034 = vector.broadcast %c-3_i32_372 : i32 to vector<1x256xi32>
      %1035 = arith.cmpi sge, %19, %1034 : vector<1x256xi32>
      %c13_i32_373 = arith.constant 13 : i32
      %1036 = vector.broadcast %c13_i32_373 : i32 to vector<1x256xi32>
      %1037 = arith.cmpi slt, %19, %1036 : vector<1x256xi32>
      %1038 = arith.andi %1035, %1037 : vector<1x256xi1>
      %c1_i32_374 = arith.constant 1 : i32
      %1039 = vector.broadcast %c1_i32_374 : i32 to vector<1x256xi32>
      %1040 = arith.cmpi sge, %20, %1039 : vector<1x256xi32>
      %1041 = arith.andi %1038, %1040 : vector<1x256xi1>
      %c17_i32_375 = arith.constant 17 : i32
      %1042 = vector.broadcast %c17_i32_375 : i32 to vector<1x256xi32>
      %1043 = arith.cmpi slt, %20, %1042 : vector<1x256xi32>
      %1044 = arith.andi %1041, %1043 : vector<1x256xi1>
      %cst_376 = arith.constant 0.0581239723 : f32
      %1045 = vector.broadcast %cst_376 : f32 to vector<2x256xf32>
      %1046 = arith.mulf %1045, %1032 : vector<2x256xf32>
      %cst_377 = arith.constant -0.0876302123 : f32
      %1047 = vector.broadcast %cst_377 : f32 to vector<2x256xf32>
      %1048 = arith.mulf %1047, %1033 : vector<2x256xf32>
      %1049 = arith.addf %1046, %1048 : vector<2x256xf32>
      %cst_378 = arith.constant 0.000000e+00 : f32
      %1050 = vector.shape_cast %1044 : vector<1x256xi1> to vector<1x256xi1>
      %1051 = vector.broadcast %1050 : vector<1x256xi1> to vector<2x256xi1>
      %1052 = vector.broadcast %cst_378 : f32 to vector<2x256xf32>
      %1053 = arith.select %1051, %1049, %1052 : vector<2x256xi1>, vector<2x256xf32>
      %1054 = arith.addf %1031, %1053 : vector<2x256xf32>
      %c208_i32 = arith.constant 208 : i32
      %1055 = tpu.dynamic_rotate %17 by %c208_i32 dim 1 : vector<2x256xf32>, i32 -> vector<2x256xf32>
      %c208_i32_379 = arith.constant 208 : i32
      %1056 = tpu.dynamic_rotate %18 by %c208_i32_379 dim 1 : vector<2x256xf32>, i32 -> vector<2x256xf32>
      %c-3_i32_380 = arith.constant -3 : i32
      %1057 = vector.broadcast %c-3_i32_380 : i32 to vector<1x256xi32>
      %1058 = arith.cmpi sge, %19, %1057 : vector<1x256xi32>
      %c13_i32_381 = arith.constant 13 : i32
      %1059 = vector.broadcast %c13_i32_381 : i32 to vector<1x256xi32>
      %1060 = arith.cmpi slt, %19, %1059 : vector<1x256xi32>
      %1061 = arith.andi %1058, %1060 : vector<1x256xi1>
      %c0_i32_382 = arith.constant 0 : i32
      %1062 = vector.broadcast %c0_i32_382 : i32 to vector<1x256xi32>
      %1063 = arith.cmpi sge, %20, %1062 : vector<1x256xi32>
      %1064 = arith.andi %1061, %1063 : vector<1x256xi1>
      %c16_i32_383 = arith.constant 16 : i32
      %1065 = vector.broadcast %c16_i32_383 : i32 to vector<1x256xi32>
      %1066 = arith.cmpi slt, %20, %1065 : vector<1x256xi32>
      %1067 = arith.andi %1064, %1066 : vector<1x256xi1>
      %cst_384 = arith.constant 0.0660369098 : f32
      %1068 = vector.broadcast %cst_384 : f32 to vector<2x256xf32>
      %1069 = arith.mulf %1068, %1055 : vector<2x256xf32>
      %cst_385 = arith.constant -0.0493035764 : f32
      %1070 = vector.broadcast %cst_385 : f32 to vector<2x256xf32>
      %1071 = arith.mulf %1070, %1056 : vector<2x256xf32>
      %1072 = arith.addf %1069, %1071 : vector<2x256xf32>
      %cst_386 = arith.constant 0.000000e+00 : f32
      %1073 = vector.shape_cast %1067 : vector<1x256xi1> to vector<1x256xi1>
      %1074 = vector.broadcast %1073 : vector<1x256xi1> to vector<2x256xi1>
      %1075 = vector.broadcast %cst_386 : f32 to vector<2x256xf32>
      %1076 = arith.select %1074, %1072, %1075 : vector<2x256xi1>, vector<2x256xf32>
      %1077 = arith.addf %1054, %1076 : vector<2x256xf32>
      %c207_i32 = arith.constant 207 : i32
      %1078 = tpu.dynamic_rotate %17 by %c207_i32 dim 1 : vector<2x256xf32>, i32 -> vector<2x256xf32>
      %c207_i32_387 = arith.constant 207 : i32
      %1079 = tpu.dynamic_rotate %18 by %c207_i32_387 dim 1 : vector<2x256xf32>, i32 -> vector<2x256xf32>
      %c-3_i32_388 = arith.constant -3 : i32
      %1080 = vector.broadcast %c-3_i32_388 : i32 to vector<1x256xi32>
      %1081 = arith.cmpi sge, %19, %1080 : vector<1x256xi32>
      %c13_i32_389 = arith.constant 13 : i32
      %1082 = vector.broadcast %c13_i32_389 : i32 to vector<1x256xi32>
      %1083 = arith.cmpi slt, %19, %1082 : vector<1x256xi32>
      %1084 = arith.andi %1081, %1083 : vector<1x256xi1>
      %c-1_i32_390 = arith.constant -1 : i32
      %1085 = vector.broadcast %c-1_i32_390 : i32 to vector<1x256xi32>
      %1086 = arith.cmpi sge, %20, %1085 : vector<1x256xi32>
      %1087 = arith.andi %1084, %1086 : vector<1x256xi1>
      %c15_i32_391 = arith.constant 15 : i32
      %1088 = vector.broadcast %c15_i32_391 : i32 to vector<1x256xi32>
      %1089 = arith.cmpi slt, %20, %1088 : vector<1x256xi32>
      %1090 = arith.andi %1087, %1089 : vector<1x256xi1>
      %cst_392 = arith.constant 0.0799762681 : f32
      %1091 = vector.broadcast %cst_392 : f32 to vector<2x256xf32>
      %1092 = arith.mulf %1091, %1078 : vector<2x256xf32>
      %cst_393 = arith.constant 0.0219987519 : f32
      %1093 = vector.broadcast %cst_393 : f32 to vector<2x256xf32>
      %1094 = arith.mulf %1093, %1079 : vector<2x256xf32>
      %1095 = arith.addf %1092, %1094 : vector<2x256xf32>
      %cst_394 = arith.constant 0.000000e+00 : f32
      %1096 = vector.shape_cast %1090 : vector<1x256xi1> to vector<1x256xi1>
      %1097 = vector.broadcast %1096 : vector<1x256xi1> to vector<2x256xi1>
      %1098 = vector.broadcast %cst_394 : f32 to vector<2x256xf32>
      %1099 = arith.select %1097, %1095, %1098 : vector<2x256xi1>, vector<2x256xf32>
      %1100 = arith.addf %1077, %1099 : vector<2x256xf32>
      %c206_i32 = arith.constant 206 : i32
      %1101 = tpu.dynamic_rotate %17 by %c206_i32 dim 1 : vector<2x256xf32>, i32 -> vector<2x256xf32>
      %c206_i32_395 = arith.constant 206 : i32
      %1102 = tpu.dynamic_rotate %18 by %c206_i32_395 dim 1 : vector<2x256xf32>, i32 -> vector<2x256xf32>
      %c-3_i32_396 = arith.constant -3 : i32
      %1103 = vector.broadcast %c-3_i32_396 : i32 to vector<1x256xi32>
      %1104 = arith.cmpi sge, %19, %1103 : vector<1x256xi32>
      %c13_i32_397 = arith.constant 13 : i32
      %1105 = vector.broadcast %c13_i32_397 : i32 to vector<1x256xi32>
      %1106 = arith.cmpi slt, %19, %1105 : vector<1x256xi32>
      %1107 = arith.andi %1104, %1106 : vector<1x256xi1>
      %c-2_i32_398 = arith.constant -2 : i32
      %1108 = vector.broadcast %c-2_i32_398 : i32 to vector<1x256xi32>
      %1109 = arith.cmpi sge, %20, %1108 : vector<1x256xi32>
      %1110 = arith.andi %1107, %1109 : vector<1x256xi1>
      %c14_i32_399 = arith.constant 14 : i32
      %1111 = vector.broadcast %c14_i32_399 : i32 to vector<1x256xi32>
      %1112 = arith.cmpi slt, %20, %1111 : vector<1x256xi32>
      %1113 = arith.andi %1110, %1112 : vector<1x256xi1>
      %cst_400 = arith.constant -0.0255967211 : f32
      %1114 = vector.broadcast %cst_400 : f32 to vector<2x256xf32>
      %1115 = arith.mulf %1114, %1101 : vector<2x256xf32>
      %cst_401 = arith.constant -0.00635061506 : f32
      %1116 = vector.broadcast %cst_401 : f32 to vector<2x256xf32>
      %1117 = arith.mulf %1116, %1102 : vector<2x256xf32>
      %1118 = arith.addf %1115, %1117 : vector<2x256xf32>
      %cst_402 = arith.constant 0.000000e+00 : f32
      %1119 = vector.shape_cast %1113 : vector<1x256xi1> to vector<1x256xi1>
      %1120 = vector.broadcast %1119 : vector<1x256xi1> to vector<2x256xi1>
      %1121 = vector.broadcast %cst_402 : f32 to vector<2x256xf32>
      %1122 = arith.select %1120, %1118, %1121 : vector<2x256xi1>, vector<2x256xf32>
      %1123 = arith.addf %1100, %1122 : vector<2x256xf32>
      %c205_i32 = arith.constant 205 : i32
      %1124 = tpu.dynamic_rotate %17 by %c205_i32 dim 1 : vector<2x256xf32>, i32 -> vector<2x256xf32>
      %c205_i32_403 = arith.constant 205 : i32
      %1125 = tpu.dynamic_rotate %18 by %c205_i32_403 dim 1 : vector<2x256xf32>, i32 -> vector<2x256xf32>
      %c-3_i32_404 = arith.constant -3 : i32
      %1126 = vector.broadcast %c-3_i32_404 : i32 to vector<1x256xi32>
      %1127 = arith.cmpi sge, %19, %1126 : vector<1x256xi32>
      %c13_i32_405 = arith.constant 13 : i32
      %1128 = vector.broadcast %c13_i32_405 : i32 to vector<1x256xi32>
      %1129 = arith.cmpi slt, %19, %1128 : vector<1x256xi32>
      %1130 = arith.andi %1127, %1129 : vector<1x256xi1>
      %c-3_i32_406 = arith.constant -3 : i32
      %1131 = vector.broadcast %c-3_i32_406 : i32 to vector<1x256xi32>
      %1132 = arith.cmpi sge, %20, %1131 : vector<1x256xi32>
      %1133 = arith.andi %1130, %1132 : vector<1x256xi1>
      %c13_i32_407 = arith.constant 13 : i32
      %1134 = vector.broadcast %c13_i32_407 : i32 to vector<1x256xi32>
      %1135 = arith.cmpi slt, %20, %1134 : vector<1x256xi32>
      %1136 = arith.andi %1133, %1135 : vector<1x256xi1>
      %cst_408 = arith.constant -0.0437055603 : f32
      %1137 = vector.broadcast %cst_408 : f32 to vector<2x256xf32>
      %1138 = arith.mulf %1137, %1124 : vector<2x256xf32>
      %cst_409 = arith.constant -0.0867039933 : f32
      %1139 = vector.broadcast %cst_409 : f32 to vector<2x256xf32>
      %1140 = arith.mulf %1139, %1125 : vector<2x256xf32>
      %1141 = arith.addf %1138, %1140 : vector<2x256xf32>
      %cst_410 = arith.constant 0.000000e+00 : f32
      %1142 = vector.shape_cast %1136 : vector<1x256xi1> to vector<1x256xi1>
      %1143 = vector.broadcast %1142 : vector<1x256xi1> to vector<2x256xi1>
      %1144 = vector.broadcast %cst_410 : f32 to vector<2x256xf32>
      %1145 = arith.select %1143, %1141, %1144 : vector<2x256xi1>, vector<2x256xf32>
      %1146 = arith.addf %1123, %1145 : vector<2x256xf32>
      %1147 = arith.negf %1146 : vector<2x256xf32>
      %1148 = math.exp %1147 : vector<2x256xf32>
      %cst_411 = arith.constant 1.000000e+00 : f32
      %1149 = vector.broadcast %cst_411 : f32 to vector<2x256xf32>
      %1150 = arith.addf %1149, %1148 : vector<2x256xf32>
      %1151 = arith.divf %1149, %1150 : vector<2x256xf32>
      %c0_412 = arith.constant 0 : index
      %c0_413 = arith.constant 0 : index
      %c0_414 = arith.constant 0 : index
      %1152 = vector.load %arg4[%c0_412, %c0_413, %c0_414] : memref<2x1x256xf32, #tpu.memory_space<vmem>>, vector<2x1x256xf32>
      %1153 = vector.shape_cast %1152 : vector<2x1x256xf32> to vector<2x256xf32>
      %1154 = vector.shape_cast %1151 : vector<2x256xf32> to vector<2x1x256xf32>
      tpu.vector_store %arg4[%c0_412, %c0_413, %c0_414], %1154 {strides = array<i32>} : memref<2x1x256xf32, #tpu.memory_space<vmem>>, vector<2x1x256xf32>,
    } else {
    }
    return
  }
  func.func @transform_0(%arg0: i32, %arg1: i32) -> (i32, i32, i32) {
    %c0_i32 = arith.constant 0 : i32
    %c0_i32_0 = arith.constant 0 : i32
    return %arg0, %arg1, %c0_i32 : i32, i32, i32
  }
  func.func @transform_1(%arg0: i32, %arg1: i32) -> (i32, i32) {
    %c0_i32 = arith.constant 0 : i32
    %c0_i32_0 = arith.constant 0 : i32
    %c0_i32_1 = arith.constant 0 : i32
    return %c0_i32, %c0_i32_0 : i32, i32
  }
  func.func @transform_2(%arg0: i32, %arg1: i32) -> (i32, i32, i32) {
    %c0_i32 = arith.constant 0 : i32
    %c0_i32_0 = arith.constant 0 : i32
    %c0_i32_1 = arith.constant 0 : i32
    return %arg0, %c0_i32, %c0_i32_0 : i32, i32, i32
  }
}

</mosaic_0001>

<llo_original>
// kernel: tpu_custom_call.1
$region0: #{tpu_custom_call.1}
  #allocation0 [shape = 'u32[]', space=smem, size = 0x4, offset = 0x4, fixed_abs, tag = 'smem constant byte address 0x4 - core index']
  #allocation1 [shape = 'u32[144,128]{1,0:T(1,128)}', space=vmem, size = 0x12000, scoped, tag = 'internal scratch']
  #allocation2 [shape = 'f32[2,256]{1,0:T(2,128)}', space=vmem, size = 0x800, scoped, tag = 'scratch operand']
  #allocation3 [shape = 'f32[2,256]{1,0:T(2,128)}', space=vmem, size = 0x800, scoped, tag = 'scratch operand']
  %s0 = inlined_call_operand.hbm [shape: f32[2,32,256], index: 0, kind: input, shape index: {}]
  %s1 = inlined_call_operand.hbm [shape: s32[2,256], index: 1, kind: input, shape index: {}]
  %s2 = inlined_call_operand.hbm [shape: f32[2,1,256], index: 2, kind: output, shape index: {}]
  %s3 = sld [smem:[#allocation0]]
  $region34: #{tpu_custom_call.1} parent=0
    _
  %s5 = ssub.s32 1, %s3
  %s6 = scalar_select 0, %s5, %s3
  $region1: #{tpu_custom_call.1} parent=0
    #allocation4 [shape = 'u8[65536]{0}', space=vmem, size = 0x10000, scoped, tag = 'input window, operand 0, single buffered']
    #allocation5 [shape = 's32[1]{0}', space=sflag, size = 0x4, scoped, tag = 'scoped memory for tpu_custom_call.1']
    #allocation6 [shape = 's32[1]{0}', space=sflag, size = 0x4, scoped, tag = 'scoped memory for tpu_custom_call.1']
    #allocation7 [shape = 'u8[2048]{0}', space=vmem, size = 0x800, scoped, tag = 'input window, operand 1, single buffered']
    #allocation8 [shape = 's32[1]{0}', space=sflag, size = 0x4, scoped, tag = 'scoped memory for tpu_custom_call.1']
    #allocation9 [shape = 'u8[2048]{0}', space=vmem, size = 0x800, scoped, tag = 'output window, operand 0, single buffered']
    %7 = vsyncpa [#allocation5], 0
    %8 = vsyncpa [#allocation8], 0
    %9 = vsyncpa [#allocation6], 0
    // Predicated region
    $region2: #{tpu_custom_call.1} parent=1 // pred_check
      _
    $region3: #{tpu_custom_call.1} parent=1 // pred_check_branch
      %11 = sbr.rel (0) target = $region5
    $region4: #{tpu_custom_call.1} parent=1 // pred_region
      %s13 = ssub.s32 2048, 2048
      %14 = vsyncadd [#allocation5], %s13
      %s15 = sshll.u32 [#allocation4], 4
      %s16 = int_to_ptr.vmem [resolvable:$true] %s15
      %21 = dma.hbm_to_vmem [thread:$0]  %s0, 2048, %s16, [#allocation5], 256, 256, 16
    $region5: #{tpu_custom_call.1} parent=1 // pred_fallthru
      _
    // Predicated region
    $region6: #{tpu_custom_call.1} parent=1 // pred_check
      _
    $region7: #{tpu_custom_call.1} parent=1 // pred_check_branch
      %23 = sbr.rel (0) target = $region9
    $region8: #{tpu_custom_call.1} parent=1 // pred_region
      %s25 = ssub.s32 64, 64
      %26 = vsyncadd [#allocation8], %s25
      %s28 = sshll.u32 [#allocation7], 4
      %s29 = int_to_ptr.vmem [resolvable:$true] %s28
      %31 = dma.hbm_to_vmem [thread:$0]  %s1, 64, %s29, [#allocation8]
    $region9: #{tpu_custom_call.1} parent=1 // pred_fallthru
      _
    // Predicated region
    $region10: #{tpu_custom_call.1} parent=1 // pred_check
      _
    $region11: #{tpu_custom_call.1} parent=1 // pred_check_branch
      %33 = sbr.rel (0) target = $region13
    $region12: #{tpu_custom_call.1} parent=1 // pred_region
      %34 = dma.done [#allocation5], 2048
    $region13: #{tpu_custom_call.1} parent=1 // pred_fallthru
      _
    // Predicated region
    $region14: #{tpu_custom_call.1} parent=1 // pred_check
      _
    $region15: #{tpu_custom_call.1} parent=1 // pred_check_branch
      %36 = sbr.rel (0) target = $region17
    $region16: #{tpu_custom_call.1} parent=1 // pred_region
      %37 = dma.done [#allocation8], 64
    $region17: #{tpu_custom_call.1} parent=1 // pred_fallthru
      _
    %v38 = vld [vmem:[#allocation4] sm:$0xff]
    %v39 = vld [vmem:[#allocation4 + $0x8] sm:$0xff]
    %v40 = vld [vmem:[#allocation4 + $0x10] sm:$0xff]
    %v41 = vld [vmem:[#allocation4 + $0x18] sm:$0xff]
    %v42 = vld [vmem:[#allocation4 + $0x20] sm:$0xff]
    %v43 = vld [vmem:[#allocation4 + $0x28] sm:$0xff]
    %v44 = vld [vmem:[#allocation4 + $0x30] sm:$0xff]
    %v45 = vld [vmem:[#allocation4 + $0x38] sm:$0xff]
    %v46 = vld [vmem:[#allocation4 + $0x40] sm:$0xff]
    %v47 = vld [vmem:[#allocation4 + $0x48] sm:$0xff]
    %v48 = vld [vmem:[#allocation4 + $0x50] sm:$0xff]
    %v49 = vld [vmem:[#allocation4 + $0x58] sm:$0xff]
    %v50 = vld [vmem:[#allocation4 + $0x60] sm:$0xff]
    %v51 = vld [vmem:[#allocation4 + $0x68] sm:$0xff]
    %v52 = vld [vmem:[#allocation4 + $0x70] sm:$0xff]
    %v53 = vld [vmem:[#allocation4 + $0x78] sm:$0xff]
    %v54 = vadd.f32 %v38, %v40
    %v55 = vadd.f32 %v54, %v42
    %v56 = vadd.f32 %v55, %v44
    %v57 = vrot.slane %v56, 4
    %v58 = vadd.f32 %v56, %v57
    %v59 = vrot.slane %v58, 2
    %v60 = vadd.f32 %v58, %v59
    %v61 = vrot.slane %v60, 1
    %v62 = vadd.f32 %v60, %v61
    %v63 = vadd.f32 %v39, %v41
    %v64 = vadd.f32 %v63, %v43
    %v65 = vadd.f32 %v64, %v45
    %v66 = vrot.slane %v65, 4
    %v67 = vadd.f32 %v65, %v66
    %v68 = vrot.slane %v67, 2
    %v69 = vadd.f32 %v67, %v68
    %v70 = vrot.slane %v69, 1
    %v71 = vadd.f32 %v69, %v70
    %v72 = vadd.f32 %v46, %v48
    %v73 = vadd.f32 %v72, %v50
    %v74 = vadd.f32 %v73, %v52
    %v75 = vrot.slane %v74, 4
    %v76 = vadd.f32 %v74, %v75
    %v77 = vrot.slane %v76, 2
    %v78 = vadd.f32 %v76, %v77
    %v79 = vrot.slane %v78, 1
    %v80 = vadd.f32 %v78, %v79
    %v81 = vadd.f32 %v47, %v49
    %v82 = vadd.f32 %v81, %v51
    %v83 = vadd.f32 %v82, %v53
    %v84 = vrot.slane %v83, 4
    %v85 = vadd.f32 %v83, %v84
    %v86 = vrot.slane %v85, 2
    %v87 = vadd.f32 %v85, %v86
    %v88 = vrot.slane %v87, 1
    %v89 = vadd.f32 %v87, %v88
    %v90 = vmax.f32 %v38, %v40
    %v91 = vmax.f32 %v90, %v42
    %v92 = vmax.f32 %v91, %v44
    %v93 = vrot.slane %v92, 4
    %v94 = vmax.f32 %v92, %v93
    %v95 = vrot.slane %v94, 2
    %v96 = vmax.f32 %v94, %v95
    %v97 = vrot.slane %v96, 1
    %v98 = vmax.f32 %v96, %v97
    %v99 = vmax.f32 %v39, %v41
    %v100 = vmax.f32 %v99, %v43
    %v101 = vmax.f32 %v100, %v45
    %v102 = vrot.slane %v101, 4
    %v103 = vmax.f32 %v101, %v102
    %v104 = vrot.slane %v103, 2
    %v105 = vmax.f32 %v103, %v104
    %v106 = vrot.slane %v105, 1
    %v107 = vmax.f32 %v105, %v106
    %v108 = vmax.f32 %v46, %v48
    %v109 = vmax.f32 %v108, %v50
    %v110 = vmax.f32 %v109, %v52
    %v111 = vrot.slane %v110, 4
    %v112 = vmax.f32 %v110, %v111
    %v113 = vrot.slane %v112, 2
    %v114 = vmax.f32 %v112, %v113
    %v115 = vrot.slane %v114, 1
    %v116 = vmax.f32 %v114, %v115
    %v117 = vmax.f32 %v47, %v49
    %v118 = vmax.f32 %v117, %v51
    %v119 = vmax.f32 %v118, %v53
    %v120 = vrot.slane %v119, 4
    %v121 = vmax.f32 %v119, %v120
    %v122 = vrot.slane %v121, 2
    %v123 = vmax.f32 %v121, %v122
    %v124 = vrot.slane %v123, 1
    %v125 = vmax.f32 %v123, %v124
    %p126 = scmp.eq.s32.totalorder 0, 0
    // Predicated region
    $region18: #{tpu_custom_call.1} parent=1 // pred_check
      %p127 = pneg %p126
    $region19: #{tpu_custom_call.1} parent=1 // pred_check_branch
      %129 = sbr.rel (%p127) target = $region21
    $region20: #{tpu_custom_call.1} parent=1 // pred_region
      %130 = vst [vmem:[#allocation2] sm:$0xf] 0.0
      %131 = vst [vmem:[#allocation3] sm:$0xf] -inf
    $region21: #{tpu_custom_call.1} parent=1 // pred_fallthru
      _
    %v132 = vld [vmem:[#allocation2] sm:$0xf]
    %v137 = vcombine.low %v62, %v71
    %v139 = vunpack.c.l.s4 1983009808
    %v140 = vunpack.c.0.s8 %v139
    %v141 = vlaneseq
    %v142 = vshrl.u32 %v141, 7
    %v143 = vsub.s32 %v140, %v142
    %v144 = vrot.slane %v137, %v143
    %v145 = vcombine.low %v80, %v89
    %v147 = vunpack.c.l.s4 1983009808
    %v148 = vunpack.c.0.s8 %v147
    %v149 = vlaneseq
    %v150 = vshrl.u32 %v149, 7
    %v151 = vsub.s32 %v148, %v150
    %v152 = vrot.slane %v145, %v151
    %vm153 = vcmask 1044484
    %v154 = vsel %vm153, %v144, %v144
    %vm155 = vcmask 1046534
    %v156 = vsel %vm155, %v144, %v154
    %v157 = vrot.slane %v152, 7
    %vm158 = vcmask 1041409
    %v159 = vsel %vm158, %v157, %v156
    %vm160 = vcmask 1043459
    %v161 = vsel %vm160, %v157, %v159
    %vm162 = vcmask 1045509
    %v163 = vsel %vm162, %v157, %v161
    %vm164 = vcmask 1047559
    %v165 = vsel %vm164, %v157, %v163
    %v167 = vadd.f32 %v132, %v165
    %168 = vst [vmem:[#allocation2] sm:$0xf] %v167
    %v169 = vld [vmem:[#allocation3] sm:$0xf]
    %v174 = vcombine.low %v98, %v107
    %v176 = vunpack.c.l.s4 1983009808
    %v177 = vunpack.c.0.s8 %v176
    %v178 = vlaneseq
    %v179 = vshrl.u32 %v178, 7
    %v180 = vsub.s32 %v177, %v179
    %v181 = vrot.slane %v174, %v180
    %v182 = vcombine.low %v116, %v125
    %v184 = vunpack.c.l.s4 1983009808
    %v185 = vunpack.c.0.s8 %v184
    %v186 = vlaneseq
    %v187 = vshrl.u32 %v186, 7
    %v188 = vsub.s32 %v185, %v187
    %v189 = vrot.slane %v182, %v188
    %v190 = vsel %vm153, %v181, %v181
    %v191 = vsel %vm155, %v181, %v190
    %v192 = vrot.slane %v189, 7
    %v193 = vsel %vm158, %v192, %v191
    %v194 = vsel %vm160, %v192, %v193
    %v195 = vsel %vm162, %v192, %v194
    %v196 = vsel %vm164, %v192, %v195
    %v198 = vmax.f32 %v169, %v196
    %199 = vst [vmem:[#allocation3] sm:$0xf] %v198
    // Predicated region
    $region22: #{tpu_custom_call.1} parent=1 // pred_check
      %p200 = pneg %p126
    $region23: #{tpu_custom_call.1} parent=1 // pred_check_branch
      %202 = sbr.rel (%p200) target = $region25
    $region24: #{tpu_custom_call.1} parent=1 // pred_region
      %v203 = vld [vmem:[#allocation2] sm:$0xf]
      %v204 = vmul.f32 %v203, 0.03125
      %v205 = vld [vmem:[#allocation3] sm:$0xf]
      %v206 = vld [vmem:[#allocation7] ss:$2 sm:$0x3]
      %s207 = scalar_lea.vmem [#allocation7], 1
      %v208 = vld [vmem:[%s207] ss:$2 sm:$0x3]
      %v211 = vunpack.c.l.s4 1983009808
      %v212 = vunpack.c.0.s8 %v211
      %v213 = vlaneseq
      %v214 = vshrl.u32 %v213, 7
      %v215 = vsub.s32 %v212, %v214
      %v216 = vrot.slane %v204, %v215
      %v217 = vcombine.high %v216, %v216
      %220 = vrot.lane.b32.xlu0 %v216, 51
      %v221 = vpop.permute.xlu0 %220
      %222 = vrot.lane.b32.xlu0 %v217, 51
      %v223 = vpop.permute.xlu0 %222
      %v224 = vlaneseq
      %v225 = vand.u32 %v224, 127
      %vm226 = vcmp.lt.s32.totalorder %v225, 51
      %v227 = vsel %vm226, %v221, %v223
      %v228 = vsel %vm226, %v223, %v221
      %v231 = vunpack.c.l.s4 1983009808
      %v232 = vunpack.c.0.s8 %v231
      %v233 = vlaneseq
      %v234 = vshrl.u32 %v233, 7
      %v235 = vsub.s32 %v232, %v234
      %v236 = vrot.slane %v205, %v235
      %v237 = vcombine.high %v236, %v236
      %240 = vrot.lane.b32.xlu0 %v236, 51
      %v241 = vpop.permute.xlu0 %240
      %242 = vrot.lane.b32.xlu0 %v237, 51
      %v243 = vpop.permute.xlu0 %242
      %v244 = vsel %vm226, %v241, %v243
      %v245 = vsel %vm226, %v243, %v241
      %vm246 = vcmp.ge.s32.totalorder %v206, 3
      %vm247 = vcmp.lt.s32.totalorder %v206, 19
      %vm248 = vmand %vm246, %vm247
      %vm249 = vcmp.ge.s32.totalorder %v208, 3
      %vm250 = vmand %vm248, %vm249
      %vm251 = vcmp.lt.s32.totalorder %v208, 19
      %vm252 = vmand %vm250, %vm251
      %v253 = vmul.f32 %v228, 0.081307076
      %v254 = vmul.f32 %v227, 0.081307076
      %v255 = vmul.f32 %v245, 0.012624281
      %v256 = vmul.f32 %v244, 0.012624281
      %v257 = vadd.f32 %v253, %v255
      %v258 = vadd.f32 %v254, %v256
      %v259 = vsel %vm252, 1, 0
      %v260 = vlaneseq
      %v261 = vshrl.u32 %v260, 7
      %v262 = vsub.s32 0, %v261
      %v263 = vrot.slane %v259, %v262
      %v264 = vlaneseq
      %v265 = vshrl.u32 %v264, 7
      %v266 = vsub.s32 1, %v265
      %v267 = vrot.slane %v259, %v266
      %vm268 = vcmp.eq.s32.totalorder %v263, 1
      %vm269 = vcmp.eq.s32.totalorder %v267, 1
      %v270 = vsel %vm268, %v257, 0.0
      %v271 = vsel %vm269, %v258, 0.0
      %v272 = vadd.f32 %v270, 0.0
      %v273 = vadd.f32 %v271, 0.0
      %274 = vrot.lane.b32.xlu0 %v216, 50
      %v275 = vpop.permute.xlu0 %274
      %276 = vrot.lane.b32.xlu0 %v217, 50
      %v277 = vpop.permute.xlu0 %276
      %vm278 = vcmp.lt.s32.totalorder %v225, 50
      %v279 = vsel %vm278, %v275, %v277
      %v280 = vsel %vm278, %v277, %v275
      %281 = vrot.lane.b32.xlu0 %v236, 50
      %v282 = vpop.permute.xlu0 %281
      %283 = vrot.lane.b32.xlu0 %v237, 50
      %v284 = vpop.permute.xlu0 %283
      %v285 = vsel %vm278, %v282, %v284
      %v286 = vsel %vm278, %v284, %v282
      %vm287 = vcmp.ge.s32.totalorder %v208, 2
      %vm288 = vmand %vm248, %vm287
      %vm289 = vcmp.lt.s32.totalorder %v208, 18
      %vm290 = vmand %vm288, %vm289
      %v291 = vmul.f32 %v280, 0.08329573
      %v292 = vmul.f32 %v279, 0.08329573
      %v293 = vmul.f32 %v286, -0.03139432
      %v294 = vmul.f32 %v285, -0.03139432
      %v295 = vadd.f32 %v291, %v293
      %v296 = vadd.f32 %v292, %v294
      %v297 = vsel %vm290, 1, 0
      %v298 = vlaneseq
      %v299 = vshrl.u32 %v298, 7
      %v300 = vsub.s32 0, %v299
      %v301 = vrot.slane %v297, %v300
      %v302 = vlaneseq
      %v303 = vshrl.u32 %v302, 7
      %v304 = vsub.s32 1, %v303
      %v305 = vrot.slane %v297, %v304
      %vm306 = vcmp.eq.s32.totalorder %v301, 1
      %vm307 = vcmp.eq.s32.totalorder %v305, 1
      %v308 = vsel %vm306, %v295, 0.0
      %v309 = vsel %vm307, %v296, 0.0
      %v310 = vadd.f32 %v272, %v308
      %v311 = vadd.f32 %v273, %v309
      %312 = vrot.lane.b32.xlu0 %v216, 49
      %v313 = vpop.permute.xlu0 %312
      %314 = vrot.lane.b32.xlu0 %v217, 49
      %v315 = vpop.permute.xlu0 %314
      %vm316 = vcmp.lt.s32.totalorder %v225, 49
      %v317 = vsel %vm316, %v313, %v315
      %v318 = vsel %vm316, %v315, %v313
      %319 = vrot.lane.b32.xlu0 %v236, 49
      %v320 = vpop.permute.xlu0 %319
      %321 = vrot.lane.b32.xlu0 %v237, 49
      %v322 = vpop.permute.xlu0 %321
      %v323 = vsel %vm316, %v320, %v322
      %v324 = vsel %vm316, %v322, %v320
      %vm325 = vcmp.ge.s32.totalorder %v208, 1
      %vm326 = vmand %vm248, %vm325
      %vm327 = vcmp.lt.s32.totalorder %v208, 17
      %vm328 = vmand %vm326, %vm327
      %v329 = vmul.f32 %v318, -0.032113224
      %v330 = vmul.f32 %v317, -0.032113224
      %v331 = vmul.f32 %v324, 0.016828272
      %v332 = vmul.f32 %v323, 0.016828272
      %v333 = vadd.f32 %v329, %v331
      %v334 = vadd.f32 %v330, %v332
      %v335 = vsel %vm328, 1, 0
      %v336 = vlaneseq
      %v337 = vshrl.u32 %v336, 7
      %v338 = vsub.s32 0, %v337
      %v339 = vrot.slane %v335, %v338
      %v340 = vlaneseq
      %v341 = vshrl.u32 %v340, 7
      %v342 = vsub.s32 1, %v341
      %v343 = vrot.slane %v335, %v342
      %vm344 = vcmp.eq.s32.totalorder %v339, 1
      %vm345 = vcmp.eq.s32.totalorder %v343, 1
      %v346 = vsel %vm344, %v333, 0.0
      %v347 = vsel %vm345, %v334, 0.0
      %v348 = vadd.f32 %v310, %v346
      %v349 = vadd.f32 %v311, %v347
      %350 = vrot.lane.b32.xlu0 %v216, 48
      %v351 = vpop.permute.xlu0 %350
      %352 = vrot.lane.b32.xlu0 %v217, 48
      %v353 = vpop.permute.xlu0 %352
      %vm354 = vcmp.lt.s32.totalorder %v225, 48
      %v355 = vsel %vm354, %v351, %v353
      %v356 = vsel %vm354, %v353, %v351
      %357 = vrot.lane.b32.xlu0 %v236, 48
      %v358 = vpop.permute.xlu0 %357
      %359 = vrot.lane.b32.xlu0 %v237, 48
      %v360 = vpop.permute.xlu0 %359
      %v361 = vsel %vm354, %v358, %v360
      %v362 = vsel %vm354, %v360, %v358
      %vm363 = vcmp.ge.s32.totalorder %v208, 0
      %vm364 = vmand %vm248, %vm363
      %vm365 = vcmp.lt.s32.totalorder %v208, 16
      %vm366 = vmand %vm364, %vm365
      %v367 = vmul.f32 %v356, -0.056550138
      %v368 = vmul.f32 %v355, -0.056550138
      %v369 = vmul.f32 %v362, -0.048008464
      %v370 = vmul.f32 %v361, -0.048008464
      %v371 = vadd.f32 %v367, %v369
      %v372 = vadd.f32 %v368, %v370
      %v373 = vsel %vm366, 1, 0
      %v374 = vlaneseq
      %v375 = vshrl.u32 %v374, 7
      %v376 = vsub.s32 0, %v375
      %v377 = vrot.slane %v373, %v376
      %v378 = vlaneseq
      %v379 = vshrl.u32 %v378, 7
      %v380 = vsub.s32 1, %v379
      %v381 = vrot.slane %v373, %v380
      %vm382 = vcmp.eq.s32.totalorder %v377, 1
      %vm383 = vcmp.eq.s32.totalorder %v381, 1
      %v384 = vsel %vm382, %v371, 0.0
      %v385 = vsel %vm383, %v372, 0.0
      %v386 = vadd.f32 %v348, %v384
      %v387 = vadd.f32 %v349, %v385
      %388 = vrot.lane.b32.xlu0 %v216, 47
      %v389 = vpop.permute.xlu0 %388
      %390 = vrot.lane.b32.xlu0 %v217, 47
      %v391 = vpop.permute.xlu0 %390
      %vm392 = vcmp.lt.s32.totalorder %v225, 47
      %v393 = vsel %vm392, %v389, %v391
      %v394 = vsel %vm392, %v391, %v389
      %395 = vrot.lane.b32.xlu0 %v236, 47
      %v396 = vpop.permute.xlu0 %395
      %397 = vrot.lane.b32.xlu0 %v237, 47
      %v398 = vpop.permute.xlu0 %397
      %v399 = vsel %vm392, %v396, %v398
      %v400 = vsel %vm392, %v398, %v396
      %vm401 = vcmp.ge.s32.totalorder %v208, 4294967295
      %vm402 = vmand %vm248, %vm401
      %vm403 = vcmp.lt.s32.totalorder %v208, 15
      %vm404 = vmand %vm402, %vm403
      %v405 = vmul.f32 %v394, 0.029976621
      %v406 = vmul.f32 %v393, 0.029976621
      %v407 = vmul.f32 %v400, 0.06469101
      %v408 = vmul.f32 %v399, 0.06469101
      %v409 = vadd.f32 %v405, %v407
      %v410 = vadd.f32 %v406, %v408
      %v411 = vsel %vm404, 1, 0
      %v412 = vlaneseq
      %v413 = vshrl.u32 %v412, 7
      %v414 = vsub.s32 0, %v413
      %v415 = vrot.slane %v411, %v414
      %v416 = vlaneseq
      %v417 = vshrl.u32 %v416, 7
      %v418 = vsub.s32 1, %v417
      %v419 = vrot.slane %v411, %v418
      %vm420 = vcmp.eq.s32.totalorder %v415, 1
      %vm421 = vcmp.eq.s32.totalorder %v419, 1
      %v422 = vsel %vm420, %v409, 0.0
      %v423 = vsel %vm421, %v410, 0.0
      %v424 = vadd.f32 %v386, %v422
      %v425 = vadd.f32 %v387, %v423
      %426 = vrot.lane.b32.xlu0 %v216, 46
      %v427 = vpop.permute.xlu0 %426
      %428 = vrot.lane.b32.xlu0 %v217, 46
      %v429 = vpop.permute.xlu0 %428
      %vm430 = vcmp.lt.s32.totalorder %v225, 46
      %v431 = vsel %vm430, %v427, %v429
      %v432 = vsel %vm430, %v429, %v427
      %433 = vrot.lane.b32.xlu0 %v236, 46
      %v434 = vpop.permute.xlu0 %433
      %435 = vrot.lane.b32.xlu0 %v237, 46
      %v436 = vpop.permute.xlu0 %435
      %v437 = vsel %vm430, %v434, %v436
      %v438 = vsel %vm430, %v436, %v434
      %vm439 = vcmp.ge.s32.totalorder %v208, 4294967294
      %vm440 = vmand %vm248, %vm439
      %vm441 = vcmp.lt.s32.totalorder %v208, 14
      %vm442 = vmand %vm440, %vm441
      %v443 = vmul.f32 %v432, 0.0015223442
      %v444 = vmul.f32 %v431, 0.0015223442
      %v445 = vmul.f32 %v438, -0.046414856
      %v446 = vmul.f32 %v437, -0.046414856
      %v447 = vadd.f32 %v443, %v445
      %v448 = vadd.f32 %v444, %v446
      %v449 = vsel %vm442, 1, 0
      %v450 = vlaneseq
      %v451 = vshrl.u32 %v450, 7
      %v452 = vsub.s32 0, %v451
      %v453 = vrot.slane %v449, %v452
      %v454 = vlaneseq
      %v455 = vshrl.u32 %v454, 7
      %v456 = vsub.s32 1, %v455
      %v457 = vrot.slane %v449, %v456
      %vm458 = vcmp.eq.s32.totalorder %v453, 1
      %vm459 = vcmp.eq.s32.totalorder %v457, 1
      %v460 = vsel %vm458, %v447, 0.0
      %v461 = vsel %vm459, %v448, 0.0
      %v462 = vadd.f32 %v424, %v460
      %v463 = vadd.f32 %v425, %v461
      %464 = vrot.lane.b32.xlu0 %v216, 45
      %v465 = vpop.permute.xlu0 %464
      %466 = vrot.lane.b32.xlu0 %v217, 45
      %v467 = vpop.permute.xlu0 %466
      %vm468 = vcmp.lt.s32.totalorder %v225, 45
      %v469 = vsel %vm468, %v465, %v467
      %v470 = vsel %vm468, %v467, %v465
      %471 = vrot.lane.b32.xlu0 %v236, 45
      %v472 = vpop.permute.xlu0 %471
      %473 = vrot.lane.b32.xlu0 %v237, 45
      %v474 = vpop.permute.xlu0 %473
      %v475 = vsel %vm468, %v472, %v474
      %v476 = vsel %vm468, %v474, %v472
      %vm477 = vcmp.ge.s32.totalorder %v208, 4294967293
      %vm478 = vmand %vm248, %vm477
      %vm479 = vcmp.lt.s32.totalorder %v208, 13
      %vm480 = vmand %vm478, %vm479
      %v481 = vmul.f32 %v470, 0.0438819
      %v482 = vmul.f32 %v469, 0.0438819
      %v483 = vmul.f32 %v476, 0.051168587
      %v484 = vmul.f32 %v475, 0.051168587
      %v485 = vadd.f32 %v481, %v483
      %v486 = vadd.f32 %v482, %v484
      %v487 = vsel %vm480, 1, 0
      %v488 = vlaneseq
      %v489 = vshrl.u32 %v488, 7
      %v490 = vsub.s32 0, %v489
      %v491 = vrot.slane %v487, %v490
      %v492 = vlaneseq
      %v493 = vshrl.u32 %v492, 7
      %v494 = vsub.s32 1, %v493
      %v495 = vrot.slane %v487, %v494
      %vm496 = vcmp.eq.s32.totalorder %v491, 1
      %vm497 = vcmp.eq.s32.totalorder %v495, 1
      %v498 = vsel %vm496, %v485, 0.0
      %v499 = vsel %vm497, %v486, 0.0
      %v500 = vadd.f32 %v462, %v498
      %v501 = vadd.f32 %v463, %v499
      %502 = vrot.lane.b32.xlu0 %v216, 35
      %v503 = vpop.permute.xlu0 %502
      %504 = vrot.lane.b32.xlu0 %v217, 35
      %v505 = vpop.permute.xlu0 %504
      %vm506 = vcmp.lt.s32.totalorder %v225, 35
      %v507 = vsel %vm506, %v503, %v505
      %v508 = vsel %vm506, %v505, %v503
      %509 = vrot.lane.b32.xlu0 %v236, 35
      %v510 = vpop.permute.xlu0 %509
      %511 = vrot.lane.b32.xlu0 %v237, 35
      %v512 = vpop.permute.xlu0 %511
      %v513 = vsel %vm506, %v510, %v512
      %v514 = vsel %vm506, %v512, %v510
      %vm515 = vcmp.ge.s32.totalorder %v206, 2
      %vm516 = vcmp.lt.s32.totalorder %v206, 18
      %vm517 = vmand %vm515, %vm516
      %vm518 = vmand %vm517, %vm249
      %vm519 = vmand %vm518, %vm251
      %v520 = vmul.f32 %v508, -0.055428863
      %v521 = vmul.f32 %v507, -0.055428863
      %v522 = vmul.f32 %v514, -0.05555663
      %v523 = vmul.f32 %v513, -0.05555663
      %v524 = vadd.f32 %v520, %v522
      %v525 = vadd.f32 %v521, %v523
      %v526 = vsel %vm519, 1, 0
      %v527 = vlaneseq
      %v528 = vshrl.u32 %v527, 7
      %v529 = vsub.s32 0, %v528
      %v530 = vrot.slane %v526, %v529
      %v531 = vlaneseq
      %v532 = vshrl.u32 %v531, 7
      %v533 = vsub.s32 1, %v532
      %v534 = vrot.slane %v526, %v533
      %vm535 = vcmp.eq.s32.totalorder %v530, 1
      %vm536 = vcmp.eq.s32.totalorder %v534, 1
      %v537 = vsel %vm535, %v524, 0.0
      %v538 = vsel %vm536, %v525, 0.0
      %v539 = vadd.f32 %v500, %v537
      %v540 = vadd.f32 %v501, %v538
      %541 = vrot.lane.b32.xlu0 %v216, 34
      %v542 = vpop.permute.xlu0 %541
      %543 = vrot.lane.b32.xlu0 %v217, 34
      %v544 = vpop.permute.xlu0 %543
      %vm545 = vcmp.lt.s32.totalorder %v225, 34
      %v546 = vsel %vm545, %v542, %v544
      %v547 = vsel %vm545, %v544, %v542
      %548 = vrot.lane.b32.xlu0 %v236, 34
      %v549 = vpop.permute.xlu0 %548
      %550 = vrot.lane.b32.xlu0 %v237, 34
      %v551 = vpop.permute.xlu0 %550
      %v552 = vsel %vm545, %v549, %v551
      %v553 = vsel %vm545, %v551, %v549
      %vm554 = vmand %vm517, %vm287
      %vm555 = vmand %vm554, %vm289
      %v556 = vmul.f32 %v547, 0.018388549
      %v557 = vmul.f32 %v546, 0.018388549
      %v558 = vmul.f32 %v553, -0.021131033
      %v559 = vmul.f32 %v552, -0.021131033
      %v560 = vadd.f32 %v556, %v558
      %v561 = vadd.f32 %v557, %v559
      %v562 = vsel %vm555, 1, 0
      %v563 = vlaneseq
      %v564 = vshrl.u32 %v563, 7
      %v565 = vsub.s32 0, %v564
      %v566 = vrot.slane %v562, %v565
      %v567 = vlaneseq
      %v568 = vshrl.u32 %v567, 7
      %v569 = vsub.s32 1, %v568
      %v570 = vrot.slane %v562, %v569
      %vm571 = vcmp.eq.s32.totalorder %v566, 1
      %vm572 = vcmp.eq.s32.totalorder %v570, 1
      %v573 = vsel %vm571, %v560, 0.0
      %v574 = vsel %vm572, %v561, 0.0
      %v575 = vadd.f32 %v539, %v573
      %v576 = vadd.f32 %v540, %v574
      %577 = vrot.lane.b32.xlu0 %v216, 33
      %v578 = vpop.permute.xlu0 %577
      %579 = vrot.lane.b32.xlu0 %v217, 33
      %v580 = vpop.permute.xlu0 %579
      %vm581 = vcmp.lt.s32.totalorder %v225, 33
      %v582 = vsel %vm581, %v578, %v580
      %v583 = vsel %vm581, %v580, %v578
      %584 = vrot.lane.b32.xlu0 %v236, 33
      %v585 = vpop.permute.xlu0 %584
      %586 = vrot.lane.b32.xlu0 %v237, 33
      %v587 = vpop.permute.xlu0 %586
      %v588 = vsel %vm581, %v585, %v587
      %v589 = vsel %vm581, %v587, %v585
      %vm590 = vmand %vm517, %vm325
      %vm591 = vmand %vm590, %vm327
      %v592 = vmul.f32 %v583, -0.08723709
      %v593 = vmul.f32 %v582, -0.08723709
      %v594 = vmul.f32 %v589, 0.09172616
      %v595 = vmul.f32 %v588, 0.09172616
      %v596 = vadd.f32 %v592, %v594
      %v597 = vadd.f32 %v593, %v595
      %v598 = vsel %vm591, 1, 0
      %v599 = vlaneseq
      %v600 = vshrl.u32 %v599, 7
      %v601 = vsub.s32 0, %v600
      %v602 = vrot.slane %v598, %v601
      %v603 = vlaneseq
      %v604 = vshrl.u32 %v603, 7
      %v605 = vsub.s32 1, %v604
      %v606 = vrot.slane %v598, %v605
      %vm607 = vcmp.eq.s32.totalorder %v602, 1
      %vm608 = vcmp.eq.s32.totalorder %v606, 1
      %v609 = vsel %vm607, %v596, 0.0
      %v610 = vsel %vm608, %v597, 0.0
      %v611 = vadd.f32 %v575, %v609
      %v612 = vadd.f32 %v576, %v610
      %613 = vrot.lane.b32.xlu0 %v216, 32
      %v614 = vpop.permute.xlu0 %613
      %615 = vrot.lane.b32.xlu0 %v217, 32
      %v616 = vpop.permute.xlu0 %615
      %vm617 = vcmp.lt.s32.totalorder %v225, 32
      %v618 = vsel %vm617, %v614, %v616
      %v619 = vsel %vm617, %v616, %v614
      %620 = vrot.lane.b32.xlu0 %v236, 32
      %v621 = vpop.permute.xlu0 %620
      %622 = vrot.lane.b32.xlu0 %v237, 32
      %v623 = vpop.permute.xlu0 %622
      %v624 = vsel %vm617, %v621, %v623
      %v625 = vsel %vm617, %v623, %v621
      %vm626 = vmand %vm517, %vm363
      %vm627 = vmand %vm626, %vm365
      %v628 = vmul.f32 %v619, -0.064594336
      %v629 = vmul.f32 %v618, -0.064594336
      %v630 = vmul.f32 %v625, 0.009644307
      %v631 = vmul.f32 %v624, 0.009644307
      %v632 = vadd.f32 %v628, %v630
      %v633 = vadd.f32 %v629, %v631
      %v634 = vsel %vm627, 1, 0
      %v635 = vlaneseq
      %v636 = vshrl.u32 %v635, 7
      %v637 = vsub.s32 0, %v636
      %v638 = vrot.slane %v634, %v637
      %v639 = vlaneseq
      %v640 = vshrl.u32 %v639, 7
      %v641 = vsub.s32 1, %v640
      %v642 = vrot.slane %v634, %v641
      %vm643 = vcmp.eq.s32.totalorder %v638, 1
      %vm644 = vcmp.eq.s32.totalorder %v642, 1
      %v645 = vsel %vm643, %v632, 0.0
      %v646 = vsel %vm644, %v633, 0.0
      %v647 = vadd.f32 %v611, %v645
      %v648 = vadd.f32 %v612, %v646
      %649 = vrot.lane.b32.xlu0 %v216, 31
      %v650 = vpop.permute.xlu0 %649
      %651 = vrot.lane.b32.xlu0 %v217, 31
      %v652 = vpop.permute.xlu0 %651
      %vm653 = vcmp.lt.s32.totalorder %v225, 31
      %v654 = vsel %vm653, %v650, %v652
      %v655 = vsel %vm653, %v652, %v650
      %656 = vrot.lane.b32.xlu0 %v236, 31
      %v657 = vpop.permute.xlu0 %656
      %658 = vrot.lane.b32.xlu0 %v237, 31
      %v659 = vpop.permute.xlu0 %658
      %v660 = vsel %vm653, %v657, %v659
      %v661 = vsel %vm653, %v659, %v657
      %vm662 = vmand %vm517, %vm401
      %vm663 = vmand %vm662, %vm403
      %v664 = vmul.f32 %v655, 0.093199134
      %v665 = vmul.f32 %v654, 0.093199134
      %v666 = vmul.f32 %v661, -0.07981698
      %v667 = vmul.f32 %v660, -0.07981698
      %v668 = vadd.f32 %v664, %v666
      %v669 = vadd.f32 %v665, %v667
      %v670 = vsel %vm663, 1, 0
      %v671 = vlaneseq
      %v672 = vshrl.u32 %v671, 7
      %v673 = vsub.s32 0, %v672
      %v674 = vrot.slane %v670, %v673
      %v675 = vlaneseq
      %v676 = vshrl.u32 %v675, 7
      %v677 = vsub.s32 1, %v676
      %v678 = vrot.slane %v670, %v677
      %vm679 = vcmp.eq.s32.totalorder %v674, 1
      %vm680 = vcmp.eq.s32.totalorder %v678, 1
      %v681 = vsel %vm679, %v668, 0.0
      %v682 = vsel %vm680, %v669, 0.0
      %v683 = vadd.f32 %v647, %v681
      %v684 = vadd.f32 %v648, %v682
      %685 = vrot.lane.b32.xlu0 %v216, 30
      %v686 = vpop.permute.xlu0 %685
      %687 = vrot.lane.b32.xlu0 %v217, 30
      %v688 = vpop.permute.xlu0 %687
      %vm689 = vcmp.lt.s32.totalorder %v225, 30
      %v690 = vsel %vm689, %v686, %v688
      %v691 = vsel %vm689, %v688, %v686
      %692 = vrot.lane.b32.xlu0 %v236, 30
      %v693 = vpop.permute.xlu0 %692
      %694 = vrot.lane.b32.xlu0 %v237, 30
      %v695 = vpop.permute.xlu0 %694
      %v696 = vsel %vm689, %v693, %v695
      %v697 = vsel %vm689, %v695, %v693
      %vm698 = vmand %vm517, %vm439
      %vm699 = vmand %vm698, %vm441
      %v700 = vmul.f32 %v691, -0.06695044
      %v701 = vmul.f32 %v690, -0.06695044
      %v702 = vmul.f32 %v697, 0.0014567637
      %v703 = vmul.f32 %v696, 0.0014567637
      %v704 = vadd.f32 %v700, %v702
      %v705 = vadd.f32 %v701, %v703
      %v706 = vsel %vm699, 1, 0
      %v707 = vlaneseq
      %v708 = vshrl.u32 %v707, 7
      %v709 = vsub.s32 0, %v708
      %v710 = vrot.slane %v706, %v709
      %v711 = vlaneseq
      %v712 = vshrl.u32 %v711, 7
      %v713 = vsub.s32 1, %v712
      %v714 = vrot.slane %v706, %v713
      %vm715 = vcmp.eq.s32.totalorder %v710, 1
      %vm716 = vcmp.eq.s32.totalorder %v714, 1
      %v717 = vsel %vm715, %v704, 0.0
      %v718 = vsel %vm716, %v705, 0.0
      %v719 = vadd.f32 %v683, %v717
      %v720 = vadd.f32 %v684, %v718
      %721 = vrot.lane.b32.xlu0 %v216, 29
      %v722 = vpop.permute.xlu0 %721
      %723 = vrot.lane.b32.xlu0 %v217, 29
      %v724 = vpop.permute.xlu0 %723
      %vm725 = vcmp.lt.s32.totalorder %v225, 29
      %v726 = vsel %vm725, %v722, %v724
      %v727 = vsel %vm725, %v724, %v722
      %728 = vrot.lane.b32.xlu0 %v236, 29
      %v729 = vpop.permute.xlu0 %728
      %730 = vrot.lane.b32.xlu0 %v237, 29
      %v731 = vpop.permute.xlu0 %730
      %v732 = vsel %vm725, %v729, %v731
      %v733 = vsel %vm725, %v731, %v729
      %vm734 = vmand %vm517, %vm477
      %vm735 = vmand %vm734, %vm479
      %v736 = vmul.f32 %v727, -0.03371529
      %v737 = vmul.f32 %v726, -0.03371529
      %v738 = vmul.f32 %v733, 0.025764778
      %v739 = vmul.f32 %v732, 0.025764778
      %v740 = vadd.f32 %v736, %v738
      %v741 = vadd.f32 %v737, %v739
      %v742 = vsel %vm735, 1, 0
      %v743 = vlaneseq
      %v744 = vshrl.u32 %v743, 7
      %v745 = vsub.s32 0, %v744
      %v746 = vrot.slane %v742, %v745
      %v747 = vlaneseq
      %v748 = vshrl.u32 %v747, 7
      %v749 = vsub.s32 1, %v748
      %v750 = vrot.slane %v742, %v749
      %vm751 = vcmp.eq.s32.totalorder %v746, 1
      %vm752 = vcmp.eq.s32.totalorder %v750, 1
      %v753 = vsel %vm751, %v740, 0.0
      %v754 = vsel %vm752, %v741, 0.0
      %v755 = vadd.f32 %v719, %v753
      %v756 = vadd.f32 %v720, %v754
      %757 = vrot.lane.b32.xlu0 %v216, 19
      %v758 = vpop.permute.xlu0 %757
      %759 = vrot.lane.b32.xlu0 %v217, 19
      %v760 = vpop.permute.xlu0 %759
      %vm761 = vcmp.lt.s32.totalorder %v225, 19
      %v762 = vsel %vm761, %v758, %v760
      %v763 = vsel %vm761, %v760, %v758
      %764 = vrot.lane.b32.xlu0 %v236, 19
      %v765 = vpop.permute.xlu0 %764
      %766 = vrot.lane.b32.xlu0 %v237, 19
      %v767 = vpop.permute.xlu0 %766
      %v768 = vsel %vm761, %v765, %v767
      %v769 = vsel %vm761, %v767, %v765
      %vm770 = vcmp.ge.s32.totalorder %v206, 1
      %vm771 = vcmp.lt.s32.totalorder %v206, 17
      %vm772 = vmand %vm770, %vm771
      %vm773 = vmand %vm772, %vm249
      %vm774 = vmand %vm773, %vm251
      %v775 = vmul.f32 %v763, 0.05910043
      %v776 = vmul.f32 %v762, 0.05910043
      %v777 = vmul.f32 %v769, 0.0016965431
      %v778 = vmul.f32 %v768, 0.0016965431
      %v779 = vadd.f32 %v775, %v777
      %v780 = vadd.f32 %v776, %v778
      %v781 = vsel %vm774, 1, 0
      %v782 = vlaneseq
      %v783 = vshrl.u32 %v782, 7
      %v784 = vsub.s32 0, %v783
      %v785 = vrot.slane %v781, %v784
      %v786 = vlaneseq
      %v787 = vshrl.u32 %v786, 7
      %v788 = vsub.s32 1, %v787
      %v789 = vrot.slane %v781, %v788
      %vm790 = vcmp.eq.s32.totalorder %v785, 1
      %vm791 = vcmp.eq.s32.totalorder %v789, 1
      %v792 = vsel %vm790, %v779, 0.0
      %v793 = vsel %vm791, %v780, 0.0
      %v794 = vadd.f32 %v755, %v792
      %v795 = vadd.f32 %v756, %v793
      %796 = vrot.lane.b32.xlu0 %v216, 18
      %v797 = vpop.permute.xlu0 %796
      %798 = vrot.lane.b32.xlu0 %v217, 18
      %v799 = vpop.permute.xlu0 %798
      %vm800 = vcmp.lt.s32.totalorder %v225, 18
      %v801 = vsel %vm800, %v797, %v799
      %v802 = vsel %vm800, %v799, %v797
      %803 = vrot.lane.b32.xlu0 %v236, 18
      %v804 = vpop.permute.xlu0 %803
      %805 = vrot.lane.b32.xlu0 %v237, 18
      %v806 = vpop.permute.xlu0 %805
      %v807 = vsel %vm800, %v804, %v806
      %v808 = vsel %vm800, %v806, %v804
      %vm809 = vmand %vm772, %vm287
      %vm810 = vmand %vm809, %vm289
      %v811 = vmul.f32 %v802, 0.07775487
      %v812 = vmul.f32 %v801, 0.07775487
      %v813 = vmul.f32 %v808, -0.0381547
      %v814 = vmul.f32 %v807, -0.0381547
      %v815 = vadd.f32 %v811, %v813
      %v816 = vadd.f32 %v812, %v814
      %v817 = vsel %vm810, 1, 0
      %v818 = vlaneseq
      %v819 = vshrl.u32 %v818, 7
      %v820 = vsub.s32 0, %v819
      %v821 = vrot.slane %v817, %v820
      %v822 = vlaneseq
      %v823 = vshrl.u32 %v822, 7
      %v824 = vsub.s32 1, %v823
      %v825 = vrot.slane %v817, %v824
      %vm826 = vcmp.eq.s32.totalorder %v821, 1
      %vm827 = vcmp.eq.s32.totalorder %v825, 1
      %v828 = vsel %vm826, %v815, 0.0
      %v829 = vsel %vm827, %v816, 0.0
      %v830 = vadd.f32 %v794, %v828
      %v831 = vadd.f32 %v795, %v829
      %832 = vrot.lane.b32.xlu0 %v216, 17
      %v833 = vpop.permute.xlu0 %832
      %834 = vrot.lane.b32.xlu0 %v217, 17
      %v835 = vpop.permute.xlu0 %834
      %vm836 = vcmp.lt.s32.totalorder %v225, 17
      %v837 = vsel %vm836, %v833, %v835
      %v838 = vsel %vm836, %v835, %v833
      %839 = vrot.lane.b32.xlu0 %v236, 17
      %v840 = vpop.permute.xlu0 %839
      %841 = vrot.lane.b32.xlu0 %v237, 17
      %v842 = vpop.permute.xlu0 %841
      %v843 = vsel %vm836, %v840, %v842
      %v844 = vsel %vm836, %v842, %v840
      %vm845 = vmand %vm772, %vm325
      %vm846 = vmand %vm845, %vm327
      %v847 = vmul.f32 %v838, -0.00866886
      %v848 = vmul.f32 %v837, -0.00866886
      %v849 = vmul.f32 %v844, -0.08361966
      %v850 = vmul.f32 %v843, -0.08361966
      %v851 = vadd.f32 %v847, %v849
      %v852 = vadd.f32 %v848, %v850
      %v853 = vsel %vm846, 1, 0
      %v854 = vlaneseq
      %v855 = vshrl.u32 %v854, 7
      %v856 = vsub.s32 0, %v855
      %v857 = vrot.slane %v853, %v856
      %v858 = vlaneseq
      %v859 = vshrl.u32 %v858, 7
      %v860 = vsub.s32 1, %v859
      %v861 = vrot.slane %v853, %v860
      %vm862 = vcmp.eq.s32.totalorder %v857, 1
      %vm863 = vcmp.eq.s32.totalorder %v861, 1
      %v864 = vsel %vm862, %v851, 0.0
      %v865 = vsel %vm863, %v852, 0.0
      %v866 = vadd.f32 %v830, %v864
      %v867 = vadd.f32 %v831, %v865
      %868 = vrot.lane.b32.xlu0 %v216, 16
      %v869 = vpop.permute.xlu0 %868
      %870 = vrot.lane.b32.xlu0 %v217, 16
      %v871 = vpop.permute.xlu0 %870
      %vm872 = vcmp.lt.s32.totalorder %v225, 16
      %v873 = vsel %vm872, %v869, %v871
      %v874 = vsel %vm872, %v871, %v869
      %875 = vrot.lane.b32.xlu0 %v236, 16
      %v876 = vpop.permute.xlu0 %875
      %877 = vrot.lane.b32.xlu0 %v237, 16
      %v878 = vpop.permute.xlu0 %877
      %v879 = vsel %vm872, %v876, %v878
      %v880 = vsel %vm872, %v878, %v876
      %vm881 = vmand %vm772, %vm363
      %vm882 = vmand %vm881, %vm365
      %v883 = vmul.f32 %v874, -0.06397321
      %v884 = vmul.f32 %v873, -0.06397321
      %v885 = vmul.f32 %v880, 0.05763579
      %v886 = vmul.f32 %v879, 0.05763579
      %v887 = vadd.f32 %v883, %v885
      %v888 = vadd.f32 %v884, %v886
      %v889 = vsel %vm882, 1, 0
      %v890 = vlaneseq
      %v891 = vshrl.u32 %v890, 7
      %v892 = vsub.s32 0, %v891
      %v893 = vrot.slane %v889, %v892
      %v894 = vlaneseq
      %v895 = vshrl.u32 %v894, 7
      %v896 = vsub.s32 1, %v895
      %v897 = vrot.slane %v889, %v896
      %vm898 = vcmp.eq.s32.totalorder %v893, 1
      %vm899 = vcmp.eq.s32.totalorder %v897, 1
      %v900 = vsel %vm898, %v887, 0.0
      %v901 = vsel %vm899, %v888, 0.0
      %v902 = vadd.f32 %v866, %v900
      %v903 = vadd.f32 %v867, %v901
      %904 = vrot.lane.b32.xlu0 %v216, 15
      %v905 = vpop.permute.xlu0 %904
      %906 = vrot.lane.b32.xlu0 %v217, 15
      %v907 = vpop.permute.xlu0 %906
      %vm908 = vcmp.lt.s32.totalorder %v225, 15
      %v909 = vsel %vm908, %v905, %v907
      %v910 = vsel %vm908, %v907, %v905
      %911 = vrot.lane.b32.xlu0 %v236, 15
      %v912 = vpop.permute.xlu0 %911
      %913 = vrot.lane.b32.xlu0 %v237, 15
      %v914 = vpop.permute.xlu0 %913
      %v915 = vsel %vm908, %v912, %v914
      %v916 = vsel %vm908, %v914, %v912
      %vm917 = vmand %vm772, %vm401
      %vm918 = vmand %vm917, %vm403
      %v919 = vmul.f32 %v910, 0.08396057
      %v920 = vmul.f32 %v909, 0.08396057
      %v921 = vmul.f32 %v916, 0.019622104
      %v922 = vmul.f32 %v915, 0.019622104
      %v923 = vadd.f32 %v919, %v921
      %v924 = vadd.f32 %v920, %v922
      %v925 = vsel %vm918, 1, 0
      %v926 = vlaneseq
      %v927 = vshrl.u32 %v926, 7
      %v928 = vsub.s32 0, %v927
      %v929 = vrot.slane %v925, %v928
      %v930 = vlaneseq
      %v931 = vshrl.u32 %v930, 7
      %v932 = vsub.s32 1, %v931
      %v933 = vrot.slane %v925, %v932
      %vm934 = vcmp.eq.s32.totalorder %v929, 1
      %vm935 = vcmp.eq.s32.totalorder %v933, 1
      %v936 = vsel %vm934, %v923, 0.0
      %v937 = vsel %vm935, %v924, 0.0
      %v938 = vadd.f32 %v902, %v936
      %v939 = vadd.f32 %v903, %v937
      %940 = vrot.lane.b32.xlu0 %v216, 14
      %v941 = vpop.permute.xlu0 %940
      %942 = vrot.lane.b32.xlu0 %v217, 14
      %v943 = vpop.permute.xlu0 %942
      %vm944 = vcmp.lt.s32.totalorder %v225, 14
      %v945 = vsel %vm944, %v941, %v943
      %v946 = vsel %vm944, %v943, %v941
      %947 = vrot.lane.b32.xlu0 %v236, 14
      %v948 = vpop.permute.xlu0 %947
      %949 = vrot.lane.b32.xlu0 %v237, 14
      %v950 = vpop.permute.xlu0 %949
      %v951 = vsel %vm944, %v948, %v950
      %v952 = vsel %vm944, %v950, %v948
      %vm953 = vmand %vm772, %vm439
      %vm954 = vmand %vm953, %vm441
      %v955 = vmul.f32 %v946, 0.010457211
      %v956 = vmul.f32 %v945, 0.010457211
      %v957 = vmul.f32 %v952, 0.01622478
      %v958 = vmul.f32 %v951, 0.01622478
      %v959 = vadd.f32 %v955, %v957
      %v960 = vadd.f32 %v956, %v958
      %v961 = vsel %vm954, 1, 0
      %v962 = vlaneseq
      %v963 = vshrl.u32 %v962, 7
      %v964 = vsub.s32 0, %v963
      %v965 = vrot.slane %v961, %v964
      %v966 = vlaneseq
      %v967 = vshrl.u32 %v966, 7
      %v968 = vsub.s32 1, %v967
      %v969 = vrot.slane %v961, %v968
      %vm970 = vcmp.eq.s32.totalorder %v965, 1
      %vm971 = vcmp.eq.s32.totalorder %v969, 1
      %v972 = vsel %vm970, %v959, 0.0
      %v973 = vsel %vm971, %v960, 0.0
      %v974 = vadd.f32 %v938, %v972
      %v975 = vadd.f32 %v939, %v973
      %976 = vrot.lane.b32.xlu0 %v216, 13
      %v977 = vpop.permute.xlu0 %976
      %978 = vrot.lane.b32.xlu0 %v217, 13
      %v979 = vpop.permute.xlu0 %978
      %vm980 = vcmp.lt.s32.totalorder %v225, 13
      %v981 = vsel %vm980, %v977, %v979
      %v982 = vsel %vm980, %v979, %v977
      %983 = vrot.lane.b32.xlu0 %v236, 13
      %v984 = vpop.permute.xlu0 %983
      %985 = vrot.lane.b32.xlu0 %v237, 13
      %v986 = vpop.permute.xlu0 %985
      %v987 = vsel %vm980, %v984, %v986
      %v988 = vsel %vm980, %v986, %v984
      %vm989 = vmand %vm772, %vm477
      %vm990 = vmand %vm989, %vm479
      %v991 = vmul.f32 %v982, -0.044935644
      %v992 = vmul.f32 %v981, -0.044935644
      %v993 = vmul.f32 %v988, 0.100111604
      %v994 = vmul.f32 %v987, 0.100111604
      %v995 = vadd.f32 %v991, %v993
      %v996 = vadd.f32 %v992, %v994
      %v997 = vsel %vm990, 1, 0
      %v998 = vlaneseq
      %v999 = vshrl.u32 %v998, 7
      %v1000 = vsub.s32 0, %v999
      %v1001 = vrot.slane %v997, %v1000
      %v1002 = vlaneseq
      %v1003 = vshrl.u32 %v1002, 7
      %v1004 = vsub.s32 1, %v1003
      %v1005 = vrot.slane %v997, %v1004
      %vm1006 = vcmp.eq.s32.totalorder %v1001, 1
      %vm1007 = vcmp.eq.s32.totalorder %v1005, 1
      %v1008 = vsel %vm1006, %v995, 0.0
      %v1009 = vsel %vm1007, %v996, 0.0
      %v1010 = vadd.f32 %v974, %v1008
      %v1011 = vadd.f32 %v975, %v1009
      %1012 = vrot.lane.b32.xlu0 %v216, 3
      %v1013 = vpop.permute.xlu0 %1012
      %1014 = vrot.lane.b32.xlu0 %v217, 3
      %v1015 = vpop.permute.xlu0 %1014
      %vm1016 = vcmp.lt.s32.totalorder %v225, 3
      %v1017 = vsel %vm1016, %v1013, %v1015
      %v1018 = vsel %vm1016, %v1015, %v1013
      %1019 = vrot.lane.b32.xlu0 %v236, 3
      %v1020 = vpop.permute.xlu0 %1019
      %1021 = vrot.lane.b32.xlu0 %v237, 3
      %v1022 = vpop.permute.xlu0 %1021
      %v1023 = vsel %vm1016, %v1020, %v1022
      %v1024 = vsel %vm1016, %v1022, %v1020
      %vm1025 = vcmp.ge.s32.totalorder %v206, 0
      %vm1026 = vcmp.lt.s32.totalorder %v206, 16
      %vm1027 = vmand %vm1025, %vm1026
      %vm1028 = vmand %vm1027, %vm249
      %vm1029 = vmand %vm1028, %vm251
      %v1030 = vmul.f32 %v1018, -0.03590218
      %v1031 = vmul.f32 %v1017, -0.03590218
      %v1032 = vmul.f32 %v1024, 0.014760886
      %v1033 = vmul.f32 %v1023, 0.014760886
      %v1034 = vadd.f32 %v1030, %v1032
      %v1035 = vadd.f32 %v1031, %v1033
      %v1036 = vsel %vm1029, 1, 0
      %v1037 = vlaneseq
      %v1038 = vshrl.u32 %v1037, 7
      %v1039 = vsub.s32 0, %v1038
      %v1040 = vrot.slane %v1036, %v1039
      %v1041 = vlaneseq
      %v1042 = vshrl.u32 %v1041, 7
      %v1043 = vsub.s32 1, %v1042
      %v1044 = vrot.slane %v1036, %v1043
      %vm1045 = vcmp.eq.s32.totalorder %v1040, 1
      %vm1046 = vcmp.eq.s32.totalorder %v1044, 1
      %v1047 = vsel %vm1045, %v1034, 0.0
      %v1048 = vsel %vm1046, %v1035, 0.0
      %v1049 = vadd.f32 %v1010, %v1047
      %v1050 = vadd.f32 %v1011, %v1048
      %1051 = vrot.lane.b32.xlu0 %v216, 2
      %v1052 = vpop.permute.xlu0 %1051
      %1053 = vrot.lane.b32.xlu0 %v217, 2
      %v1054 = vpop.permute.xlu0 %1053
      %vm1055 = vcmp.lt.s32.totalorder %v225, 2
      %v1056 = vsel %vm1055, %v1052, %v1054
      %v1057 = vsel %vm1055, %v1054, %v1052
      %1058 = vrot.lane.b32.xlu0 %v236, 2
      %v1059 = vpop.permute.xlu0 %1058
      %1060 = vrot.lane.b32.xlu0 %v237, 2
      %v1061 = vpop.permute.xlu0 %1060
      %v1062 = vsel %vm1055, %v1059, %v1061
      %v1063 = vsel %vm1055, %v1061, %v1059
      %vm1064 = vmand %vm1027, %vm287
      %vm1065 = vmand %vm1064, %vm289
      %v1066 = vmul.f32 %v1057, -0.043371275
      %v1067 = vmul.f32 %v1056, -0.043371275
      %v1068 = vmul.f32 %v1063, 0.035249673
      %v1069 = vmul.f32 %v1062, 0.035249673
      %v1070 = vadd.f32 %v1066, %v1068
      %v1071 = vadd.f32 %v1067, %v1069
      %v1072 = vsel %vm1065, 1, 0
      %v1073 = vlaneseq
      %v1074 = vshrl.u32 %v1073, 7
      %v1075 = vsub.s32 0, %v1074
      %v1076 = vrot.slane %v1072, %v1075
      %v1077 = vlaneseq
      %v1078 = vshrl.u32 %v1077, 7
      %v1079 = vsub.s32 1, %v1078
      %v1080 = vrot.slane %v1072, %v1079
      %vm1081 = vcmp.eq.s32.totalorder %v1076, 1
      %vm1082 = vcmp.eq.s32.totalorder %v1080, 1
      %v1083 = vsel %vm1081, %v1070, 0.0
      %v1084 = vsel %vm1082, %v1071, 0.0
      %v1085 = vadd.f32 %v1049, %v1083
      %v1086 = vadd.f32 %v1050, %v1084
      %1087 = vrot.lane.b32.xlu0 %v216, 1
      %v1088 = vpop.permute.xlu0 %1087
      %1089 = vrot.lane.b32.xlu0 %v217, 1
      %v1090 = vpop.permute.xlu0 %1089
      %vm1091 = vcmp.lt.s32.totalorder %v225, 1
      %v1092 = vsel %vm1091, %v1088, %v1090
      %v1093 = vsel %vm1091, %v1090, %v1088
      %1094 = vrot.lane.b32.xlu0 %v236, 1
      %v1095 = vpop.permute.xlu0 %1094
      %1096 = vrot.lane.b32.xlu0 %v237, 1
      %v1097 = vpop.permute.xlu0 %1096
      %v1098 = vsel %vm1091, %v1095, %v1097
      %v1099 = vsel %vm1091, %v1097, %v1095
      %vm1100 = vmand %vm1027, %vm325
      %vm1101 = vmand %vm1100, %vm327
      %v1102 = vmul.f32 %v1093, 0.021979293
      %v1103 = vmul.f32 %v1092, 0.021979293
      %v1104 = vmul.f32 %v1099, -0.041793298
      %v1105 = vmul.f32 %v1098, -0.041793298
      %v1106 = vadd.f32 %v1102, %v1104
      %v1107 = vadd.f32 %v1103, %v1105
      %v1108 = vsel %vm1101, 1, 0
      %v1109 = vlaneseq
      %v1110 = vshrl.u32 %v1109, 7
      %v1111 = vsub.s32 0, %v1110
      %v1112 = vrot.slane %v1108, %v1111
      %v1113 = vlaneseq
      %v1114 = vshrl.u32 %v1113, 7
      %v1115 = vsub.s32 1, %v1114
      %v1116 = vrot.slane %v1108, %v1115
      %vm1117 = vcmp.eq.s32.totalorder %v1112, 1
      %vm1118 = vcmp.eq.s32.totalorder %v1116, 1
      %v1119 = vsel %vm1117, %v1106, 0.0
      %v1120 = vsel %vm1118, %v1107, 0.0
      %v1121 = vadd.f32 %v1085, %v1119
      %v1122 = vadd.f32 %v1086, %v1120
      %vm1123 = vmand %vm1027, %vm363
      %vm1124 = vmand %vm1123, %vm365
      %v1125 = vmul.f32 %v204, -0.013266985
      %v1126 = vmul.f32 %v205, 0.03531222
      %v1127 = vadd.f32 %v1125, %v1126
      %v1128 = vsel %vm1124, 1, 0
      %v1129 = vlaneseq
      %v1130 = vshrl.u32 %v1129, 7
      %v1131 = vsub.s32 0, %v1130
      %v1132 = vrot.slane %v1128, %v1131
      %v1133 = vlaneseq
      %v1134 = vshrl.u32 %v1133, 7
      %v1135 = vsub.s32 1, %v1134
      %v1136 = vrot.slane %v1128, %v1135
      %vm1137 = vcmp.eq.s32.totalorder %v1132, 1
      %vm1138 = vcmp.eq.s32.totalorder %v1136, 1
      %v1141 = vunpack.c.l.s4 1983009808
      %v1142 = vunpack.c.0.s8 %v1141
      %v1143 = vlaneseq
      %v1144 = vshrl.u32 %v1143, 7
      %v1145 = vsub.s32 %v1142, %v1144
      %v1146 = vrot.slane %v1127, %v1145
      %v1147 = vcombine.high %v1146, %v1146
      %v1150 = vsel %vm1137, %v1146, 0.0
      %v1151 = vsel %vm1138, %v1147, 0.0
      %v1152 = vadd.f32 %v1121, %v1150
      %v1153 = vadd.f32 %v1122, %v1151
      %1154 = vrot.lane.b32.xlu0 %v216, 127
      %v1155 = vpop.permute.xlu0 %1154
      %1156 = vrot.lane.b32.xlu0 %v217, 127
      %v1157 = vpop.permute.xlu0 %1156
      %vm1158 = vcmp.lt.s32.totalorder %v225, 127
      %v1159 = vsel %vm1158, %v1155, %v1157
      %v1160 = vsel %vm1158, %v1157, %v1155
      %1161 = vrot.lane.b32.xlu0 %v236, 127
      %v1162 = vpop.permute.xlu0 %1161
      %1163 = vrot.lane.b32.xlu0 %v237, 127
      %v1164 = vpop.permute.xlu0 %1163
      %v1165 = vsel %vm1158, %v1162, %v1164
      %v1166 = vsel %vm1158, %v1164, %v1162
      %vm1167 = vmand %vm1027, %vm401
      %vm1168 = vmand %vm1167, %vm403
      %v1169 = vmul.f32 %v1159, 0.09133865
      %v1170 = vmul.f32 %v1160, 0.09133865
      %v1171 = vmul.f32 %v1165, 0.088146135
      %v1172 = vmul.f32 %v1166, 0.088146135
      %v1173 = vadd.f32 %v1169, %v1171
      %v1174 = vadd.f32 %v1170, %v1172
      %v1175 = vsel %vm1168, 1, 0
      %v1176 = vlaneseq
      %v1177 = vshrl.u32 %v1176, 7
      %v1178 = vsub.s32 0, %v1177
      %v1179 = vrot.slane %v1175, %v1178
      %v1180 = vlaneseq
      %v1181 = vshrl.u32 %v1180, 7
      %v1182 = vsub.s32 1, %v1181
      %v1183 = vrot.slane %v1175, %v1182
      %vm1184 = vcmp.eq.s32.totalorder %v1179, 1
      %vm1185 = vcmp.eq.s32.totalorder %v1183, 1
      %v1186 = vsel %vm1184, %v1173, 0.0
      %v1187 = vsel %vm1185, %v1174, 0.0
      %v1188 = vadd.f32 %v1152, %v1186
      %v1189 = vadd.f32 %v1153, %v1187
      %1190 = vrot.lane.b32.xlu0 %v216, 126
      %v1191 = vpop.permute.xlu0 %1190
      %1192 = vrot.lane.b32.xlu0 %v217, 126
      %v1193 = vpop.permute.xlu0 %1192
      %vm1194 = vcmp.lt.s32.totalorder %v225, 126
      %v1195 = vsel %vm1194, %v1191, %v1193
      %v1196 = vsel %vm1194, %v1193, %v1191
      %1197 = vrot.lane.b32.xlu0 %v236, 126
      %v1198 = vpop.permute.xlu0 %1197
      %1199 = vrot.lane.b32.xlu0 %v237, 126
      %v1200 = vpop.permute.xlu0 %1199
      %v1201 = vsel %vm1194, %v1198, %v1200
      %v1202 = vsel %vm1194, %v1200, %v1198
      %vm1203 = vmand %vm1027, %vm439
      %vm1204 = vmand %vm1203, %vm441
      %v1205 = vmul.f32 %v1195, -0.05296715
      %v1206 = vmul.f32 %v1196, -0.05296715
      %v1207 = vmul.f32 %v1201, -0.08976973
      %v1208 = vmul.f32 %v1202, -0.08976973
      %v1209 = vadd.f32 %v1205, %v1207
      %v1210 = vadd.f32 %v1206, %v1208
      %v1211 = vsel %vm1204, 1, 0
      %v1212 = vlaneseq
      %v1213 = vshrl.u32 %v1212, 7
      %v1214 = vsub.s32 0, %v1213
      %v1215 = vrot.slane %v1211, %v1214
      %v1216 = vlaneseq
      %v1217 = vshrl.u32 %v1216, 7
      %v1218 = vsub.s32 1, %v1217
      %v1219 = vrot.slane %v1211, %v1218
      %vm1220 = vcmp.eq.s32.totalorder %v1215, 1
      %vm1221 = vcmp.eq.s32.totalorder %v1219, 1
      %v1222 = vsel %vm1220, %v1209, 0.0
      %v1223 = vsel %vm1221, %v1210, 0.0
      %v1224 = vadd.f32 %v1188, %v1222
      %v1225 = vadd.f32 %v1189, %v1223
      %1226 = vrot.lane.b32.xlu0 %v216, 125
      %v1227 = vpop.permute.xlu0 %1226
      %1228 = vrot.lane.b32.xlu0 %v217, 125
      %v1229 = vpop.permute.xlu0 %1228
      %vm1230 = vcmp.lt.s32.totalorder %v225, 125
      %v1231 = vsel %vm1230, %v1227, %v1229
      %v1232 = vsel %vm1230, %v1229, %v1227
      %1233 = vrot.lane.b32.xlu0 %v236, 125
      %v1234 = vpop.permute.xlu0 %1233
      %1235 = vrot.lane.b32.xlu0 %v237, 125
      %v1236 = vpop.permute.xlu0 %1235
      %v1237 = vsel %vm1230, %v1234, %v1236
      %v1238 = vsel %vm1230, %v1236, %v1234
      %vm1239 = vmand %vm1027, %vm477
      %vm1240 = vmand %vm1239, %vm479
      %v1241 = vmul.f32 %v1231, 0.096787706
      %v1242 = vmul.f32 %v1232, 0.096787706
      %v1243 = vmul.f32 %v1237, 0.077661514
      %v1244 = vmul.f32 %v1238, 0.077661514
      %v1245 = vadd.f32 %v1241, %v1243
      %v1246 = vadd.f32 %v1242, %v1244
      %v1247 = vsel %vm1240, 1, 0
      %v1248 = vlaneseq
      %v1249 = vshrl.u32 %v1248, 7
      %v1250 = vsub.s32 0, %v1249
      %v1251 = vrot.slane %v1247, %v1250
      %v1252 = vlaneseq
      %v1253 = vshrl.u32 %v1252, 7
      %v1254 = vsub.s32 1, %v1253
      %v1255 = vrot.slane %v1247, %v1254
      %vm1256 = vcmp.eq.s32.totalorder %v1251, 1
      %vm1257 = vcmp.eq.s32.totalorder %v1255, 1
      %v1258 = vsel %vm1256, %v1245, 0.0
      %v1259 = vsel %vm1257, %v1246, 0.0
      %v1260 = vadd.f32 %v1224, %v1258
      %v1261 = vadd.f32 %v1225, %v1259
      %1262 = vrot.lane.b32.xlu0 %v216, 115
      %v1263 = vpop.permute.xlu0 %1262
      %1264 = vrot.lane.b32.xlu0 %v217, 115
      %v1265 = vpop.permute.xlu0 %1264
      %vm1266 = vcmp.lt.s32.totalorder %v225, 115
      %v1267 = vsel %vm1266, %v1263, %v1265
      %v1268 = vsel %vm1266, %v1265, %v1263
      %1269 = vrot.lane.b32.xlu0 %v236, 115
      %v1270 = vpop.permute.xlu0 %1269
      %1271 = vrot.lane.b32.xlu0 %v237, 115
      %v1272 = vpop.permute.xlu0 %1271
      %v1273 = vsel %vm1266, %v1270, %v1272
      %v1274 = vsel %vm1266, %v1272, %v1270
      %vm1275 = vcmp.ge.s32.totalorder %v206, 4294967295
      %vm1276 = vcmp.lt.s32.totalorder %v206, 15
      %vm1277 = vmand %vm1275, %vm1276
      %vm1278 = vmand %vm1277, %vm249
      %vm1279 = vmand %vm1278, %vm251
      %v1280 = vmul.f32 %v1267, 0.06727942
      %v1281 = vmul.f32 %v1268, 0.06727942
      %v1282 = vmul.f32 %v1273, -0.07345969
      %v1283 = vmul.f32 %v1274, -0.07345969
      %v1284 = vadd.f32 %v1280, %v1282
      %v1285 = vadd.f32 %v1281, %v1283
      %v1286 = vsel %vm1279, 1, 0
      %v1287 = vlaneseq
      %v1288 = vshrl.u32 %v1287, 7
      %v1289 = vsub.s32 0, %v1288
      %v1290 = vrot.slane %v1286, %v1289
      %v1291 = vlaneseq
      %v1292 = vshrl.u32 %v1291, 7
      %v1293 = vsub.s32 1, %v1292
      %v1294 = vrot.slane %v1286, %v1293
      %vm1295 = vcmp.eq.s32.totalorder %v1290, 1
      %vm1296 = vcmp.eq.s32.totalorder %v1294, 1
      %v1297 = vsel %vm1295, %v1284, 0.0
      %v1298 = vsel %vm1296, %v1285, 0.0
      %v1299 = vadd.f32 %v1260, %v1297
      %v1300 = vadd.f32 %v1261, %v1298
      %1301 = vrot.lane.b32.xlu0 %v216, 114
      %v1302 = vpop.permute.xlu0 %1301
      %1303 = vrot.lane.b32.xlu0 %v217, 114
      %v1304 = vpop.permute.xlu0 %1303
      %vm1305 = vcmp.lt.s32.totalorder %v225, 114
      %v1306 = vsel %vm1305, %v1302, %v1304
      %v1307 = vsel %vm1305, %v1304, %v1302
      %1308 = vrot.lane.b32.xlu0 %v236, 114
      %v1309 = vpop.permute.xlu0 %1308
      %1310 = vrot.lane.b32.xlu0 %v237, 114
      %v1311 = vpop.permute.xlu0 %1310
      %v1312 = vsel %vm1305, %v1309, %v1311
      %v1313 = vsel %vm1305, %v1311, %v1309
      %vm1314 = vmand %vm1277, %vm287
      %vm1315 = vmand %vm1314, %vm289
      %v1316 = vmul.f32 %v1306, -0.09240735
      %v1317 = vmul.f32 %v1307, -0.09240735
      %v1318 = vmul.f32 %v1312, -0.0877765
      %v1319 = vmul.f32 %v1313, -0.0877765
      %v1320 = vadd.f32 %v1316, %v1318
      %v1321 = vadd.f32 %v1317, %v1319
      %v1322 = vsel %vm1315, 1, 0
      %v1323 = vlaneseq
      %v1324 = vshrl.u32 %v1323, 7
      %v1325 = vsub.s32 0, %v1324
      %v1326 = vrot.slane %v1322, %v1325
      %v1327 = vlaneseq
      %v1328 = vshrl.u32 %v1327, 7
      %v1329 = vsub.s32 1, %v1328
      %v1330 = vrot.slane %v1322, %v1329
      %vm1331 = vcmp.eq.s32.totalorder %v1326, 1
      %vm1332 = vcmp.eq.s32.totalorder %v1330, 1
      %v1333 = vsel %vm1331, %v1320, 0.0
      %v1334 = vsel %vm1332, %v1321, 0.0
      %v1335 = vadd.f32 %v1299, %v1333
      %v1336 = vadd.f32 %v1300, %v1334
      %1337 = vrot.lane.b32.xlu0 %v216, 113
      %v1338 = vpop.permute.xlu0 %1337
      %1339 = vrot.lane.b32.xlu0 %v217, 113
      %v1340 = vpop.permute.xlu0 %1339
      %vm1341 = vcmp.lt.s32.totalorder %v225, 113
      %v1342 = vsel %vm1341, %v1338, %v1340
      %v1343 = vsel %vm1341, %v1340, %v1338
      %1344 = vrot.lane.b32.xlu0 %v236, 113
      %v1345 = vpop.permute.xlu0 %1344
      %1346 = vrot.lane.b32.xlu0 %v237, 113
      %v1347 = vpop.permute.xlu0 %1346
      %v1348 = vsel %vm1341, %v1345, %v1347
      %v1349 = vsel %vm1341, %v1347, %v1345
      %vm1350 = vmand %vm1277, %vm325
      %vm1351 = vmand %vm1350, %vm327
      %v1352 = vmul.f32 %v1342, -0.06968673
      %v1353 = vmul.f32 %v1343, -0.06968673
      %v1354 = vmul.f32 %v1348, 0.08325474
      %v1355 = vmul.f32 %v1349, 0.08325474
      %v1356 = vadd.f32 %v1352, %v1354
      %v1357 = vadd.f32 %v1353, %v1355
      %v1358 = vsel %vm1351, 1, 0
      %v1359 = vlaneseq
      %v1360 = vshrl.u32 %v1359, 7
      %v1361 = vsub.s32 0, %v1360
      %v1362 = vrot.slane %v1358, %v1361
      %v1363 = vlaneseq
      %v1364 = vshrl.u32 %v1363, 7
      %v1365 = vsub.s32 1, %v1364
      %v1366 = vrot.slane %v1358, %v1365
      %vm1367 = vcmp.eq.s32.totalorder %v1362, 1
      %vm1368 = vcmp.eq.s32.totalorder %v1366, 1
      %v1369 = vsel %vm1367, %v1356, 0.0
      %v1370 = vsel %vm1368, %v1357, 0.0
      %v1371 = vadd.f32 %v1335, %v1369
      %v1372 = vadd.f32 %v1336, %v1370
      %1373 = vrot.lane.b32.xlu0 %v216, 112
      %v1374 = vpop.permute.xlu0 %1373
      %1375 = vrot.lane.b32.xlu0 %v217, 112
      %v1376 = vpop.permute.xlu0 %1375
      %vm1377 = vcmp.lt.s32.totalorder %v225, 112
      %v1378 = vsel %vm1377, %v1374, %v1376
      %v1379 = vsel %vm1377, %v1376, %v1374
      %1380 = vrot.lane.b32.xlu0 %v236, 112
      %v1381 = vpop.permute.xlu0 %1380
      %1382 = vrot.lane.b32.xlu0 %v237, 112
      %v1383 = vpop.permute.xlu0 %1382
      %v1384 = vsel %vm1377, %v1381, %v1383
      %v1385 = vsel %vm1377, %v1383, %v1381
      %vm1386 = vmand %vm1277, %vm363
      %vm1387 = vmand %vm1386, %vm365
      %v1388 = vmul.f32 %v1378, -0.025458166
      %v1389 = vmul.f32 %v1379, -0.025458166
      %v1390 = vmul.f32 %v1384, -0.020752916
      %v1391 = vmul.f32 %v1385, -0.020752916
      %v1392 = vadd.f32 %v1388, %v1390
      %v1393 = vadd.f32 %v1389, %v1391
      %v1394 = vsel %vm1387, 1, 0
      %v1395 = vlaneseq
      %v1396 = vshrl.u32 %v1395, 7
      %v1397 = vsub.s32 0, %v1396
      %v1398 = vrot.slane %v1394, %v1397
      %v1399 = vlaneseq
      %v1400 = vshrl.u32 %v1399, 7
      %v1401 = vsub.s32 1, %v1400
      %v1402 = vrot.slane %v1394, %v1401
      %vm1403 = vcmp.eq.s32.totalorder %v1398, 1
      %vm1404 = vcmp.eq.s32.totalorder %v1402, 1
      %v1405 = vsel %vm1403, %v1392, 0.0
      %v1406 = vsel %vm1404, %v1393, 0.0
      %v1407 = vadd.f32 %v1371, %v1405
      %v1408 = vadd.f32 %v1372, %v1406
      %1409 = vrot.lane.b32.xlu0 %v216, 111
      %v1410 = vpop.permute.xlu0 %1409
      %1411 = vrot.lane.b32.xlu0 %v217, 111
      %v1412 = vpop.permute.xlu0 %1411
      %vm1413 = vcmp.lt.s32.totalorder %v225, 111
      %v1414 = vsel %vm1413, %v1410, %v1412
      %v1415 = vsel %vm1413, %v1412, %v1410
      %1416 = vrot.lane.b32.xlu0 %v236, 111
      %v1417 = vpop.permute.xlu0 %1416
      %1418 = vrot.lane.b32.xlu0 %v237, 111
      %v1419 = vpop.permute.xlu0 %1418
      %v1420 = vsel %vm1413, %v1417, %v1419
      %v1421 = vsel %vm1413, %v1419, %v1417
      %vm1422 = vmand %vm1277, %vm401
      %vm1423 = vmand %vm1422, %vm403
      %v1424 = vmul.f32 %v1414, -0.065348595
      %v1425 = vmul.f32 %v1415, -0.065348595
      %v1426 = vmul.f32 %v1420, 0.026346043
      %v1427 = vmul.f32 %v1421, 0.026346043
      %v1428 = vadd.f32 %v1424, %v1426
      %v1429 = vadd.f32 %v1425, %v1427
      %v1430 = vsel %vm1423, 1, 0
      %v1431 = vlaneseq
      %v1432 = vshrl.u32 %v1431, 7
      %v1433 = vsub.s32 0, %v1432
      %v1434 = vrot.slane %v1430, %v1433
      %v1435 = vlaneseq
      %v1436 = vshrl.u32 %v1435, 7
      %v1437 = vsub.s32 1, %v1436
      %v1438 = vrot.slane %v1430, %v1437
      %vm1439 = vcmp.eq.s32.totalorder %v1434, 1
      %vm1440 = vcmp.eq.s32.totalorder %v1438, 1
      %v1441 = vsel %vm1439, %v1428, 0.0
      %v1442 = vsel %vm1440, %v1429, 0.0
      %v1443 = vadd.f32 %v1407, %v1441
      %v1444 = vadd.f32 %v1408, %v1442
      %1445 = vrot.lane.b32.xlu0 %v216, 110
      %v1446 = vpop.permute.xlu0 %1445
      %1447 = vrot.lane.b32.xlu0 %v217, 110
      %v1448 = vpop.permute.xlu0 %1447
      %vm1449 = vcmp.lt.s32.totalorder %v225, 110
      %v1450 = vsel %vm1449, %v1446, %v1448
      %v1451 = vsel %vm1449, %v1448, %v1446
      %1452 = vrot.lane.b32.xlu0 %v236, 110
      %v1453 = vpop.permute.xlu0 %1452
      %1454 = vrot.lane.b32.xlu0 %v237, 110
      %v1455 = vpop.permute.xlu0 %1454
      %v1456 = vsel %vm1449, %v1453, %v1455
      %v1457 = vsel %vm1449, %v1455, %v1453
      %vm1458 = vmand %vm1277, %vm439
      %vm1459 = vmand %vm1458, %vm441
      %v1460 = vmul.f32 %v1450, -0.04564759
      %v1461 = vmul.f32 %v1451, -0.04564759
      %v1462 = vmul.f32 %v1456, 0.0703863
      %v1463 = vmul.f32 %v1457, 0.0703863
      %v1464 = vadd.f32 %v1460, %v1462
      %v1465 = vadd.f32 %v1461, %v1463
      %v1466 = vsel %vm1459, 1, 0
      %v1467 = vlaneseq
      %v1468 = vshrl.u32 %v1467, 7
      %v1469 = vsub.s32 0, %v1468
      %v1470 = vrot.slane %v1466, %v1469
      %v1471 = vlaneseq
      %v1472 = vshrl.u32 %v1471, 7
      %v1473 = vsub.s32 1, %v1472
      %v1474 = vrot.slane %v1466, %v1473
      %vm1475 = vcmp.eq.s32.totalorder %v1470, 1
      %vm1476 = vcmp.eq.s32.totalorder %v1474, 1
      %v1477 = vsel %vm1475, %v1464, 0.0
      %v1478 = vsel %vm1476, %v1465, 0.0
      %v1479 = vadd.f32 %v1443, %v1477
      %v1480 = vadd.f32 %v1444, %v1478
      %1481 = vrot.lane.b32.xlu0 %v216, 109
      %v1482 = vpop.permute.xlu0 %1481
      %1483 = vrot.lane.b32.xlu0 %v217, 109
      %v1484 = vpop.permute.xlu0 %1483
      %vm1485 = vcmp.lt.s32.totalorder %v225, 109
      %v1486 = vsel %vm1485, %v1482, %v1484
      %v1487 = vsel %vm1485, %v1484, %v1482
      %1488 = vrot.lane.b32.xlu0 %v236, 109
      %v1489 = vpop.permute.xlu0 %1488
      %1490 = vrot.lane.b32.xlu0 %v237, 109
      %v1491 = vpop.permute.xlu0 %1490
      %v1492 = vsel %vm1485, %v1489, %v1491
      %v1493 = vsel %vm1485, %v1491, %v1489
      %vm1494 = vmand %vm1277, %vm477
      %vm1495 = vmand %vm1494, %vm479
      %v1496 = vmul.f32 %v1486, 0.09242659
      %v1497 = vmul.f32 %v1487, 0.09242659
      %v1498 = vmul.f32 %v1492, 0.08679105
      %v1499 = vmul.f32 %v1493, 0.08679105
      %v1500 = vadd.f32 %v1496, %v1498
      %v1501 = vadd.f32 %v1497, %v1499
      %v1502 = vsel %vm1495, 1, 0
      %v1503 = vlaneseq
      %v1504 = vshrl.u32 %v1503, 7
      %v1505 = vsub.s32 0, %v1504
      %v1506 = vrot.slane %v1502, %v1505
      %v1507 = vlaneseq
      %v1508 = vshrl.u32 %v1507, 7
      %v1509 = vsub.s32 1, %v1508
      %v1510 = vrot.slane %v1502, %v1509
      %vm1511 = vcmp.eq.s32.totalorder %v1506, 1
      %vm1512 = vcmp.eq.s32.totalorder %v1510, 1
      %v1513 = vsel %vm1511, %v1500, 0.0
      %v1514 = vsel %vm1512, %v1501, 0.0
      %v1515 = vadd.f32 %v1479, %v1513
      %v1516 = vadd.f32 %v1480, %v1514
      %1517 = vrot.lane.b32.xlu0 %v216, 99
      %v1518 = vpop.permute.xlu0 %1517
      %1519 = vrot.lane.b32.xlu0 %v217, 99
      %v1520 = vpop.permute.xlu0 %1519
      %vm1521 = vcmp.lt.s32.totalorder %v225, 99
      %v1522 = vsel %vm1521, %v1518, %v1520
      %v1523 = vsel %vm1521, %v1520, %v1518
      %1524 = vrot.lane.b32.xlu0 %v236, 99
      %v1525 = vpop.permute.xlu0 %1524
      %1526 = vrot.lane.b32.xlu0 %v237, 99
      %v1527 = vpop.permute.xlu0 %1526
      %v1528 = vsel %vm1521, %v1525, %v1527
      %v1529 = vsel %vm1521, %v1527, %v1525
      %vm1530 = vcmp.ge.s32.totalorder %v206, 4294967294
      %vm1531 = vcmp.lt.s32.totalorder %v206, 14
      %vm1532 = vmand %vm1530, %vm1531
      %vm1533 = vmand %vm1532, %vm249
      %vm1534 = vmand %vm1533, %vm251
      %v1535 = vmul.f32 %v1522, 0.06872448
      %v1536 = vmul.f32 %v1523, 0.06872448
      %v1537 = vmul.f32 %v1528, -0.09462269
      %v1538 = vmul.f32 %v1529, -0.09462269
      %v1539 = vadd.f32 %v1535, %v1537
      %v1540 = vadd.f32 %v1536, %v1538
      %v1541 = vsel %vm1534, 1, 0
      %v1542 = vlaneseq
      %v1543 = vshrl.u32 %v1542, 7
      %v1544 = vsub.s32 0, %v1543
      %v1545 = vrot.slane %v1541, %v1544
      %v1546 = vlaneseq
      %v1547 = vshrl.u32 %v1546, 7
      %v1548 = vsub.s32 1, %v1547
      %v1549 = vrot.slane %v1541, %v1548
      %vm1550 = vcmp.eq.s32.totalorder %v1545, 1
      %vm1551 = vcmp.eq.s32.totalorder %v1549, 1
      %v1552 = vsel %vm1550, %v1539, 0.0
      %v1553 = vsel %vm1551, %v1540, 0.0
      %v1554 = vadd.f32 %v1515, %v1552
      %v1555 = vadd.f32 %v1516, %v1553
      %1556 = vrot.lane.b32.xlu0 %v216, 98
      %v1557 = vpop.permute.xlu0 %1556
      %1558 = vrot.lane.b32.xlu0 %v217, 98
      %v1559 = vpop.permute.xlu0 %1558
      %vm1560 = vcmp.lt.s32.totalorder %v225, 98
      %v1561 = vsel %vm1560, %v1557, %v1559
      %v1562 = vsel %vm1560, %v1559, %v1557
      %1563 = vrot.lane.b32.xlu0 %v236, 98
      %v1564 = vpop.permute.xlu0 %1563
      %1565 = vrot.lane.b32.xlu0 %v237, 98
      %v1566 = vpop.permute.xlu0 %1565
      %v1567 = vsel %vm1560, %v1564, %v1566
      %v1568 = vsel %vm1560, %v1566, %v1564
      %vm1569 = vmand %vm1532, %vm287
      %vm1570 = vmand %vm1569, %vm289
      %v1571 = vmul.f32 %v1561, 0.011289094
      %v1572 = vmul.f32 %v1562, 0.011289094
      %v1573 = vmul.f32 %v1567, -0.01661872
      %v1574 = vmul.f32 %v1568, -0.01661872
      %v1575 = vadd.f32 %v1571, %v1573
      %v1576 = vadd.f32 %v1572, %v1574
      %v1577 = vsel %vm1570, 1, 0
      %v1578 = vlaneseq
      %v1579 = vshrl.u32 %v1578, 7
      %v1580 = vsub.s32 0, %v1579
      %v1581 = vrot.slane %v1577, %v1580
      %v1582 = vlaneseq
      %v1583 = vshrl.u32 %v1582, 7
      %v1584 = vsub.s32 1, %v1583
      %v1585 = vrot.slane %v1577, %v1584
      %vm1586 = vcmp.eq.s32.totalorder %v1581, 1
      %vm1587 = vcmp.eq.s32.totalorder %v1585, 1
      %v1588 = vsel %vm1586, %v1575, 0.0
      %v1589 = vsel %vm1587, %v1576, 0.0
      %v1590 = vadd.f32 %v1554, %v1588
      %v1591 = vadd.f32 %v1555, %v1589
      %1592 = vrot.lane.b32.xlu0 %v216, 97
      %v1593 = vpop.permute.xlu0 %1592
      %1594 = vrot.lane.b32.xlu0 %v217, 97
      %v1595 = vpop.permute.xlu0 %1594
      %vm1596 = vcmp.lt.s32.totalorder %v225, 97
      %v1597 = vsel %vm1596, %v1593, %v1595
      %v1598 = vsel %vm1596, %v1595, %v1593
      %1599 = vrot.lane.b32.xlu0 %v236, 97
      %v1600 = vpop.permute.xlu0 %1599
      %1601 = vrot.lane.b32.xlu0 %v237, 97
      %v1602 = vpop.permute.xlu0 %1601
      %v1603 = vsel %vm1596, %v1600, %v1602
      %v1604 = vsel %vm1596, %v1602, %v1600
      %vm1605 = vmand %vm1532, %vm325
      %vm1606 = vmand %vm1605, %vm327
      %v1607 = vmul.f32 %v1597, 0.03452576
      %v1608 = vmul.f32 %v1598, 0.03452576
      %v1609 = vmul.f32 %v1603, 0.03771714
      %v1610 = vmul.f32 %v1604, 0.03771714
      %v1611 = vadd.f32 %v1607, %v1609
      %v1612 = vadd.f32 %v1608, %v1610
      %v1613 = vsel %vm1606, 1, 0
      %v1614 = vlaneseq
      %v1615 = vshrl.u32 %v1614, 7
      %v1616 = vsub.s32 0, %v1615
      %v1617 = vrot.slane %v1613, %v1616
      %v1618 = vlaneseq
      %v1619 = vshrl.u32 %v1618, 7
      %v1620 = vsub.s32 1, %v1619
      %v1621 = vrot.slane %v1613, %v1620
      %vm1622 = vcmp.eq.s32.totalorder %v1617, 1
      %vm1623 = vcmp.eq.s32.totalorder %v1621, 1
      %v1624 = vsel %vm1622, %v1611, 0.0
      %v1625 = vsel %vm1623, %v1612, 0.0
      %v1626 = vadd.f32 %v1590, %v1624
      %v1627 = vadd.f32 %v1591, %v1625
      %1628 = vrot.lane.b32.xlu0 %v216, 96
      %v1629 = vpop.permute.xlu0 %1628
      %1630 = vrot.lane.b32.xlu0 %v217, 96
      %v1631 = vpop.permute.xlu0 %1630
      %vm1632 = vcmp.lt.s32.totalorder %v225, 96
      %v1633 = vsel %vm1632, %v1629, %v1631
      %v1634 = vsel %vm1632, %v1631, %v1629
      %1635 = vrot.lane.b32.xlu0 %v236, 96
      %v1636 = vpop.permute.xlu0 %1635
      %1637 = vrot.lane.b32.xlu0 %v237, 96
      %v1638 = vpop.permute.xlu0 %1637
      %v1639 = vsel %vm1632, %v1636, %v1638
      %v1640 = vsel %vm1632, %v1638, %v1636
      %vm1641 = vmand %vm1532, %vm363
      %vm1642 = vmand %vm1641, %vm365
      %v1643 = vmul.f32 %v1633, 0.05330967
      %v1644 = vmul.f32 %v1634, 0.05330967
      %v1645 = vmul.f32 %v1639, 0.099102944
      %v1646 = vmul.f32 %v1640, 0.099102944
      %v1647 = vadd.f32 %v1643, %v1645
      %v1648 = vadd.f32 %v1644, %v1646
      %v1649 = vsel %vm1642, 1, 0
      %v1650 = vlaneseq
      %v1651 = vshrl.u32 %v1650, 7
      %v1652 = vsub.s32 0, %v1651
      %v1653 = vrot.slane %v1649, %v1652
      %v1654 = vlaneseq
      %v1655 = vshrl.u32 %v1654, 7
      %v1656 = vsub.s32 1, %v1655
      %v1657 = vrot.slane %v1649, %v1656
      %vm1658 = vcmp.eq.s32.totalorder %v1653, 1
      %vm1659 = vcmp.eq.s32.totalorder %v1657, 1
      %v1660 = vsel %vm1658, %v1647, 0.0
      %v1661 = vsel %vm1659, %v1648, 0.0
      %v1662 = vadd.f32 %v1626, %v1660
      %v1663 = vadd.f32 %v1627, %v1661
      %1664 = vrot.lane.b32.xlu0 %v216, 95
      %v1665 = vpop.permute.xlu0 %1664
      %1666 = vrot.lane.b32.xlu0 %v217, 95
      %v1667 = vpop.permute.xlu0 %1666
      %vm1668 = vcmp.lt.s32.totalorder %v225, 95
      %v1669 = vsel %vm1668, %v1665, %v1667
      %v1670 = vsel %vm1668, %v1667, %v1665
      %1671 = vrot.lane.b32.xlu0 %v236, 95
      %v1672 = vpop.permute.xlu0 %1671
      %1673 = vrot.lane.b32.xlu0 %v237, 95
      %v1674 = vpop.permute.xlu0 %1673
      %v1675 = vsel %vm1668, %v1672, %v1674
      %v1676 = vsel %vm1668, %v1674, %v1672
      %vm1677 = vmand %vm1532, %vm401
      %vm1678 = vmand %vm1677, %vm403
      %v1679 = vmul.f32 %v1669, -0.02767131
      %v1680 = vmul.f32 %v1670, -0.02767131
      %v1681 = vmul.f32 %v1675, 0.06576645
      %v1682 = vmul.f32 %v1676, 0.06576645
      %v1683 = vadd.f32 %v1679, %v1681
      %v1684 = vadd.f32 %v1680, %v1682
      %v1685 = vsel %vm1678, 1, 0
      %v1686 = vlaneseq
      %v1687 = vshrl.u32 %v1686, 7
      %v1688 = vsub.s32 0, %v1687
      %v1689 = vrot.slane %v1685, %v1688
      %v1690 = vlaneseq
      %v1691 = vshrl.u32 %v1690, 7
      %v1692 = vsub.s32 1, %v1691
      %v1693 = vrot.slane %v1685, %v1692
      %vm1694 = vcmp.eq.s32.totalorder %v1689, 1
      %vm1695 = vcmp.eq.s32.totalorder %v1693, 1
      %v1696 = vsel %vm1694, %v1683, 0.0
      %v1697 = vsel %vm1695, %v1684, 0.0
      %v1698 = vadd.f32 %v1662, %v1696
      %v1699 = vadd.f32 %v1663, %v1697
      %1700 = vrot.lane.b32.xlu0 %v216, 94
      %v1701 = vpop.permute.xlu0 %1700
      %1702 = vrot.lane.b32.xlu0 %v217, 94
      %v1703 = vpop.permute.xlu0 %1702
      %vm1704 = vcmp.lt.s32.totalorder %v225, 94
      %v1705 = vsel %vm1704, %v1701, %v1703
      %v1706 = vsel %vm1704, %v1703, %v1701
      %1707 = vrot.lane.b32.xlu0 %v236, 94
      %v1708 = vpop.permute.xlu0 %1707
      %1709 = vrot.lane.b32.xlu0 %v237, 94
      %v1710 = vpop.permute.xlu0 %1709
      %v1711 = vsel %vm1704, %v1708, %v1710
      %v1712 = vsel %vm1704, %v1710, %v1708
      %vm1713 = vmand %vm1532, %vm439
      %vm1714 = vmand %vm1713, %vm441
      %v1715 = vmul.f32 %v1705, -0.017939577
      %v1716 = vmul.f32 %v1706, -0.017939577
      %v1717 = vmul.f32 %v1711, 0.06573266
      %v1718 = vmul.f32 %v1712, 0.06573266
      %v1719 = vadd.f32 %v1715, %v1717
      %v1720 = vadd.f32 %v1716, %v1718
      %v1721 = vsel %vm1714, 1, 0
      %v1722 = vlaneseq
      %v1723 = vshrl.u32 %v1722, 7
      %v1724 = vsub.s32 0, %v1723
      %v1725 = vrot.slane %v1721, %v1724
      %v1726 = vlaneseq
      %v1727 = vshrl.u32 %v1726, 7
      %v1728 = vsub.s32 1, %v1727
      %v1729 = vrot.slane %v1721, %v1728
      %vm1730 = vcmp.eq.s32.totalorder %v1725, 1
      %vm1731 = vcmp.eq.s32.totalorder %v1729, 1
      %v1732 = vsel %vm1730, %v1719, 0.0
      %v1733 = vsel %vm1731, %v1720, 0.0
      %v1734 = vadd.f32 %v1698, %v1732
      %v1735 = vadd.f32 %v1699, %v1733
      %1736 = vrot.lane.b32.xlu0 %v216, 93
      %v1737 = vpop.permute.xlu0 %1736
      %1738 = vrot.lane.b32.xlu0 %v217, 93
      %v1739 = vpop.permute.xlu0 %1738
      %vm1740 = vcmp.lt.s32.totalorder %v225, 93
      %v1741 = vsel %vm1740, %v1737, %v1739
      %v1742 = vsel %vm1740, %v1739, %v1737
      %1743 = vrot.lane.b32.xlu0 %v236, 93
      %v1744 = vpop.permute.xlu0 %1743
      %1745 = vrot.lane.b32.xlu0 %v237, 93
      %v1746 = vpop.permute.xlu0 %1745
      %v1747 = vsel %vm1740, %v1744, %v1746
      %v1748 = vsel %vm1740, %v1746, %v1744
      %vm1749 = vmand %vm1532, %vm477
      %vm1750 = vmand %vm1749, %vm479
      %v1751 = vmul.f32 %v1741, -0.0738887
      %v1752 = vmul.f32 %v1742, -0.0738887
      %v1753 = vmul.f32 %v1747, 0.08293204
      %v1754 = vmul.f32 %v1748, 0.08293204
      %v1755 = vadd.f32 %v1751, %v1753
      %v1756 = vadd.f32 %v1752, %v1754
      %v1757 = vsel %vm1750, 1, 0
      %v1758 = vlaneseq
      %v1759 = vshrl.u32 %v1758, 7
      %v1760 = vsub.s32 0, %v1759
      %v1761 = vrot.slane %v1757, %v1760
      %v1762 = vlaneseq
      %v1763 = vshrl.u32 %v1762, 7
      %v1764 = vsub.s32 1, %v1763
      %v1765 = vrot.slane %v1757, %v1764
      %vm1766 = vcmp.eq.s32.totalorder %v1761, 1
      %vm1767 = vcmp.eq.s32.totalorder %v1765, 1
      %v1768 = vsel %vm1766, %v1755, 0.0
      %v1769 = vsel %vm1767, %v1756, 0.0
      %v1770 = vadd.f32 %v1734, %v1768
      %v1771 = vadd.f32 %v1735, %v1769
      %1772 = vrot.lane.b32.xlu0 %v216, 83
      %v1773 = vpop.permute.xlu0 %1772
      %1774 = vrot.lane.b32.xlu0 %v217, 83
      %v1775 = vpop.permute.xlu0 %1774
      %vm1776 = vcmp.lt.s32.totalorder %v225, 83
      %v1777 = vsel %vm1776, %v1773, %v1775
      %v1778 = vsel %vm1776, %v1775, %v1773
      %1779 = vrot.lane.b32.xlu0 %v236, 83
      %v1780 = vpop.permute.xlu0 %1779
      %1781 = vrot.lane.b32.xlu0 %v237, 83
      %v1782 = vpop.permute.xlu0 %1781
      %v1783 = vsel %vm1776, %v1780, %v1782
      %v1784 = vsel %vm1776, %v1782, %v1780
      %vm1785 = vcmp.ge.s32.totalorder %v206, 4294967293
      %vm1786 = vcmp.lt.s32.totalorder %v206, 13
      %vm1787 = vmand %vm1785, %vm1786
      %vm1788 = vmand %vm1787, %vm249
      %vm1789 = vmand %vm1788, %vm251
      %v1790 = vmul.f32 %v1777, 0.09565081
      %v1791 = vmul.f32 %v1778, 0.09565081
      %v1792 = vmul.f32 %v1783, -0.052705165
      %v1793 = vmul.f32 %v1784, -0.052705165
      %v1794 = vadd.f32 %v1790, %v1792
      %v1795 = vadd.f32 %v1791, %v1793
      %v1796 = vsel %vm1789, 1, 0
      %v1797 = vlaneseq
      %v1798 = vshrl.u32 %v1797, 7
      %v1799 = vsub.s32 0, %v1798
      %v1800 = vrot.slane %v1796, %v1799
      %v1801 = vlaneseq
      %v1802 = vshrl.u32 %v1801, 7
      %v1803 = vsub.s32 1, %v1802
      %v1804 = vrot.slane %v1796, %v1803
      %vm1805 = vcmp.eq.s32.totalorder %v1800, 1
      %vm1806 = vcmp.eq.s32.totalorder %v1804, 1
      %v1807 = vsel %vm1805, %v1794, 0.0
      %v1808 = vsel %vm1806, %v1795, 0.0
      %v1809 = vadd.f32 %v1770, %v1807
      %v1810 = vadd.f32 %v1771, %v1808
      %1811 = vrot.lane.b32.xlu0 %v216, 82
      %v1812 = vpop.permute.xlu0 %1811
      %1813 = vrot.lane.b32.xlu0 %v217, 82
      %v1814 = vpop.permute.xlu0 %1813
      %vm1815 = vcmp.lt.s32.totalorder %v225, 82
      %v1816 = vsel %vm1815, %v1812, %v1814
      %v1817 = vsel %vm1815, %v1814, %v1812
      %1818 = vrot.lane.b32.xlu0 %v236, 82
      %v1819 = vpop.permute.xlu0 %1818
      %1820 = vrot.lane.b32.xlu0 %v237, 82
      %v1821 = vpop.permute.xlu0 %1820
      %v1822 = vsel %vm1815, %v1819, %v1821
      %v1823 = vsel %vm1815, %v1821, %v1819
      %vm1824 = vmand %vm1787, %vm287
      %vm1825 = vmand %vm1824, %vm289
      %v1826 = vmul.f32 %v1816, 0.0577052
      %v1827 = vmul.f32 %v1817, 0.0577052
      %v1828 = vmul.f32 %v1822, -0.037475076
      %v1829 = vmul.f32 %v1823, -0.037475076
      %v1830 = vadd.f32 %v1826, %v1828
      %v1831 = vadd.f32 %v1827, %v1829
      %v1832 = vsel %vm1825, 1, 0
      %v1833 = vlaneseq
      %v1834 = vshrl.u32 %v1833, 7
      %v1835 = vsub.s32 0, %v1834
      %v1836 = vrot.slane %v1832, %v1835
      %v1837 = vlaneseq
      %v1838 = vshrl.u32 %v1837, 7
      %v1839 = vsub.s32 1, %v1838
      %v1840 = vrot.slane %v1832, %v1839
      %vm1841 = vcmp.eq.s32.totalorder %v1836, 1
      %vm1842 = vcmp.eq.s32.totalorder %v1840, 1
      %v1843 = vsel %vm1841, %v1830, 0.0
      %v1844 = vsel %vm1842, %v1831, 0.0
      %v1845 = vadd.f32 %v1809, %v1843
      %v1846 = vadd.f32 %v1810, %v1844
      %1847 = vrot.lane.b32.xlu0 %v216, 81
      %v1848 = vpop.permute.xlu0 %1847
      %1849 = vrot.lane.b32.xlu0 %v217, 81
      %v1850 = vpop.permute.xlu0 %1849
      %vm1851 = vcmp.lt.s32.totalorder %v225, 81
      %v1852 = vsel %vm1851, %v1848, %v1850
      %v1853 = vsel %vm1851, %v1850, %v1848
      %1854 = vrot.lane.b32.xlu0 %v236, 81
      %v1855 = vpop.permute.xlu0 %1854
      %1856 = vrot.lane.b32.xlu0 %v237, 81
      %v1857 = vpop.permute.xlu0 %1856
      %v1858 = vsel %vm1851, %v1855, %v1857
      %v1859 = vsel %vm1851, %v1857, %v1855
      %vm1860 = vmand %vm1787, %vm325
      %vm1861 = vmand %vm1860, %vm327
      %v1862 = vmul.f32 %v1852, 0.058123972
      %v1863 = vmul.f32 %v1853, 0.058123972
      %v1864 = vmul.f32 %v1858, -0.08763021
      %v1865 = vmul.f32 %v1859, -0.08763021
      %v1866 = vadd.f32 %v1862, %v1864
      %v1867 = vadd.f32 %v1863, %v1865
      %v1868 = vsel %vm1861, 1, 0
      %v1869 = vlaneseq
      %v1870 = vshrl.u32 %v1869, 7
      %v1871 = vsub.s32 0, %v1870
      %v1872 = vrot.slane %v1868, %v1871
      %v1873 = vlaneseq
      %v1874 = vshrl.u32 %v1873, 7
      %v1875 = vsub.s32 1, %v1874
      %v1876 = vrot.slane %v1868, %v1875
      %vm1877 = vcmp.eq.s32.totalorder %v1872, 1
      %vm1878 = vcmp.eq.s32.totalorder %v1876, 1
      %v1879 = vsel %vm1877, %v1866, 0.0
      %v1880 = vsel %vm1878, %v1867, 0.0
      %v1881 = vadd.f32 %v1845, %v1879
      %v1882 = vadd.f32 %v1846, %v1880
      %1883 = vrot.lane.b32.xlu0 %v216, 80
      %v1884 = vpop.permute.xlu0 %1883
      %1885 = vrot.lane.b32.xlu0 %v217, 80
      %v1886 = vpop.permute.xlu0 %1885
      %vm1887 = vcmp.lt.s32.totalorder %v225, 80
      %v1888 = vsel %vm1887, %v1884, %v1886
      %v1889 = vsel %vm1887, %v1886, %v1884
      %1890 = vrot.lane.b32.xlu0 %v236, 80
      %v1891 = vpop.permute.xlu0 %1890
      %1892 = vrot.lane.b32.xlu0 %v237, 80
      %v1893 = vpop.permute.xlu0 %1892
      %v1894 = vsel %vm1887, %v1891, %v1893
      %v1895 = vsel %vm1887, %v1893, %v1891
      %vm1896 = vmand %vm1787, %vm363
      %vm1897 = vmand %vm1896, %vm365
      %v1898 = vmul.f32 %v1888, 0.06603691
      %v1899 = vmul.f32 %v1889, 0.06603691
      %v1900 = vmul.f32 %v1894, -0.049303576
      %v1901 = vmul.f32 %v1895, -0.049303576
      %v1902 = vadd.f32 %v1898, %v1900
      %v1903 = vadd.f32 %v1899, %v1901
      %v1904 = vsel %vm1897, 1, 0
      %v1905 = vlaneseq
      %v1906 = vshrl.u32 %v1905, 7
      %v1907 = vsub.s32 0, %v1906
      %v1908 = vrot.slane %v1904, %v1907
      %v1909 = vlaneseq
      %v1910 = vshrl.u32 %v1909, 7
      %v1911 = vsub.s32 1, %v1910
      %v1912 = vrot.slane %v1904, %v1911
      %vm1913 = vcmp.eq.s32.totalorder %v1908, 1
      %vm1914 = vcmp.eq.s32.totalorder %v1912, 1
      %v1915 = vsel %vm1913, %v1902, 0.0
      %v1916 = vsel %vm1914, %v1903, 0.0
      %v1917 = vadd.f32 %v1881, %v1915
      %v1918 = vadd.f32 %v1882, %v1916
      %1919 = vrot.lane.b32.xlu0 %v216, 79
      %v1920 = vpop.permute.xlu0 %1919
      %1921 = vrot.lane.b32.xlu0 %v217, 79
      %v1922 = vpop.permute.xlu0 %1921
      %vm1923 = vcmp.lt.s32.totalorder %v225, 79
      %v1924 = vsel %vm1923, %v1920, %v1922
      %v1925 = vsel %vm1923, %v1922, %v1920
      %1926 = vrot.lane.b32.xlu0 %v236, 79
      %v1927 = vpop.permute.xlu0 %1926
      %1928 = vrot.lane.b32.xlu0 %v237, 79
      %v1929 = vpop.permute.xlu0 %1928
      %v1930 = vsel %vm1923, %v1927, %v1929
      %v1931 = vsel %vm1923, %v1929, %v1927
      %vm1932 = vmand %vm1787, %vm401
      %vm1933 = vmand %vm1932, %vm403
      %v1934 = vmul.f32 %v1924, 0.07997627
      %v1935 = vmul.f32 %v1925, 0.07997627
      %v1936 = vmul.f32 %v1930, 0.021998752
      %v1937 = vmul.f32 %v1931, 0.021998752
      %v1938 = vadd.f32 %v1934, %v1936
      %v1939 = vadd.f32 %v1935, %v1937
      %v1940 = vsel %vm1933, 1, 0
      %v1941 = vlaneseq
      %v1942 = vshrl.u32 %v1941, 7
      %v1943 = vsub.s32 0, %v1942
      %v1944 = vrot.slane %v1940, %v1943
      %v1945 = vlaneseq
      %v1946 = vshrl.u32 %v1945, 7
      %v1947 = vsub.s32 1, %v1946
      %v1948 = vrot.slane %v1940, %v1947
      %vm1949 = vcmp.eq.s32.totalorder %v1944, 1
      %vm1950 = vcmp.eq.s32.totalorder %v1948, 1
      %v1951 = vsel %vm1949, %v1938, 0.0
      %v1952 = vsel %vm1950, %v1939, 0.0
      %v1953 = vadd.f32 %v1917, %v1951
      %v1954 = vadd.f32 %v1918, %v1952
      %1955 = vrot.lane.b32.xlu0 %v216, 78
      %v1956 = vpop.permute.xlu0 %1955
      %1957 = vrot.lane.b32.xlu0 %v217, 78
      %v1958 = vpop.permute.xlu0 %1957
      %vm1959 = vcmp.lt.s32.totalorder %v225, 78
      %v1960 = vsel %vm1959, %v1956, %v1958
      %v1961 = vsel %vm1959, %v1958, %v1956
      %1962 = vrot.lane.b32.xlu0 %v236, 78
      %v1963 = vpop.permute.xlu0 %1962
      %1964 = vrot.lane.b32.xlu0 %v237, 78
      %v1965 = vpop.permute.xlu0 %1964
      %v1966 = vsel %vm1959, %v1963, %v1965
      %v1967 = vsel %vm1959, %v1965, %v1963
      %vm1968 = vmand %vm1787, %vm439
      %vm1969 = vmand %vm1968, %vm441
      %v1970 = vmul.f32 %v1960, -0.025596721
      %v1971 = vmul.f32 %v1961, -0.025596721
      %v1972 = vmul.f32 %v1966, -0.006350615
      %v1973 = vmul.f32 %v1967, -0.006350615
      %v1974 = vadd.f32 %v1970, %v1972
      %v1975 = vadd.f32 %v1971, %v1973
      %v1976 = vsel %vm1969, 1, 0
      %v1977 = vlaneseq
      %v1978 = vshrl.u32 %v1977, 7
      %v1979 = vsub.s32 0, %v1978
      %v1980 = vrot.slane %v1976, %v1979
      %v1981 = vlaneseq
      %v1982 = vshrl.u32 %v1981, 7
      %v1983 = vsub.s32 1, %v1982
      %v1984 = vrot.slane %v1976, %v1983
      %vm1985 = vcmp.eq.s32.totalorder %v1980, 1
      %vm1986 = vcmp.eq.s32.totalorder %v1984, 1
      %v1987 = vsel %vm1985, %v1974, 0.0
      %v1988 = vsel %vm1986, %v1975, 0.0
      %v1989 = vadd.f32 %v1953, %v1987
      %v1990 = vadd.f32 %v1954, %v1988
      %1991 = vrot.lane.b32.xlu0 %v216, 77
      %v1992 = vpop.permute.xlu0 %1991
      %1993 = vrot.lane.b32.xlu0 %v217, 77
      %v1994 = vpop.permute.xlu0 %1993
      %vm1995 = vcmp.lt.s32.totalorder %v225, 77
      %v1996 = vsel %vm1995, %v1992, %v1994
      %v1997 = vsel %vm1995, %v1994, %v1992
      %1998 = vrot.lane.b32.xlu0 %v236, 77
      %v1999 = vpop.permute.xlu0 %1998
      %2000 = vrot.lane.b32.xlu0 %v237, 77
      %v2001 = vpop.permute.xlu0 %2000
      %v2002 = vsel %vm1995, %v1999, %v2001
      %v2003 = vsel %vm1995, %v2001, %v1999
      %vm2004 = vmand %vm1787, %vm477
      %vm2005 = vmand %vm2004, %vm479
      %v2006 = vmul.f32 %v1996, -0.04370556
      %v2007 = vmul.f32 %v1997, -0.04370556
      %v2008 = vmul.f32 %v2002, -0.08670399
      %v2009 = vmul.f32 %v2003, -0.08670399
      %v2010 = vadd.f32 %v2006, %v2008
      %v2011 = vadd.f32 %v2007, %v2009
      %v2012 = vsel %vm2005, 1, 0
      %v2013 = vlaneseq
      %v2014 = vshrl.u32 %v2013, 7
      %v2015 = vsub.s32 0, %v2014
      %v2016 = vrot.slane %v2012, %v2015
      %v2017 = vlaneseq
      %v2018 = vshrl.u32 %v2017, 7
      %v2019 = vsub.s32 1, %v2018
      %v2020 = vrot.slane %v2012, %v2019
      %vm2021 = vcmp.eq.s32.totalorder %v2016, 1
      %vm2022 = vcmp.eq.s32.totalorder %v2020, 1
      %v2023 = vsel %vm2021, %v2010, 0.0
      %v2024 = vsel %vm2022, %v2011, 0.0
      %v2025 = vadd.f32 %v1989, %v2023
      %v2026 = vadd.f32 %v1990, %v2024
      %v2027 = vxor.u32 %v2025, 2147483648
      %v2028 = vxor.u32 %v2026, 2147483648
      %v2029 = vmul.f32 %v2027, 1.442695
      %v2030 = vpow.pop %v2029
      %v2031 = vmul.f32 %v2028, 1.442695
      %v2032 = vpow.pop %v2031
      %v2033 = vadd.f32 %v2030, 1.0
      %v2034 = vadd.f32 %v2032, 1.0
      %v2035 = vrcp.pop %v2033
      %v2036 = vmul.f32 1.0, %v2035
      %v2037 = vrcp.pop %v2034
      %v2038 = vmul.f32 1.0, %v2037
      %v2041 = vcombine.low %v2036, %v2038
      %v2043 = vunpack.c.l.s4 1966171168
      %v2044 = vunpack.c.0.s8 %v2043
      %v2045 = vlaneseq
      %v2046 = vshrl.u32 %v2045, 7
      %v2047 = vsub.s32 %v2044, %v2046
      %v2048 = vrot.slane %v2041, %v2047
      %v2049 = vcombine.high %v2048, %v2048
      %v2051 = vunpack.c.l.s4 1966171168
      %v2052 = vunpack.c.0.s8 %v2051
      %v2053 = vlaneseq
      %v2054 = vshrl.u32 %v2053, 7
      %v2055 = vsub.s32 %v2052, %v2054
      %v2056 = vrot.slane %v2048, %v2055
      %v2058 = vunpack.c.l.s4 1966171168
      %v2059 = vunpack.c.0.s8 %v2058
      %v2060 = vlaneseq
      %v2061 = vshrl.u32 %v2060, 7
      %v2062 = vsub.s32 %v2059, %v2061
      %v2063 = vrot.slane %v2049, %v2062
      %v2066 = vlaneseq
      %vm2067 = vcmp.ge.s32.totalorder %v2066, 0
      %vm2068 = vcmp.lt.s32.totalorder %v2066, 256
      %vm2069 = vmand %vm2067, %vm2068
      %2070 = vst.msk [vmem:[#allocation9] sm:$0x3] %vm2069, %v2056
      %2071 = vst.msk [vmem:[#allocation9 + $0x2] sm:$0x3] %vm2069, %v2063
    $region25: #{tpu_custom_call.1} parent=1 // pred_fallthru
      _
    // Predicated region
    $region26: #{tpu_custom_call.1} parent=1 // pred_check
      _
    $region27: #{tpu_custom_call.1} parent=1 // pred_check_branch
      %2073 = sbr.rel (0) target = $region29
    $region28: #{tpu_custom_call.1} parent=1 // pred_region
      %s2075 = ssub.s32 64, 64
      %2076 = vsyncadd [#allocation6], %s2075
      %s2077 = sshll.u32 [#allocation9], 4
      %s2078 = int_to_ptr.vmem [resolvable:$true] %s2077
      %2083 = dma.vmem_to_hbm [thread:$0]  %s2078, 64, %s2, [#allocation6], 32, 32, 2
    $region29: #{tpu_custom_call.1} parent=1 // pred_fallthru
      _
    // Predicated region
    $region30: #{tpu_custom_call.1} parent=1 // pred_check
      _
    $region31: #{tpu_custom_call.1} parent=1 // pred_check_branch
      %2085 = sbr.rel (0) target = $region33
    $region32: #{tpu_custom_call.1} parent=1 // pred_region
      %2086 = dma.done [#allocation6], 64
    $region33: #{tpu_custom_call.1} parent=1 // pred_fallthru
      _
    %2087 = vsyncpa [#allocation5], 1
    %2088 = vsyncpa [#allocation8], 1
    %2089 = vsyncpa [#allocation6], 1

</llo_original>
